<compile_context>
chip_gen: v6e
topology: v6e:2x2x1
jax: 0.10.0
libtpu: 0.0.40
codegen_flags: <defaults>
</compile_context>

<pallas_src>
import math
from functools import partial

import numpy as np
import jax
import jax.numpy as jnp
from jax.experimental import pallas as pl
from jax.experimental.pallas import tpu as pltpu


def ghost_bottleneck_kernel(
    x_ref,                          # (TH+4, W, Cin)  input rows incl. 2-row halo
    w1p_ref, s1p_ref, b1p_ref,      # ghost1 primary 1x1 conv + folded BN
    w1c_ref, s1c_ref, b1c_ref,      # ghost1 cheap depthwise 3x3 + folded BN
    w2p_ref, s2p_ref, b2p_ref,      # ghost2 primary 1x1 conv + folded BN
    w2c_ref, s2c_ref, b2c_ref,      # ghost2 cheap depthwise 3x3 + folded BN
    o_ref,                          # (TH, W, Cout)
    pad1_ref,                       # VMEM scratch (TH+4, W+2, C1): W-padded x1
    pad2_ref,                       # VMEM scratch (TH+2, W+2, C2): W-padded y1
):
    RH, W, Cin = x_ref.shape        # RH = TH + 4
    TH = RH - 4
    R2 = RH - 2                     # rows on which x2 / y1 are needed
    C1 = w1p_ref.shape[1]
    C2 = w2p_ref.shape[1]

    h = pl.program_id(1)
    h_last = pl.num_programs(1) - 1

    x = x_ref[...].astype(jnp.float32)

    # ---- ghost1.primary_conv : 1x1 conv (MXU) + BN + ReLU (halo rows too) ----
    h1 = jnp.dot(x.reshape(RH * W, Cin), w1p_ref[...],
                 preferred_element_type=jnp.float32)
    x1 = jnp.maximum(h1 * s1p_ref[...] + b1p_ref[...], 0.0).reshape(RH, W, C1)

    # Stage x1 into the W-padded scratch for the depthwise conv.  Only the
    # 1-px ring columns are zeroed; the interior is a plain store.  At the
    # image top/bottom the halo row must act like torch's zero padding.
    pad1_ref[:, 0, :] = jnp.zeros((RH, C1), jnp.float32)
    pad1_ref[:, W + 1, :] = jnp.zeros((RH, C1), jnp.float32)
    pad1_ref[:, 1:W + 1, :] = x1

    @pl.when(h == 0)
    def _():
        pad1_ref[1, :, :] = jnp.zeros((W + 2, C1), jnp.float32)

    @pl.when(h == h_last)
    def _():
        pad1_ref[RH - 2, :, :] = jnp.zeros((W + 2, C1), jnp.float32)

    # ---- ghost1.cheap_operation : depthwise 3x3 + BN + ReLU on rows 1..RH-2 ----
    w1c = w1c_ref[...]                                  # (9, C1) hoisted once
    acc1 = pad1_ref[0:R2, 0:W, :] * w1c[0]
    for k in range(1, 9):
        kh, kw = divmod(k, 3)
        acc1 = acc1 + pad1_ref[kh:kh + R2, kw:kw + W, :] * w1c[k]
    x2 = jnp.maximum(acc1 * s1c_ref[...] + b1c_ref[...], 0.0)   # (R2, W, C1)

    # ---- ghost2.primary_conv : 1x1 conv over concat([x1, x2]) + BN (no act) ----
    # channel-concat folded into two matmuls against the split weight rows
    x1_mid = x1[1:1 + R2, :, :]
    h2 = (jnp.dot(x1_mid.reshape(R2 * W, C1), w2p_ref[:C1, :],
                  preferred_element_type=jnp.float32)
          + jnp.dot(x2.reshape(R2 * W, C1), w2p_ref[C1:, :],
                    preferred_element_type=jnp.float32))
    y1 = (h2 * s2p_ref[...] + b2p_ref[...]).reshape(R2, W, C2)

    # Stage y1 into the W-padded scratch for ghost2's depthwise conv.
    pad2_ref[:, 0, :] = jnp.zeros((R2, C2), jnp.float32)
    pad2_ref[:, W + 1, :] = jnp.zeros((R2, C2), jnp.float32)
    pad2_ref[:, 1:W + 1, :] = y1

    @pl.when(h == 0)
    def _():
        pad2_ref[0, :, :] = jnp.zeros((W + 2, C2), jnp.float32)

    @pl.when(h == h_last)
    def _():
        pad2_ref[R2 - 1, :, :] = jnp.zeros((W + 2, C2), jnp.float32)

    # ---- ghost2.cheap_operation : depthwise 3x3 + BN (no act) on the TH rows ----
    w2c = w2c_ref[...]
    acc2 = pad2_ref[0:TH, 0:W, :] * w2c[0]
    for k in range(1, 9):
        kh, kw = divmod(k, 3)
        acc2 = acc2 + pad2_ref[kh:kh + TH, kw:kw + W, :] * w2c[k]
    y2 = acc2 * s2c_ref[...] + b2c_ref[...]                     # (TH, W, C2)

    # ---- concat([y1, y2], channel) + identity shortcut ----
    x_c = x[2:2 + TH, :, :]
    y1c = y1[1:1 + TH, :, :]
    o_ref[:, :, 0:C2] = (y1c + x_c[:, :, 0:C2]).astype(o_ref.dtype)
    o_ref[:, :, C2:] = (y2 + x_c[:, :, C2:]).astype(o_ref.dtype)


@partial(jax.jit, static_argnames=("row_block",))
def ghost_bottleneck(x, p, *, row_block=8):
    N, H, W, Cin = x.shape
    C1 = p['w1p'].shape[1]
    C2 = p['w2p'].shape[1]
    Cout = 2 * C2
    assert Cin == Cout, "identity-shortcut config requires in_chs == out_chs"
    assert p['w2p'].shape[0] == 2 * C1

    TH = row_block if (H % row_block == 0) else H
    nH = H // TH
    RH, R2 = TH + 4, TH + 2

    # 2-row halo per side (two chained 3x3 dw convs); overlapping row windows.
    xp = jnp.pad(x, ((0, 0), (2, 2), (0, 0), (0, 0)))
    xw = jnp.stack([xp[:, h * TH: h * TH + RH] for h in range(nH)], axis=1)
    # xw: (N, nH, TH+4, W, Cin)

    weights = (p['w1p'], p['s1p'], p['b1p'], p['w1c'], p['s1c'], p['b1c'],
               p['w2p'], p['s2p'], p['b2p'], p['w2c'], p['s2c'], p['b2c'])

    def _replicated(shape):
        nd = len(shape)
        return pl.BlockSpec(shape, lambda n, h, _nd=nd: (0,) * _nd)

    in_specs = [pl.BlockSpec((None, None, RH, W, Cin),
                             lambda n, h: (n, h, 0, 0, 0))]
    in_specs += [_replicated(w.shape) for w in weights]

    return pl.pallas_call(
        ghost_bottleneck_kernel,
        out_shape=jax.ShapeDtypeStruct((N, H, W, Cout), x.dtype),
        grid=(N, nH),
        in_specs=in_specs,
        out_specs=pl.BlockSpec((None, TH, W, Cout), lambda n, h: (n, h, 0, 0)),
        scratch_shapes=[
            pltpu.VMEM((RH, W + 2, C1), jnp.float32),
            pltpu.VMEM((R2, W + 2, C2), jnp.float32),
        ],
        compiler_params=pltpu.CompilerParams(
            dimension_semantics=("parallel", "parallel"),
            vmem_limit_bytes=32 * 1024 * 1024,
        ),
    )(xw, *weights)


def make_params(key, in_chs, mid_chs, out_chs, eps=1e-5):
    assert mid_chs % 2 == 0 and out_chs % 2 == 0 and in_chs == out_chs
    C1 = math.ceil(mid_chs / 2)   # ghost1 init_chs
    C2 = math.ceil(out_chs / 2)   # ghost2 init_chs
    ks = jax.random.split(key, 20)

    def bn_fold(kg, kb, km, kv, C):
        gamma = jax.random.uniform(kg, (C,), jnp.float32, 0.5, 1.5)
        beta = 0.1 * jax.random.normal(kb, (C,), jnp.float32)
        mean = 0.1 * jax.random.normal(km, (C,), jnp.float32)
        var = jax.random.uniform(kv, (C,), jnp.float32, 0.5, 1.5)
        scale = gamma / jnp.sqrt(var + eps)
        bias = beta - mean * scale
        return scale.reshape(1, C), bias.reshape(1, C)

    p = {}
    # ghost1 primary: torch weight (C1, in_chs, 1, 1) -> (in_chs, C1)
    p['w1p'] = 0.3 * jax.random.normal(ks[0], (in_chs, C1), jnp.float32)
    p['s1p'], p['b1p'] = bn_fold(ks[1], ks[2], ks[3], ks[4], C1)
    # ghost1 cheap: torch weight (C1, 1, 3, 3) depthwise -> HWC (3,3,C1); kernel gets (9,C1)
    w1c_hwc = 0.3 * jax.random.normal(ks[5], (3, 3, C1), jnp.float32)
    p['w1c_hwc'] = w1c_hwc
    p['w1c'] = w1c_hwc.reshape(9, C1)
    p['s1c'], p['b1c'] = bn_fold(ks[6], ks[7], ks[8], ks[9], C1)
    # ghost2 primary: torch weight (C2, mid_chs, 1, 1) -> (mid_chs, C2)
    p['w2p'] = 0.3 * jax.random.normal(ks[10], (mid_chs, C2), jnp.float32)
    p['s2p'], p['b2p'] = bn_fold(ks[11], ks[12], ks[13], ks[14], C2)
    # ghost2 cheap: torch weight (C2, 1, 3, 3) depthwise
    w2c_hwc = 0.3 * jax.random.normal(ks[15], (3, 3, C2), jnp.float32)
    p['w2c_hwc'] = w2c_hwc
    p['w2c'] = w2c_hwc.reshape(9, C2)
    p['s2c'], p['b2c'] = bn_fold(ks[16], ks[17], ks[18], ks[19], C2)
    return p


def reference(x, p, mid_chs, out_chs):
    """Pure-JAX NHWC reference mirroring the PyTorch forward (eval-mode BN folded)."""
    def dw3x3(h, w_hwc):
        C = h.shape[-1]
        return jax.lax.conv_general_dilated(
            h, w_hwc.reshape(3, 3, 1, C), window_strides=(1, 1),
            padding=((1, 1), (1, 1)),
            dimension_numbers=('NHWC', 'HWIO', 'NHWC'),
            feature_group_count=C)

    x1 = jnp.maximum(jnp.einsum('nhwc,cd->nhwd', x, p['w1p']) * p['s1p'] + p['b1p'], 0.)
    x2 = jnp.maximum(dw3x3(x1, p['w1c_hwc']) * p['s1c'] + p['b1c'], 0.)
    xm = jnp.concatenate([x1, x2], axis=-1)[..., :mid_chs]
    y1 = jnp.einsum('nhwc,cd->nhwd', xm, p['w2p']) * p['s2p'] + p['b2p']
    y2 = dw3x3(y1, p['w2c_hwc']) * p['s2c'] + p['b2c']
    y = jnp.concatenate([y1, y2], axis=-1)[..., :out_chs]
    return y + x   # identity shortcut (in_chs == out_chs, stride == 1)


if __name__ == "__main__":
    key = jax.random.PRNGKey(0)
    kx, kp = jax.random.split(key)

    N, H, W = 2, 16, 16
    in_chs, mid_chs, out_chs = 8, 16, 8

    x = jax.random.normal(kx, (N, H, W, in_chs), jnp.float32)
    params = make_params(kp, in_chs, mid_chs, out_chs)

    out = jax.block_until_ready(ghost_bottleneck(x, params, row_block=8))
    ref = jax.block_until_ready(reference(x, params, mid_chs, out_chs))

    assert out.shape == (N, H, W, out_chs), out.shape
    np.testing.assert_allclose(np.asarray(out), np.asarray(ref), rtol=1e-4, atol=1e-4)
    print("KERNEL_OK")
</pallas_src>

<mosaic_0001>
module attributes {stable_mosaic.version = 11 : i64} {
  func.func @ghost_bottleneck_kernel(%arg0: i32, %arg1: i32, %arg2: memref<1x1x12x16x8xf32, #tpu.memory_space<vmem>>, %arg3: memref<8x8xf32, #tpu.memory_space<vmem>>, %arg4: memref<1x8xf32, #tpu.memory_space<vmem>>, %arg5: memref<1x8xf32, #tpu.memory_space<vmem>>, %arg6: memref<9x8xf32, #tpu.memory_space<vmem>>, %arg7: memref<1x8xf32, #tpu.memory_space<vmem>>, %arg8: memref<1x8xf32, #tpu.memory_space<vmem>>, %arg9: memref<16x4xf32, #tpu.memory_space<vmem>>, %arg10: memref<1x4xf32, #tpu.memory_space<vmem>>, %arg11: memref<1x4xf32, #tpu.memory_space<vmem>>, %arg12: memref<9x4xf32, #tpu.memory_space<vmem>>, %arg13: memref<1x4xf32, #tpu.memory_space<vmem>>, %arg14: memref<1x4xf32, #tpu.memory_space<vmem>>, %arg15: memref<1x8x16x8xf32, #tpu.memory_space<vmem>>, %arg16: memref<12x18x8xf32, #tpu.memory_space<vmem>>, %arg17: memref<10x18x4xf32, #tpu.memory_space<vmem>>) attributes {dimension_semantics = [#tpu.dimension_semantics<parallel>, #tpu.dimension_semantics<parallel>], iteration_bounds = array<i64: 2, 2>, scalar_prefetch = 0 : i64, scratch_operands = 2 : i64, tpu.core_type = #tpu.core_type<tc>, window_params = [{transform_indices = @transform_0, window_bounds = array<i64: 1, 1, 12, 16, 8>}, {pipeline_mode = #tpu.pipeline_mode<synchronous>, transform_indices = @transform_1, window_bounds = array<i64: 8, 8>}, {pipeline_mode = #tpu.pipeline_mode<synchronous>, transform_indices = @transform_2, window_bounds = array<i64: 1, 8>}, {pipeline_mode = #tpu.pipeline_mode<synchronous>, transform_indices = @transform_3, window_bounds = array<i64: 1, 8>}, {pipeline_mode = #tpu.pipeline_mode<synchronous>, transform_indices = @transform_4, window_bounds = array<i64: 9, 8>}, {pipeline_mode = #tpu.pipeline_mode<synchronous>, transform_indices = @transform_5, window_bounds = array<i64: 1, 8>}, {pipeline_mode = #tpu.pipeline_mode<synchronous>, transform_indices = @transform_6, window_bounds = array<i64: 1, 8>}, {pipeline_mode = #tpu.pipeline_mode<synchronous>, transform_indices = @transform_7, window_bounds = array<i64: 16, 4>}, {pipeline_mode = #tpu.pipeline_mode<synchronous>, transform_indices = @transform_8, window_bounds = array<i64: 1, 4>}, {pipeline_mode = #tpu.pipeline_mode<synchronous>, transform_indices = @transform_9, window_bounds = array<i64: 1, 4>}, {pipeline_mode = #tpu.pipeline_mode<synchronous>, transform_indices = @transform_10, window_bounds = array<i64: 9, 4>}, {pipeline_mode = #tpu.pipeline_mode<synchronous>, transform_indices = @transform_11, window_bounds = array<i64: 1, 4>}, {pipeline_mode = #tpu.pipeline_mode<synchronous>, transform_indices = @transform_12, window_bounds = array<i64: 1, 4>}, {transform_indices = @transform_13, window_bounds = array<i64: 1, 8, 16, 8>}]} {
    %c0 = arith.constant 0 : index
    %c0_0 = arith.constant 0 : index
    %c0_1 = arith.constant 0 : index
    %c0_2 = arith.constant 0 : index
    %c0_3 = arith.constant 0 : index
    %0 = vector.load %arg2[%c0, %c0_0, %c0_1, %c0_2, %c0_3] : memref<1x1x12x16x8xf32, #tpu.memory_space<vmem>>, vector<1x1x12x16x8xf32>
    %1 = vector.shape_cast %0 : vector<1x1x12x16x8xf32> to vector<12x16x8xf32>
    %2 = vector.shape_cast %1 : vector<12x16x8xf32> to vector<192x8xf32>
    %c0_4 = arith.constant 0 : index
    %c0_5 = arith.constant 0 : index
    %3 = vector.load %arg3[%c0_4, %c0_5] : memref<8x8xf32, #tpu.memory_space<vmem>>, vector<8x8xf32>
    %cst = arith.constant dense<0.000000e+00> : vector<192x8xf32>
    %4 = tpu.matmul %2, %3, %cst {dimension_numbers = #tpu.dot_dimension_numbers<[1], [0], [0], [1], [0, 0, 1, 1], [], []>} : vector<192x8xf32>, vector<8x8xf32>, vector<192x8xf32> -> vector<192x8xf32>
    %c0_6 = arith.constant 0 : index
    %c0_7 = arith.constant 0 : index
    %5 = vector.load %arg4[%c0_6, %c0_7] : memref<1x8xf32, #tpu.memory_space<vmem>>, vector<1x8xf32>
    %6 = vector.broadcast %5 : vector<1x8xf32> to vector<192x8xf32>
    %7 = arith.mulf %4, %6 : vector<192x8xf32>
    %c0_8 = arith.constant 0 : index
    %c0_9 = arith.constant 0 : index
    %8 = vector.load %arg5[%c0_8, %c0_9] : memref<1x8xf32, #tpu.memory_space<vmem>>, vector<1x8xf32>
    %9 = vector.broadcast %8 : vector<1x8xf32> to vector<192x8xf32>
    %10 = arith.addf %7, %9 : vector<192x8xf32>
    %cst_10 = arith.constant 0.000000e+00 : f32
    %11 = vector.broadcast %cst_10 : f32 to vector<192x8xf32>
    %12 = arith.maximumf %10, %11 : vector<192x8xf32>
    %13 = vector.shape_cast %12 : vector<192x8xf32> to vector<12x16x8xf32>
    %cst_11 = arith.constant 0.000000e+00 : f32
    %14 = vector.broadcast %cst_11 : f32 to vector<12x8xf32>
    %c0_12 = arith.constant 0 : index
    %c0_13 = arith.constant 0 : index
    %c0_14 = arith.constant 0 : index
    %15 = vector.load %arg16[%c0_12, %c0_13, %c0_14] : memref<12x18x8xf32, #tpu.memory_space<vmem>>, vector<12x1x8xf32>
    %16 = vector.shape_cast %15 : vector<12x1x8xf32> to vector<12x8xf32>
    %17 = vector.shape_cast %14 : vector<12x8xf32> to vector<12x1x8xf32>
    tpu.vector_store %arg16[%c0_12, %c0_13, %c0_14], %17 {strides = array<i32>} : memref<12x18x8xf32, #tpu.memory_space<vmem>>, vector<12x1x8xf32>,
    %cst_15 = arith.constant 0.000000e+00 : f32
    %18 = vector.broadcast %cst_15 : f32 to vector<12x8xf32>
    %c0_16 = arith.constant 0 : index
    %c17 = arith.constant 17 : index
    %c0_17 = arith.constant 0 : index
    %19 = vector.load %arg16[%c0_16, %c17, %c0_17] : memref<12x18x8xf32, #tpu.memory_space<vmem>>, vector<12x1x8xf32>
    %20 = vector.shape_cast %19 : vector<12x1x8xf32> to vector<12x8xf32>
    %21 = vector.shape_cast %18 : vector<12x8xf32> to vector<12x1x8xf32>
    tpu.vector_store %arg16[%c0_16, %c17, %c0_17], %21 {strides = array<i32>} : memref<12x18x8xf32, #tpu.memory_space<vmem>>, vector<12x1x8xf32>,
    %c0_18 = arith.constant 0 : index
    %c1 = arith.constant 1 : index
    %c0_19 = arith.constant 0 : index
    %22 = vector.load %arg16[%c0_18, %c1, %c0_19] : memref<12x18x8xf32, #tpu.memory_space<vmem>>, vector<12x16x8xf32>
    tpu.vector_store %arg16[%c0_18, %c1, %c0_19], %13 {strides = array<i32>} : memref<12x18x8xf32, #tpu.memory_space<vmem>>, vector<12x16x8xf32>,
    %c0_i32 = arith.constant 0 : i32
    %23 = arith.cmpi eq, %arg1, %c0_i32 : i32
    %24 = arith.extui %23 : i1 to i32
    %c0_i32_20 = arith.constant 0 : i32
    %25 = arith.cmpi ne, %24, %c0_i32_20 : i32
    scf.if %25 {
      %cst_119 = arith.constant 0.000000e+00 : f32
      %215 = vector.broadcast %cst_119 : f32 to vector<18x8xf32>
      %c1_120 = arith.constant 1 : index
      %c0_121 = arith.constant 0 : index
      %c0_122 = arith.constant 0 : index
      %216 = vector.load %arg16[%c1_120, %c0_121, %c0_122] : memref<12x18x8xf32, #tpu.memory_space<vmem>>, vector<1x18x8xf32>
      %217 = vector.shape_cast %216 : vector<1x18x8xf32> to vector<18x8xf32>
      %218 = vector.shape_cast %215 : vector<18x8xf32> to vector<1x18x8xf32>
      tpu.vector_store %arg16[%c1_120, %c0_121, %c0_122], %218 {strides = array<i32>} : memref<12x18x8xf32, #tpu.memory_space<vmem>>, vector<1x18x8xf32>,
    } else {
    }
    %c1_i32 = arith.constant 1 : i32
    %26 = arith.cmpi eq, %arg1, %c1_i32 : i32
    %27 = arith.extui %26 : i1 to i32
    %c0_i32_21 = arith.constant 0 : i32
    %28 = arith.cmpi ne, %27, %c0_i32_21 : i32
    scf.if %28 {
      %cst_119 = arith.constant 0.000000e+00 : f32
      %215 = vector.broadcast %cst_119 : f32 to vector<18x8xf32>
      %c10 = arith.constant 10 : index
      %c0_120 = arith.constant 0 : index
      %c0_121 = arith.constant 0 : index
      %216 = vector.load %arg16[%c10, %c0_120, %c0_121] : memref<12x18x8xf32, #tpu.memory_space<vmem>>, vector<1x18x8xf32>
      %217 = vector.shape_cast %216 : vector<1x18x8xf32> to vector<18x8xf32>
      %218 = vector.shape_cast %215 : vector<18x8xf32> to vector<1x18x8xf32>
      tpu.vector_store %arg16[%c10, %c0_120, %c0_121], %218 {strides = array<i32>} : memref<12x18x8xf32, #tpu.memory_space<vmem>>, vector<1x18x8xf32>,
    } else {
    }
    %c0_22 = arith.constant 0 : index
    %c0_23 = arith.constant 0 : index
    %29 = vector.load %arg6[%c0_22, %c0_23] : memref<9x8xf32, #tpu.memory_space<vmem>>, vector<9x8xf32>
    %c0_24 = arith.constant 0 : index
    %c0_25 = arith.constant 0 : index
    %c0_26 = arith.constant 0 : index
    %30 = vector.load %arg16[%c0_24, %c0_25, %c0_26] : memref<12x18x8xf32, #tpu.memory_space<vmem>>, vector<10x16x8xf32>
    %31 = vector.extract_strided_slice %29 {offsets = [0, 0], sizes = [1, 8], strides = [1, 1]} : vector<9x8xf32> to vector<1x8xf32>
    %32 = vector.shape_cast %31 : vector<1x8xf32> to vector<8xf32>
    %33 = vector.shape_cast %32 : vector<8xf32> to vector<1x1x8xf32>
    %34 = vector.broadcast %33 : vector<1x1x8xf32> to vector<10x16x8xf32>
    %35 = arith.mulf %30, %34 : vector<10x16x8xf32>
    %c0_27 = arith.constant 0 : index
    %c1_28 = arith.constant 1 : index
    %c0_29 = arith.constant 0 : index
    %36 = vector.load %arg16[%c0_27, %c1_28, %c0_29] : memref<12x18x8xf32, #tpu.memory_space<vmem>>, vector<10x16x8xf32>
    %37 = vector.extract_strided_slice %29 {offsets = [1, 0], sizes = [1, 8], strides = [1, 1]} : vector<9x8xf32> to vector<1x8xf32>
    %38 = vector.shape_cast %37 : vector<1x8xf32> to vector<8xf32>
    %39 = vector.shape_cast %38 : vector<8xf32> to vector<1x1x8xf32>
    %40 = vector.broadcast %39 : vector<1x1x8xf32> to vector<10x16x8xf32>
    %41 = arith.mulf %36, %40 : vector<10x16x8xf32>
    %42 = arith.addf %35, %41 : vector<10x16x8xf32>
    %c0_30 = arith.constant 0 : index
    %c2 = arith.constant 2 : index
    %c0_31 = arith.constant 0 : index
    %43 = vector.load %arg16[%c0_30, %c2, %c0_31] : memref<12x18x8xf32, #tpu.memory_space<vmem>>, vector<10x16x8xf32>
    %44 = vector.extract_strided_slice %29 {offsets = [2, 0], sizes = [1, 8], strides = [1, 1]} : vector<9x8xf32> to vector<1x8xf32>
    %45 = vector.shape_cast %44 : vector<1x8xf32> to vector<8xf32>
    %46 = vector.shape_cast %45 : vector<8xf32> to vector<1x1x8xf32>
    %47 = vector.broadcast %46 : vector<1x1x8xf32> to vector<10x16x8xf32>
    %48 = arith.mulf %43, %47 : vector<10x16x8xf32>
    %49 = arith.addf %42, %48 : vector<10x16x8xf32>
    %c1_32 = arith.constant 1 : index
    %c0_33 = arith.constant 0 : index
    %c0_34 = arith.constant 0 : index
    %50 = vector.load %arg16[%c1_32, %c0_33, %c0_34] : memref<12x18x8xf32, #tpu.memory_space<vmem>>, vector<10x16x8xf32>
    %51 = vector.extract_strided_slice %29 {offsets = [3, 0], sizes = [1, 8], strides = [1, 1]} : vector<9x8xf32> to vector<1x8xf32>
    %52 = vector.shape_cast %51 : vector<1x8xf32> to vector<8xf32>
    %53 = vector.shape_cast %52 : vector<8xf32> to vector<1x1x8xf32>
    %54 = vector.broadcast %53 : vector<1x1x8xf32> to vector<10x16x8xf32>
    %55 = arith.mulf %50, %54 : vector<10x16x8xf32>
    %56 = arith.addf %49, %55 : vector<10x16x8xf32>
    %c1_35 = arith.constant 1 : index
    %c1_36 = arith.constant 1 : index
    %c0_37 = arith.constant 0 : index
    %57 = vector.load %arg16[%c1_35, %c1_36, %c0_37] : memref<12x18x8xf32, #tpu.memory_space<vmem>>, vector<10x16x8xf32>
    %58 = vector.extract_strided_slice %29 {offsets = [4, 0], sizes = [1, 8], strides = [1, 1]} : vector<9x8xf32> to vector<1x8xf32>
    %59 = vector.shape_cast %58 : vector<1x8xf32> to vector<8xf32>
    %60 = vector.shape_cast %59 : vector<8xf32> to vector<1x1x8xf32>
    %61 = vector.broadcast %60 : vector<1x1x8xf32> to vector<10x16x8xf32>
    %62 = arith.mulf %57, %61 : vector<10x16x8xf32>
    %63 = arith.addf %56, %62 : vector<10x16x8xf32>
    %c1_38 = arith.constant 1 : index
    %c2_39 = arith.constant 2 : index
    %c0_40 = arith.constant 0 : index
    %64 = vector.load %arg16[%c1_38, %c2_39, %c0_40] : memref<12x18x8xf32, #tpu.memory_space<vmem>>, vector<10x16x8xf32>
    %65 = vector.extract_strided_slice %29 {offsets = [5, 0], sizes = [1, 8], strides = [1, 1]} : vector<9x8xf32> to vector<1x8xf32>
    %66 = vector.shape_cast %65 : vector<1x8xf32> to vector<8xf32>
    %67 = vector.shape_cast %66 : vector<8xf32> to vector<1x1x8xf32>
    %68 = vector.broadcast %67 : vector<1x1x8xf32> to vector<10x16x8xf32>
    %69 = arith.mulf %64, %68 : vector<10x16x8xf32>
    %70 = arith.addf %63, %69 : vector<10x16x8xf32>
    %c2_41 = arith.constant 2 : index
    %c0_42 = arith.constant 0 : index
    %c0_43 = arith.constant 0 : index
    %71 = vector.load %arg16[%c2_41, %c0_42, %c0_43] : memref<12x18x8xf32, #tpu.memory_space<vmem>>, vector<10x16x8xf32>
    %72 = vector.extract_strided_slice %29 {offsets = [6, 0], sizes = [1, 8], strides = [1, 1]} : vector<9x8xf32> to vector<1x8xf32>
    %73 = vector.shape_cast %72 : vector<1x8xf32> to vector<8xf32>
    %74 = vector.shape_cast %73 : vector<8xf32> to vector<1x1x8xf32>
    %75 = vector.broadcast %74 : vector<1x1x8xf32> to vector<10x16x8xf32>
    %76 = arith.mulf %71, %75 : vector<10x16x8xf32>
    %77 = arith.addf %70, %76 : vector<10x16x8xf32>
    %c2_44 = arith.constant 2 : index
    %c1_45 = arith.constant 1 : index
    %c0_46 = arith.constant 0 : index
    %78 = vector.load %arg16[%c2_44, %c1_45, %c0_46] : memref<12x18x8xf32, #tpu.memory_space<vmem>>, vector<10x16x8xf32>
    %79 = vector.extract_strided_slice %29 {offsets = [7, 0], sizes = [1, 8], strides = [1, 1]} : vector<9x8xf32> to vector<1x8xf32>
    %80 = vector.shape_cast %79 : vector<1x8xf32> to vector<8xf32>
    %81 = vector.shape_cast %80 : vector<8xf32> to vector<1x1x8xf32>
    %82 = vector.broadcast %81 : vector<1x1x8xf32> to vector<10x16x8xf32>
    %83 = arith.mulf %78, %82 : vector<10x16x8xf32>
    %84 = arith.addf %77, %83 : vector<10x16x8xf32>
    %c2_47 = arith.constant 2 : index
    %c2_48 = arith.constant 2 : index
    %c0_49 = arith.constant 0 : index
    %85 = vector.load %arg16[%c2_47, %c2_48, %c0_49] : memref<12x18x8xf32, #tpu.memory_space<vmem>>, vector<10x16x8xf32>
    %86 = vector.extract_strided_slice %29 {offsets = [8, 0], sizes = [1, 8], strides = [1, 1]} : vector<9x8xf32> to vector<1x8xf32>
    %87 = vector.shape_cast %86 : vector<1x8xf32> to vector<8xf32>
    %88 = vector.shape_cast %87 : vector<8xf32> to vector<1x1x8xf32>
    %89 = vector.broadcast %88 : vector<1x1x8xf32> to vector<10x16x8xf32>
    %90 = arith.mulf %85, %89 : vector<10x16x8xf32>
    %91 = arith.addf %84, %90 : vector<10x16x8xf32>
    %c0_50 = arith.constant 0 : index
    %c0_51 = arith.constant 0 : index
    %92 = vector.load %arg7[%c0_50, %c0_51] : memref<1x8xf32, #tpu.memory_space<vmem>>, vector<1x8xf32>
    %93 = vector.shape_cast %92 : vector<1x8xf32> to vector<1x1x8xf32>
    %94 = vector.broadcast %93 : vector<1x1x8xf32> to vector<10x16x8xf32>
    %95 = arith.mulf %91, %94 : vector<10x16x8xf32>
    %c0_52 = arith.constant 0 : index
    %c0_53 = arith.constant 0 : index
    %96 = vector.load %arg8[%c0_52, %c0_53] : memref<1x8xf32, #tpu.memory_space<vmem>>, vector<1x8xf32>
    %97 = vector.shape_cast %96 : vector<1x8xf32> to vector<1x1x8xf32>
    %98 = vector.broadcast %97 : vector<1x1x8xf32> to vector<10x16x8xf32>
    %99 = arith.addf %95, %98 : vector<10x16x8xf32>
    %cst_54 = arith.constant 0.000000e+00 : f32
    %100 = vector.broadcast %cst_54 : f32 to vector<10x16x8xf32>
    %101 = arith.maximumf %99, %100 : vector<10x16x8xf32>
    %102 = vector.extract_strided_slice %13 {offsets = [1, 0, 0], sizes = [10, 16, 8], strides = [1, 1, 1]} : vector<12x16x8xf32> to vector<10x16x8xf32>
    %103 = vector.shape_cast %102 : vector<10x16x8xf32> to vector<160x8xf32>
    %c0_55 = arith.constant 0 : index
    %c0_56 = arith.constant 0 : index
    %104 = vector.load %arg9[%c0_55, %c0_56] : memref<16x4xf32, #tpu.memory_space<vmem>>, vector<8x4xf32>
    %cst_57 = arith.constant dense<0.000000e+00> : vector<160x4xf32>
    %105 = tpu.matmul %103, %104, %cst_57 {dimension_numbers = #tpu.dot_dimension_numbers<[1], [0], [0], [1], [0, 0, 1, 1], [], []>} : vector<160x8xf32>, vector<8x4xf32>, vector<160x4xf32> -> vector<160x4xf32>
    %106 = vector.shape_cast %101 : vector<10x16x8xf32> to vector<160x8xf32>
    %c8 = arith.constant 8 : index
    %c0_58 = arith.constant 0 : index
    %107 = vector.load %arg9[%c8, %c0_58] : memref<16x4xf32, #tpu.memory_space<vmem>>, vector<8x4xf32>
    %cst_59 = arith.constant dense<0.000000e+00> : vector<160x4xf32>
    %108 = tpu.matmul %106, %107, %cst_59 {dimension_numbers = #tpu.dot_dimension_numbers<[1], [0], [0], [1], [0, 0, 1, 1], [], []>} : vector<160x8xf32>, vector<8x4xf32>, vector<160x4xf32> -> vector<160x4xf32>
    %109 = arith.addf %105, %108 : vector<160x4xf32>
    %c0_60 = arith.constant 0 : index
    %c0_61 = arith.constant 0 : index
    %110 = vector.load %arg10[%c0_60, %c0_61] : memref<1x4xf32, #tpu.memory_space<vmem>>, vector<1x4xf32>
    %111 = vector.broadcast %110 : vector<1x4xf32> to vector<160x4xf32>
    %112 = arith.mulf %109, %111 : vector<160x4xf32>
    %c0_62 = arith.constant 0 : index
    %c0_63 = arith.constant 0 : index
    %113 = vector.load %arg11[%c0_62, %c0_63] : memref<1x4xf32, #tpu.memory_space<vmem>>, vector<1x4xf32>
    %114 = vector.broadcast %113 : vector<1x4xf32> to vector<160x4xf32>
    %115 = arith.addf %112, %114 : vector<160x4xf32>
    %116 = vector.shape_cast %115 : vector<160x4xf32> to vector<10x16x4xf32>
    %cst_64 = arith.constant 0.000000e+00 : f32
    %117 = vector.broadcast %cst_64 : f32 to vector<10x4xf32>
    %c0_65 = arith.constant 0 : index
    %c0_66 = arith.constant 0 : index
    %c0_67 = arith.constant 0 : index
    %118 = vector.load %arg17[%c0_65, %c0_66, %c0_67] : memref<10x18x4xf32, #tpu.memory_space<vmem>>, vector<10x1x4xf32>
    %119 = vector.shape_cast %118 : vector<10x1x4xf32> to vector<10x4xf32>
    %120 = vector.shape_cast %117 : vector<10x4xf32> to vector<10x1x4xf32>
    tpu.vector_store %arg17[%c0_65, %c0_66, %c0_67], %120 {strides = array<i32>} : memref<10x18x4xf32, #tpu.memory_space<vmem>>, vector<10x1x4xf32>,
    %cst_68 = arith.constant 0.000000e+00 : f32
    %121 = vector.broadcast %cst_68 : f32 to vector<10x4xf32>
    %c0_69 = arith.constant 0 : index
    %c17_70 = arith.constant 17 : index
    %c0_71 = arith.constant 0 : index
    %122 = vector.load %arg17[%c0_69, %c17_70, %c0_71] : memref<10x18x4xf32, #tpu.memory_space<vmem>>, vector<10x1x4xf32>
    %123 = vector.shape_cast %122 : vector<10x1x4xf32> to vector<10x4xf32>
    %124 = vector.shape_cast %121 : vector<10x4xf32> to vector<10x1x4xf32>
    tpu.vector_store %arg17[%c0_69, %c17_70, %c0_71], %124 {strides = array<i32>} : memref<10x18x4xf32, #tpu.memory_space<vmem>>, vector<10x1x4xf32>,
    %c0_72 = arith.constant 0 : index
    %c1_73 = arith.constant 1 : index
    %c0_74 = arith.constant 0 : index
    %125 = vector.load %arg17[%c0_72, %c1_73, %c0_74] : memref<10x18x4xf32, #tpu.memory_space<vmem>>, vector<10x16x4xf32>
    tpu.vector_store %arg17[%c0_72, %c1_73, %c0_74], %116 {strides = array<i32>} : memref<10x18x4xf32, #tpu.memory_space<vmem>>, vector<10x16x4xf32>,
    %c0_i32_75 = arith.constant 0 : i32
    %126 = arith.cmpi eq, %arg1, %c0_i32_75 : i32
    %127 = arith.extui %126 : i1 to i32
    %c0_i32_76 = arith.constant 0 : i32
    %128 = arith.cmpi ne, %127, %c0_i32_76 : i32
    scf.if %128 {
      %cst_119 = arith.constant 0.000000e+00 : f32
      %215 = vector.broadcast %cst_119 : f32 to vector<18x4xf32>
      %c0_120 = arith.constant 0 : index
      %c0_121 = arith.constant 0 : index
      %c0_122 = arith.constant 0 : index
      %216 = vector.load %arg17[%c0_120, %c0_121, %c0_122] : memref<10x18x4xf32, #tpu.memory_space<vmem>>, vector<1x18x4xf32>
      %217 = vector.shape_cast %216 : vector<1x18x4xf32> to vector<18x4xf32>
      %218 = vector.shape_cast %215 : vector<18x4xf32> to vector<1x18x4xf32>
      tpu.vector_store %arg17[%c0_120, %c0_121, %c0_122], %218 {strides = array<i32>} : memref<10x18x4xf32, #tpu.memory_space<vmem>>, vector<1x18x4xf32>,
    } else {
    }
    %c1_i32_77 = arith.constant 1 : i32
    %129 = arith.cmpi eq, %arg1, %c1_i32_77 : i32
    %130 = arith.extui %129 : i1 to i32
    %c0_i32_78 = arith.constant 0 : i32
    %131 = arith.cmpi ne, %130, %c0_i32_78 : i32
    scf.if %131 {
      %cst_119 = arith.constant 0.000000e+00 : f32
      %215 = vector.broadcast %cst_119 : f32 to vector<18x4xf32>
      %c9 = arith.constant 9 : index
      %c0_120 = arith.constant 0 : index
      %c0_121 = arith.constant 0 : index
      %216 = vector.load %arg17[%c9, %c0_120, %c0_121] : memref<10x18x4xf32, #tpu.memory_space<vmem>>, vector<1x18x4xf32>
      %217 = vector.shape_cast %216 : vector<1x18x4xf32> to vector<18x4xf32>
      %218 = vector.shape_cast %215 : vector<18x4xf32> to vector<1x18x4xf32>
      tpu.vector_store %arg17[%c9, %c0_120, %c0_121], %218 {strides = array<i32>} : memref<10x18x4xf32, #tpu.memory_space<vmem>>, vector<1x18x4xf32>,
    } else {
    }
    %c0_79 = arith.constant 0 : index
    %c0_80 = arith.constant 0 : index
    %132 = vector.load %arg12[%c0_79, %c0_80] : memref<9x4xf32, #tpu.memory_space<vmem>>, vector<9x4xf32>
    %c0_81 = arith.constant 0 : index
    %c0_82 = arith.constant 0 : index
    %c0_83 = arith.constant 0 : index
    %133 = vector.load %arg17[%c0_81, %c0_82, %c0_83] : memref<10x18x4xf32, #tpu.memory_space<vmem>>, vector<8x16x4xf32>
    %134 = vector.extract_strided_slice %132 {offsets = [0, 0], sizes = [1, 4], strides = [1, 1]} : vector<9x4xf32> to vector<1x4xf32>
    %135 = vector.shape_cast %134 : vector<1x4xf32> to vector<4xf32>
    %136 = vector.shape_cast %135 : vector<4xf32> to vector<1x1x4xf32>
    %137 = vector.broadcast %136 : vector<1x1x4xf32> to vector<8x16x4xf32>
    %138 = arith.mulf %133, %137 : vector<8x16x4xf32>
    %c0_84 = arith.constant 0 : index
    %c1_85 = arith.constant 1 : index
    %c0_86 = arith.constant 0 : index
    %139 = vector.load %arg17[%c0_84, %c1_85, %c0_86] : memref<10x18x4xf32, #tpu.memory_space<vmem>>, vector<8x16x4xf32>
    %140 = vector.extract_strided_slice %132 {offsets = [1, 0], sizes = [1, 4], strides = [1, 1]} : vector<9x4xf32> to vector<1x4xf32>
    %141 = vector.shape_cast %140 : vector<1x4xf32> to vector<4xf32>
    %142 = vector.shape_cast %141 : vector<4xf32> to vector<1x1x4xf32>
    %143 = vector.broadcast %142 : vector<1x1x4xf32> to vector<8x16x4xf32>
    %144 = arith.mulf %139, %143 : vector<8x16x4xf32>
    %145 = arith.addf %138, %144 : vector<8x16x4xf32>
    %c0_87 = arith.constant 0 : index
    %c2_88 = arith.constant 2 : index
    %c0_89 = arith.constant 0 : index
    %146 = vector.load %arg17[%c0_87, %c2_88, %c0_89] : memref<10x18x4xf32, #tpu.memory_space<vmem>>, vector<8x16x4xf32>
    %147 = vector.extract_strided_slice %132 {offsets = [2, 0], sizes = [1, 4], strides = [1, 1]} : vector<9x4xf32> to vector<1x4xf32>
    %148 = vector.shape_cast %147 : vector<1x4xf32> to vector<4xf32>
    %149 = vector.shape_cast %148 : vector<4xf32> to vector<1x1x4xf32>
    %150 = vector.broadcast %149 : vector<1x1x4xf32> to vector<8x16x4xf32>
    %151 = arith.mulf %146, %150 : vector<8x16x4xf32>
    %152 = arith.addf %145, %151 : vector<8x16x4xf32>
    %c1_90 = arith.constant 1 : index
    %c0_91 = arith.constant 0 : index
    %c0_92 = arith.constant 0 : index
    %153 = vector.load %arg17[%c1_90, %c0_91, %c0_92] : memref<10x18x4xf32, #tpu.memory_space<vmem>>, vector<8x16x4xf32>
    %154 = vector.extract_strided_slice %132 {offsets = [3, 0], sizes = [1, 4], strides = [1, 1]} : vector<9x4xf32> to vector<1x4xf32>
    %155 = vector.shape_cast %154 : vector<1x4xf32> to vector<4xf32>
    %156 = vector.shape_cast %155 : vector<4xf32> to vector<1x1x4xf32>
    %157 = vector.broadcast %156 : vector<1x1x4xf32> to vector<8x16x4xf32>
    %158 = arith.mulf %153, %157 : vector<8x16x4xf32>
    %159 = arith.addf %152, %158 : vector<8x16x4xf32>
    %c1_93 = arith.constant 1 : index
    %c1_94 = arith.constant 1 : index
    %c0_95 = arith.constant 0 : index
    %160 = vector.load %arg17[%c1_93, %c1_94, %c0_95] : memref<10x18x4xf32, #tpu.memory_space<vmem>>, vector<8x16x4xf32>
    %161 = vector.extract_strided_slice %132 {offsets = [4, 0], sizes = [1, 4], strides = [1, 1]} : vector<9x4xf32> to vector<1x4xf32>
    %162 = vector.shape_cast %161 : vector<1x4xf32> to vector<4xf32>
    %163 = vector.shape_cast %162 : vector<4xf32> to vector<1x1x4xf32>
    %164 = vector.broadcast %163 : vector<1x1x4xf32> to vector<8x16x4xf32>
    %165 = arith.mulf %160, %164 : vector<8x16x4xf32>
    %166 = arith.addf %159, %165 : vector<8x16x4xf32>
    %c1_96 = arith.constant 1 : index
    %c2_97 = arith.constant 2 : index
    %c0_98 = arith.constant 0 : index
    %167 = vector.load %arg17[%c1_96, %c2_97, %c0_98] : memref<10x18x4xf32, #tpu.memory_space<vmem>>, vector<8x16x4xf32>
    %168 = vector.extract_strided_slice %132 {offsets = [5, 0], sizes = [1, 4], strides = [1, 1]} : vector<9x4xf32> to vector<1x4xf32>
    %169 = vector.shape_cast %168 : vector<1x4xf32> to vector<4xf32>
    %170 = vector.shape_cast %169 : vector<4xf32> to vector<1x1x4xf32>
    %171 = vector.broadcast %170 : vector<1x1x4xf32> to vector<8x16x4xf32>
    %172 = arith.mulf %167, %171 : vector<8x16x4xf32>
    %173 = arith.addf %166, %172 : vector<8x16x4xf32>
    %c2_99 = arith.constant 2 : index
    %c0_100 = arith.constant 0 : index
    %c0_101 = arith.constant 0 : index
    %174 = vector.load %arg17[%c2_99, %c0_100, %c0_101] : memref<10x18x4xf32, #tpu.memory_space<vmem>>, vector<8x16x4xf32>
    %175 = vector.extract_strided_slice %132 {offsets = [6, 0], sizes = [1, 4], strides = [1, 1]} : vector<9x4xf32> to vector<1x4xf32>
    %176 = vector.shape_cast %175 : vector<1x4xf32> to vector<4xf32>
    %177 = vector.shape_cast %176 : vector<4xf32> to vector<1x1x4xf32>
    %178 = vector.broadcast %177 : vector<1x1x4xf32> to vector<8x16x4xf32>
    %179 = arith.mulf %174, %178 : vector<8x16x4xf32>
    %180 = arith.addf %173, %179 : vector<8x16x4xf32>
    %c2_102 = arith.constant 2 : index
    %c1_103 = arith.constant 1 : index
    %c0_104 = arith.constant 0 : index
    %181 = vector.load %arg17[%c2_102, %c1_103, %c0_104] : memref<10x18x4xf32, #tpu.memory_space<vmem>>, vector<8x16x4xf32>
    %182 = vector.extract_strided_slice %132 {offsets = [7, 0], sizes = [1, 4], strides = [1, 1]} : vector<9x4xf32> to vector<1x4xf32>
    %183 = vector.shape_cast %182 : vector<1x4xf32> to vector<4xf32>
    %184 = vector.shape_cast %183 : vector<4xf32> to vector<1x1x4xf32>
    %185 = vector.broadcast %184 : vector<1x1x4xf32> to vector<8x16x4xf32>
    %186 = arith.mulf %181, %185 : vector<8x16x4xf32>
    %187 = arith.addf %180, %186 : vector<8x16x4xf32>
    %c2_105 = arith.constant 2 : index
    %c2_106 = arith.constant 2 : index
    %c0_107 = arith.constant 0 : index
    %188 = vector.load %arg17[%c2_105, %c2_106, %c0_107] : memref<10x18x4xf32, #tpu.memory_space<vmem>>, vector<8x16x4xf32>
    %189 = vector.extract_strided_slice %132 {offsets = [8, 0], sizes = [1, 4], strides = [1, 1]} : vector<9x4xf32> to vector<1x4xf32>
    %190 = vector.shape_cast %189 : vector<1x4xf32> to vector<4xf32>
    %191 = vector.shape_cast %190 : vector<4xf32> to vector<1x1x4xf32>
    %192 = vector.broadcast %191 : vector<1x1x4xf32> to vector<8x16x4xf32>
    %193 = arith.mulf %188, %192 : vector<8x16x4xf32>
    %194 = arith.addf %187, %193 : vector<8x16x4xf32>
    %c0_108 = arith.constant 0 : index
    %c0_109 = arith.constant 0 : index
    %195 = vector.load %arg13[%c0_108, %c0_109] : memref<1x4xf32, #tpu.memory_space<vmem>>, vector<1x4xf32>
    %196 = vector.shape_cast %195 : vector<1x4xf32> to vector<1x1x4xf32>
    %197 = vector.broadcast %196 : vector<1x1x4xf32> to vector<8x16x4xf32>
    %198 = arith.mulf %194, %197 : vector<8x16x4xf32>
    %c0_110 = arith.constant 0 : index
    %c0_111 = arith.constant 0 : index
    %199 = vector.load %arg14[%c0_110, %c0_111] : memref<1x4xf32, #tpu.memory_space<vmem>>, vector<1x4xf32>
    %200 = vector.shape_cast %199 : vector<1x4xf32> to vector<1x1x4xf32>
    %201 = vector.broadcast %200 : vector<1x1x4xf32> to vector<8x16x4xf32>
    %202 = arith.addf %198, %201 : vector<8x16x4xf32>
    %203 = vector.extract_strided_slice %1 {offsets = [2, 0, 0], sizes = [8, 16, 8], strides = [1, 1, 1]} : vector<12x16x8xf32> to vector<8x16x8xf32>
    %204 = vector.extract_strided_slice %116 {offsets = [1, 0, 0], sizes = [8, 16, 4], strides = [1, 1, 1]} : vector<10x16x4xf32> to vector<8x16x4xf32>
    %205 = vector.extract_strided_slice %203 {offsets = [0, 0, 0], sizes = [8, 16, 4], strides = [1, 1, 1]} : vector<8x16x8xf32> to vector<8x16x4xf32>
    %206 = arith.addf %204, %205 : vector<8x16x4xf32>
    %c0_112 = arith.constant 0 : index
    %c0_113 = arith.constant 0 : index
    %c0_114 = arith.constant 0 : index
    %c0_115 = arith.constant 0 : index
    %207 = vector.load %arg15[%c0_112, %c0_113, %c0_114, %c0_115] : memref<1x8x16x8xf32, #tpu.memory_space<vmem>>, vector<1x8x16x4xf32>
    %208 = vector.shape_cast %207 : vector<1x8x16x4xf32> to vector<8x16x4xf32>
    %209 = vector.shape_cast %206 : vector<8x16x4xf32> to vector<1x8x16x4xf32>
    tpu.vector_store %arg15[%c0_112, %c0_113, %c0_114, %c0_115], %209 {strides = array<i32>} : memref<1x8x16x8xf32, #tpu.memory_space<vmem>>, vector<1x8x16x4xf32>,
    %210 = vector.extract_strided_slice %203 {offsets = [0, 0, 4], sizes = [8, 16, 4], strides = [1, 1, 1]} : vector<8x16x8xf32> to vector<8x16x4xf32>
    %211 = arith.addf %202, %210 : vector<8x16x4xf32>
    %c0_116 = arith.constant 0 : index
    %c0_117 = arith.constant 0 : index
    %c0_118 = arith.constant 0 : index
    %c4 = arith.constant 4 : index
    %212 = vector.load %arg15[%c0_116, %c0_117, %c0_118, %c4] : memref<1x8x16x8xf32, #tpu.memory_space<vmem>>, vector<1x8x16x4xf32>
    %213 = vector.shape_cast %212 : vector<1x8x16x4xf32> to vector<8x16x4xf32>
    %214 = vector.shape_cast %211 : vector<8x16x4xf32> to vector<1x8x16x4xf32>
    tpu.vector_store %arg15[%c0_116, %c0_117, %c0_118, %c4], %214 {strides = array<i32>} : memref<1x8x16x8xf32, #tpu.memory_space<vmem>>, vector<1x8x16x4xf32>,
    return
  }
  func.func @transform_0(%arg0: i32, %arg1: i32) -> (i32, i32, i32, i32, i32) {
    %c0_i32 = arith.constant 0 : i32
    %c0_i32_0 = arith.constant 0 : i32
    %c0_i32_1 = arith.constant 0 : i32
    %c0_i32_2 = arith.constant 0 : i32
    return %arg0, %arg1, %c0_i32, %c0_i32_0, %c0_i32_1 : i32, i32, i32, i32, i32
  }
  func.func @transform_1(%arg0: i32, %arg1: i32) -> (i32, i32) {
    %c0_i32 = arith.constant 0 : i32
    %c0_i32_0 = arith.constant 0 : i32
    %c0_i32_1 = arith.constant 0 : i32
    return %c0_i32, %c0_i32_0 : i32, i32
  }
  func.func @transform_2(%arg0: i32, %arg1: i32) -> (i32, i32) {
    %c0_i32 = arith.constant 0 : i32
    %c0_i32_0 = arith.constant 0 : i32
    %c0_i32_1 = arith.constant 0 : i32
    return %c0_i32, %c0_i32_0 : i32, i32
  }
  func.func @transform_3(%arg0: i32, %arg1: i32) -> (i32, i32) {
    %c0_i32 = arith.constant 0 : i32
    %c0_i32_0 = arith.constant 0 : i32
    %c0_i32_1 = arith.constant 0 : i32
    return %c0_i32, %c0_i32_0 : i32, i32
  }
  func.func @transform_4(%arg0: i32, %arg1: i32) -> (i32, i32) {
    %c0_i32 = arith.constant 0 : i32
    %c0_i32_0 = arith.constant 0 : i32
    %c0_i32_1 = arith.constant 0 : i32
    return %c0_i32, %c0_i32_0 : i32, i32
  }
  func.func @transform_5(%arg0: i32, %arg1: i32) -> (i32, i32) {
    %c0_i32 = arith.constant 0 : i32
    %c0_i32_0 = arith.constant 0 : i32
    %c0_i32_1 = arith.constant 0 : i32
    return %c0_i32, %c0_i32_0 : i32, i32
  }
  func.func @transform_6(%arg0: i32, %arg1: i32) -> (i32, i32) {
    %c0_i32 = arith.constant 0 : i32
    %c0_i32_0 = arith.constant 0 : i32
    %c0_i32_1 = arith.constant 0 : i32
    return %c0_i32, %c0_i32_0 : i32, i32
  }
  func.func @transform_7(%arg0: i32, %arg1: i32) -> (i32, i32) {
    %c0_i32 = arith.constant 0 : i32
    %c0_i32_0 = arith.constant 0 : i32
    %c0_i32_1 = arith.constant 0 : i32
    return %c0_i32, %c0_i32_0 : i32, i32
  }
  func.func @transform_8(%arg0: i32, %arg1: i32) -> (i32, i32) {
    %c0_i32 = arith.constant 0 : i32
    %c0_i32_0 = arith.constant 0 : i32
    %c0_i32_1 = arith.constant 0 : i32
    return %c0_i32, %c0_i32_0 : i32, i32
  }
  func.func @transform_9(%arg0: i32, %arg1: i32) -> (i32, i32) {
    %c0_i32 = arith.constant 0 : i32
    %c0_i32_0 = arith.constant 0 : i32
    %c0_i32_1 = arith.constant 0 : i32
    return %c0_i32, %c0_i32_0 : i32, i32
  }
  func.func @transform_10(%arg0: i32, %arg1: i32) -> (i32, i32) {
    %c0_i32 = arith.constant 0 : i32
    %c0_i32_0 = arith.constant 0 : i32
    %c0_i32_1 = arith.constant 0 : i32
    return %c0_i32, %c0_i32_0 : i32, i32
  }
  func.func @transform_11(%arg0: i32, %arg1: i32) -> (i32, i32) {
    %c0_i32 = arith.constant 0 : i32
    %c0_i32_0 = arith.constant 0 : i32
    %c0_i32_1 = arith.constant 0 : i32
    return %c0_i32, %c0_i32_0 : i32, i32
  }
  func.func @transform_12(%arg0: i32, %arg1: i32) -> (i32, i32) {
    %c0_i32 = arith.constant 0 : i32
    %c0_i32_0 = arith.constant 0 : i32
    %c0_i32_1 = arith.constant 0 : i32
    return %c0_i32, %c0_i32_0 : i32, i32
  }
  func.func @transform_13(%arg0: i32, %arg1: i32) -> (i32, i32, i32, i32) {
    %c0_i32 = arith.constant 0 : i32
    %c0_i32_0 = arith.constant 0 : i32
    %c0_i32_1 = arith.constant 0 : i32
    return %arg0, %arg1, %c0_i32, %c0_i32_0 : i32, i32, i32, i32
  }
}

</mosaic_0001>

<llo_original>
// kernel: ghost_bottleneck.1
$region0: #{ghost_bottleneck.1}
  #allocation0 [shape = 'u32[]', space=smem, size = 0x4, offset = 0x4, fixed_abs, tag = 'smem constant byte address 0x4 - core index']
  #allocation1 [shape = 'u32[144,128]{1,0:T(1,128)}', space=vmem, size = 0x12000, scoped, tag = 'internal scratch']
  #allocation2 [shape = 'f32[12,18,8]{2,1,0:T(8,128)}', space=vmem, size = 0x24000, scoped, tag = 'scratch operand']
  #allocation3 [shape = 'f32[10,18,4]{2,1,0:T(8,128)}', space=vmem, size = 0x1e000, scoped, tag = 'scratch operand']
  %s0 = inlined_call_operand.vmem [shape: f32[2,2,12,16,8], index: 0, kind: input, shape index: {}]
  %s1 = inlined_call_operand.vmem [shape: f32[8,8], index: 1, kind: input, shape index: {}]
  %s2 = inlined_call_operand.vmem [shape: f32[1,8], index: 2, kind: input, shape index: {}]
  %s3 = inlined_call_operand.vmem [shape: f32[1,8], index: 3, kind: input, shape index: {}]
  %s4 = inlined_call_operand.vmem [shape: f32[9,8], index: 4, kind: input, shape index: {}]
  %s5 = inlined_call_operand.vmem [shape: f32[1,8], index: 5, kind: input, shape index: {}]
  %s6 = inlined_call_operand.vmem [shape: f32[1,8], index: 6, kind: input, shape index: {}]
  %s7 = inlined_call_operand.vmem [shape: f32[16,4], index: 7, kind: input, shape index: {}]
  %s8 = inlined_call_operand.vmem [shape: f32[1,4], index: 8, kind: input, shape index: {}]
  %s9 = inlined_call_operand.vmem [shape: f32[1,4], index: 9, kind: input, shape index: {}]
  %s10 = inlined_call_operand.vmem [shape: f32[9,4], index: 10, kind: input, shape index: {}]
  %s11 = inlined_call_operand.vmem [shape: f32[1,4], index: 11, kind: input, shape index: {}]
  %s12 = inlined_call_operand.vmem [shape: f32[1,4], index: 12, kind: input, shape index: {}]
  %s13 = inlined_call_operand.vmem [shape: f32[2,16,16,8], index: 13, kind: output, shape index: {}]
  %s14 = sld [smem:[#allocation0]]
  $region101: #{ghost_bottleneck.1} parent=0
    _
  %s16 = ssub.s32 1, %s14
  %s17 = scalar_select 0, %s16, %s14
  loop: start=0, step=1, limit=6
  $region2: #{ghost_bottleneck.1} parent=0 // loop_pre_header
    _
  $region3: #{ghost_bottleneck.1} parent=0 // loop_header
    %s19 = sphi 0, %s23
    %p20 = scmp.ge.s32.totalorder %s19, 6
    %s26 = sphi 0, %s38
    %s27 = sphi 0, %s34
    %s28 = sphi 0, %s26
    %s29 = sphi 0, %s27
    %s30 = sphi 0, %s28
    %s31 = sphi 0, %s29
    %s43 = sphi 0, %s45
    %s46 = sphi 0, %s43
    %s47 = sphi 0, %s46
    %s63 = sphi 0, %s47
    %s67 = sphi 0, %s67
    %s69 = sphi 0, %s67
    %s70 = sphi 0, %s69
    %s84 = sphi 0, %s70
    %s88 = sphi 0, %s88
    %s90 = sphi 0, %s88
    %s91 = sphi 0, %s90
    %s105 = sphi 0, %s91
    %s109 = sphi 0, %s109
    %s111 = sphi 0, %s109
    %s112 = sphi 0, %s111
    %s126 = sphi 0, %s112
    %s130 = sphi 0, %s130
    %s132 = sphi 0, %s130
    %s133 = sphi 0, %s132
    %s147 = sphi 0, %s133
    %s151 = sphi 0, %s151
    %s153 = sphi 0, %s151
    %s154 = sphi 0, %s153
    %s168 = sphi 0, %s154
    %s172 = sphi 0, %s172
    %s174 = sphi 0, %s172
    %s175 = sphi 0, %s174
    %s189 = sphi 0, %s175
    %s193 = sphi 0, %s193
    %s195 = sphi 0, %s193
    %s196 = sphi 0, %s195
    %s210 = sphi 0, %s196
    %s214 = sphi 0, %s214
    %s216 = sphi 0, %s214
    %s217 = sphi 0, %s216
    %s231 = sphi 0, %s217
    %s235 = sphi 0, %s235
    %s237 = sphi 0, %s235
    %s238 = sphi 0, %s237
    %s252 = sphi 0, %s238
    %s256 = sphi 0, %s256
    %s258 = sphi 0, %s256
    %s259 = sphi 0, %s258
    %s273 = sphi 0, %s259
    %s277 = sphi 0, %s277
    %s279 = sphi 0, %s277
    %s280 = sphi 0, %s279
    %s294 = sphi 0, %s280
    %s298 = sphi 0, %s298
    %s300 = sphi 0, %s298
    %s301 = sphi 0, %s300
    %s315 = sphi 0, %s301
    %s323 = sphi 0, %s325
    %s326 = sphi 0, %s323
    %s327 = sphi 0, %s326
    %s343 = sphi 0, %s327
  $region4: #{ghost_bottleneck.1} parent=0 // loop_header_branch
    %22 = sbr.rel (%p20) target = $region8
  $region5: #{ghost_bottleneck.1} parent=0 // loop_body
    %s24 = ssub.s32 %s19, 1
    %s25 = ssub.s32 %s19, 2
    %s32 = sadd.s32 1, %s27
    %p33 = scmp.ge.s32.totalorder %s32, 2
    %s34 = scalar_select %p33, 0, %s32
    %s35 = sadd.s32 1, %s26
    %s36 = scalar_select %p33, %s35, %s26
    %p37 = scmp.ge.s32.totalorder %s36, 2
    %s38 = scalar_select %p37, 0, %s36
    %s39 = ssub.s32 %s26, %s38
    %s40 = ssub.s32 %s27, %s34
    %s41 = sor.u32 %s39, %s40
    %p42 = scmp.eq.s32.totalorder %s41, 0
    %s44 = sadd.s32 %s43, 1
    %s45 = scalar_select %p42, %s43, %s44
    %p48 = pneg %p42
    %p49 = scmp.eq.s32.totalorder %s19, 3
    %p50 = por %p48, %p49
    %p51 = scmp.ne.s32.totalorder %s43, %s46
    %p52 = scmp.eq.s32.totalorder %s19, 0
    %p53 = por %p51, %p52
    %p54 = scmp.ne.s32.totalorder %s43, %s46
    %p55 = scmp.eq.s32.totalorder %s24, 3
    %p56 = por %p54, %p55
    %p57 = scmp.ne.s32.totalorder %s46, %s47
    %p58 = scmp.eq.s32.totalorder %s24, 0
    %p59 = por %p57, %p58
    %p60 = scmp.ne.s32.totalorder %s46, %s47
    %p61 = scmp.eq.s32.totalorder %s25, 3
    %p62 = por %p60, %p61
    %p64 = scmp.ne.s32.totalorder %s47, %s63
    %p65 = scmp.eq.s32.totalorder %s25, 0
    %p66 = por %p64, %p65
    %s68 = sadd.s32 %s67, 1
    %p71 = scmp.eq.s32.totalorder %s19, 3
    %p72 = scmp.ne.s32.totalorder %s67, %s69
    %p73 = scmp.eq.s32.totalorder %s19, 0
    %p74 = por %p72, %p73
    %p75 = scmp.ne.s32.totalorder %s67, %s69
    %p76 = scmp.eq.s32.totalorder %s24, 3
    %p77 = por %p75, %p76
    %p78 = scmp.ne.s32.totalorder %s69, %s70
    %p79 = scmp.eq.s32.totalorder %s24, 0
    %p80 = por %p78, %p79
    %p81 = scmp.ne.s32.totalorder %s69, %s70
    %p82 = scmp.eq.s32.totalorder %s25, 3
    %p83 = por %p81, %p82
    %p85 = scmp.ne.s32.totalorder %s70, %s84
    %p86 = scmp.eq.s32.totalorder %s25, 0
    %p87 = por %p85, %p86
    %s89 = sadd.s32 %s88, 1
    %p92 = scmp.eq.s32.totalorder %s19, 3
    %p93 = scmp.ne.s32.totalorder %s88, %s90
    %p94 = scmp.eq.s32.totalorder %s19, 0
    %p95 = por %p93, %p94
    %p96 = scmp.ne.s32.totalorder %s88, %s90
    %p97 = scmp.eq.s32.totalorder %s24, 3
    %p98 = por %p96, %p97
    %p99 = scmp.ne.s32.totalorder %s90, %s91
    %p100 = scmp.eq.s32.totalorder %s24, 0
    %p101 = por %p99, %p100
    %p102 = scmp.ne.s32.totalorder %s90, %s91
    %p103 = scmp.eq.s32.totalorder %s25, 3
    %p104 = por %p102, %p103
    %p106 = scmp.ne.s32.totalorder %s91, %s105
    %p107 = scmp.eq.s32.totalorder %s25, 0
    %p108 = por %p106, %p107
    %s110 = sadd.s32 %s109, 1
    %p113 = scmp.eq.s32.totalorder %s19, 3
    %p114 = scmp.ne.s32.totalorder %s109, %s111
    %p115 = scmp.eq.s32.totalorder %s19, 0
    %p116 = por %p114, %p115
    %p117 = scmp.ne.s32.totalorder %s109, %s111
    %p118 = scmp.eq.s32.totalorder %s24, 3
    %p119 = por %p117, %p118
    %p120 = scmp.ne.s32.totalorder %s111, %s112
    %p121 = scmp.eq.s32.totalorder %s24, 0
    %p122 = por %p120, %p121
    %p123 = scmp.ne.s32.totalorder %s111, %s112
    %p124 = scmp.eq.s32.totalorder %s25, 3
    %p125 = por %p123, %p124
    %p127 = scmp.ne.s32.totalorder %s112, %s126
    %p128 = scmp.eq.s32.totalorder %s25, 0
    %p129 = por %p127, %p128
    %s131 = sadd.s32 %s130, 1
    %p134 = scmp.eq.s32.totalorder %s19, 3
    %p135 = scmp.ne.s32.totalorder %s130, %s132
    %p136 = scmp.eq.s32.totalorder %s19, 0
    %p137 = por %p135, %p136
    %p138 = scmp.ne.s32.totalorder %s130, %s132
    %p139 = scmp.eq.s32.totalorder %s24, 3
    %p140 = por %p138, %p139
    %p141 = scmp.ne.s32.totalorder %s132, %s133
    %p142 = scmp.eq.s32.totalorder %s24, 0
    %p143 = por %p141, %p142
    %p144 = scmp.ne.s32.totalorder %s132, %s133
    %p145 = scmp.eq.s32.totalorder %s25, 3
    %p146 = por %p144, %p145
    %p148 = scmp.ne.s32.totalorder %s133, %s147
    %p149 = scmp.eq.s32.totalorder %s25, 0
    %p150 = por %p148, %p149
    %s152 = sadd.s32 %s151, 1
    %p155 = scmp.eq.s32.totalorder %s19, 3
    %p156 = scmp.ne.s32.totalorder %s151, %s153
    %p157 = scmp.eq.s32.totalorder %s19, 0
    %p158 = por %p156, %p157
    %p159 = scmp.ne.s32.totalorder %s151, %s153
    %p160 = scmp.eq.s32.totalorder %s24, 3
    %p161 = por %p159, %p160
    %p162 = scmp.ne.s32.totalorder %s153, %s154
    %p163 = scmp.eq.s32.totalorder %s24, 0
    %p164 = por %p162, %p163
    %p165 = scmp.ne.s32.totalorder %s153, %s154
    %p166 = scmp.eq.s32.totalorder %s25, 3
    %p167 = por %p165, %p166
    %p169 = scmp.ne.s32.totalorder %s154, %s168
    %p170 = scmp.eq.s32.totalorder %s25, 0
    %p171 = por %p169, %p170
    %s173 = sadd.s32 %s172, 1
    %p176 = scmp.eq.s32.totalorder %s19, 3
    %p177 = scmp.ne.s32.totalorder %s172, %s174
    %p178 = scmp.eq.s32.totalorder %s19, 0
    %p179 = por %p177, %p178
    %p180 = scmp.ne.s32.totalorder %s172, %s174
    %p181 = scmp.eq.s32.totalorder %s24, 3
    %p182 = por %p180, %p181
    %p183 = scmp.ne.s32.totalorder %s174, %s175
    %p184 = scmp.eq.s32.totalorder %s24, 0
    %p185 = por %p183, %p184
    %p186 = scmp.ne.s32.totalorder %s174, %s175
    %p187 = scmp.eq.s32.totalorder %s25, 3
    %p188 = por %p186, %p187
    %p190 = scmp.ne.s32.totalorder %s175, %s189
    %p191 = scmp.eq.s32.totalorder %s25, 0
    %p192 = por %p190, %p191
    %s194 = sadd.s32 %s193, 1
    %p197 = scmp.eq.s32.totalorder %s19, 3
    %p198 = scmp.ne.s32.totalorder %s193, %s195
    %p199 = scmp.eq.s32.totalorder %s19, 0
    %p200 = por %p198, %p199
    %p201 = scmp.ne.s32.totalorder %s193, %s195
    %p202 = scmp.eq.s32.totalorder %s24, 3
    %p203 = por %p201, %p202
    %p204 = scmp.ne.s32.totalorder %s195, %s196
    %p205 = scmp.eq.s32.totalorder %s24, 0
    %p206 = por %p204, %p205
    %p207 = scmp.ne.s32.totalorder %s195, %s196
    %p208 = scmp.eq.s32.totalorder %s25, 3
    %p209 = por %p207, %p208
    %p211 = scmp.ne.s32.totalorder %s196, %s210
    %p212 = scmp.eq.s32.totalorder %s25, 0
    %p213 = por %p211, %p212
    %s215 = sadd.s32 %s214, 1
    %p218 = scmp.eq.s32.totalorder %s19, 3
    %p219 = scmp.ne.s32.totalorder %s214, %s216
    %p220 = scmp.eq.s32.totalorder %s19, 0
    %p221 = por %p219, %p220
    %p222 = scmp.ne.s32.totalorder %s214, %s216
    %p223 = scmp.eq.s32.totalorder %s24, 3
    %p224 = por %p222, %p223
    %p225 = scmp.ne.s32.totalorder %s216, %s217
    %p226 = scmp.eq.s32.totalorder %s24, 0
    %p227 = por %p225, %p226
    %p228 = scmp.ne.s32.totalorder %s216, %s217
    %p229 = scmp.eq.s32.totalorder %s25, 3
    %p230 = por %p228, %p229
    %p232 = scmp.ne.s32.totalorder %s217, %s231
    %p233 = scmp.eq.s32.totalorder %s25, 0
    %p234 = por %p232, %p233
    %s236 = sadd.s32 %s235, 1
    %p239 = scmp.eq.s32.totalorder %s19, 3
    %p240 = scmp.ne.s32.totalorder %s235, %s237
    %p241 = scmp.eq.s32.totalorder %s19, 0
    %p242 = por %p240, %p241
    %p243 = scmp.ne.s32.totalorder %s235, %s237
    %p244 = scmp.eq.s32.totalorder %s24, 3
    %p245 = por %p243, %p244
    %p246 = scmp.ne.s32.totalorder %s237, %s238
    %p247 = scmp.eq.s32.totalorder %s24, 0
    %p248 = por %p246, %p247
    %p249 = scmp.ne.s32.totalorder %s237, %s238
    %p250 = scmp.eq.s32.totalorder %s25, 3
    %p251 = por %p249, %p250
    %p253 = scmp.ne.s32.totalorder %s238, %s252
    %p254 = scmp.eq.s32.totalorder %s25, 0
    %p255 = por %p253, %p254
    %s257 = sadd.s32 %s256, 1
    %p260 = scmp.eq.s32.totalorder %s19, 3
    %p261 = scmp.ne.s32.totalorder %s256, %s258
    %p262 = scmp.eq.s32.totalorder %s19, 0
    %p263 = por %p261, %p262
    %p264 = scmp.ne.s32.totalorder %s256, %s258
    %p265 = scmp.eq.s32.totalorder %s24, 3
    %p266 = por %p264, %p265
    %p267 = scmp.ne.s32.totalorder %s258, %s259
    %p268 = scmp.eq.s32.totalorder %s24, 0
    %p269 = por %p267, %p268
    %p270 = scmp.ne.s32.totalorder %s258, %s259
    %p271 = scmp.eq.s32.totalorder %s25, 3
    %p272 = por %p270, %p271
    %p274 = scmp.ne.s32.totalorder %s259, %s273
    %p275 = scmp.eq.s32.totalorder %s25, 0
    %p276 = por %p274, %p275
    %s278 = sadd.s32 %s277, 1
    %p281 = scmp.eq.s32.totalorder %s19, 3
    %p282 = scmp.ne.s32.totalorder %s277, %s279
    %p283 = scmp.eq.s32.totalorder %s19, 0
    %p284 = por %p282, %p283
    %p285 = scmp.ne.s32.totalorder %s277, %s279
    %p286 = scmp.eq.s32.totalorder %s24, 3
    %p287 = por %p285, %p286
    %p288 = scmp.ne.s32.totalorder %s279, %s280
    %p289 = scmp.eq.s32.totalorder %s24, 0
    %p290 = por %p288, %p289
    %p291 = scmp.ne.s32.totalorder %s279, %s280
    %p292 = scmp.eq.s32.totalorder %s25, 3
    %p293 = por %p291, %p292
    %p295 = scmp.ne.s32.totalorder %s280, %s294
    %p296 = scmp.eq.s32.totalorder %s25, 0
    %p297 = por %p295, %p296
    %s299 = sadd.s32 %s298, 1
    %p302 = scmp.eq.s32.totalorder %s19, 3
    %p303 = scmp.ne.s32.totalorder %s298, %s300
    %p304 = scmp.eq.s32.totalorder %s19, 0
    %p305 = por %p303, %p304
    %p306 = scmp.ne.s32.totalorder %s298, %s300
    %p307 = scmp.eq.s32.totalorder %s24, 3
    %p308 = por %p306, %p307
    %p309 = scmp.ne.s32.totalorder %s300, %s301
    %p310 = scmp.eq.s32.totalorder %s24, 0
    %p311 = por %p309, %p310
    %p312 = scmp.ne.s32.totalorder %s300, %s301
    %p313 = scmp.eq.s32.totalorder %s25, 3
    %p314 = por %p312, %p313
    %p316 = scmp.ne.s32.totalorder %s301, %s315
    %p317 = scmp.eq.s32.totalorder %s25, 0
    %p318 = por %p316, %p317
    %s319 = ssub.s32 %s26, %s38
    %s320 = ssub.s32 %s27, %s34
    %s321 = sor.u32 %s319, %s320
    %p322 = scmp.eq.s32.totalorder %s321, 0
    %s324 = sadd.s32 %s323, 1
    %s325 = scalar_select %p322, %s323, %s324
    %p328 = pneg %p322
    %p329 = scmp.eq.s32.totalorder %s19, 3
    %p330 = por %p328, %p329
    %p331 = scmp.ne.s32.totalorder %s323, %s326
    %p332 = scmp.eq.s32.totalorder %s19, 0
    %p333 = por %p331, %p332
    %p334 = scmp.ne.s32.totalorder %s323, %s326
    %p335 = scmp.eq.s32.totalorder %s24, 3
    %p336 = por %p334, %p335
    %p337 = scmp.ne.s32.totalorder %s326, %s327
    %p338 = scmp.eq.s32.totalorder %s24, 0
    %p339 = por %p337, %p338
    %p340 = scmp.ne.s32.totalorder %s326, %s327
    %p341 = scmp.eq.s32.totalorder %s25, 3
    %p342 = por %p340, %p341
    %p344 = scmp.ne.s32.totalorder %s327, %s343
    %p345 = scmp.eq.s32.totalorder %s25, 0
    %p346 = por %p344, %p345
    %p347 = scmp.le.s32.totalorder 1, %s19
    %p348 = scmp.lt.s32.totalorder %s19, 5
    %p349 = pnand %p347, %p348
    %p350 = pneg %p349
    // Predicated region
    $region9: #{ghost_bottleneck.1} parent=5 // pred_check
      _
    $region10: #{ghost_bottleneck.1} parent=5 // pred_check_branch
      %352 = sbr.rel (%p349) target = $region12
    $region11: #{ghost_bottleneck.1} parent=5 // pred_region
      %s353 = ssub.s32 %s19, 1
      // Predicated region
      $region13: #{ghost_bottleneck.1} parent=11 // pred_check
        %p354 = pneg %p80
      $region14: #{ghost_bottleneck.1} parent=11 // pred_check_branch
        %356 = sbr.rel (%p354) target = $region16
      $region15: #{ghost_bottleneck.1} parent=11 // pred_region
        _
      $region16: #{ghost_bottleneck.1} parent=11 // pred_fallthru
        _
      // Predicated region
      $region17: #{ghost_bottleneck.1} parent=11 // pred_check
        %p357 = pneg %p101
      $region18: #{ghost_bottleneck.1} parent=11 // pred_check_branch
        %359 = sbr.rel (%p357) target = $region20
      $region19: #{ghost_bottleneck.1} parent=11 // pred_region
        _
      $region20: #{ghost_bottleneck.1} parent=11 // pred_fallthru
        _
      // Predicated region
      $region21: #{ghost_bottleneck.1} parent=11 // pred_check
        %p360 = pneg %p122
      $region22: #{ghost_bottleneck.1} parent=11 // pred_check_branch
        %362 = sbr.rel (%p360) target = $region24
      $region23: #{ghost_bottleneck.1} parent=11 // pred_region
        _
      $region24: #{ghost_bottleneck.1} parent=11 // pred_fallthru
        _
      // Predicated region
      $region25: #{ghost_bottleneck.1} parent=11 // pred_check
        %p363 = pneg %p143
      $region26: #{ghost_bottleneck.1} parent=11 // pred_check_branch
        %365 = sbr.rel (%p363) target = $region28
      $region27: #{ghost_bottleneck.1} parent=11 // pred_region
        _
      $region28: #{ghost_bottleneck.1} parent=11 // pred_fallthru
        _
      // Predicated region
      $region29: #{ghost_bottleneck.1} parent=11 // pred_check
        %p366 = pneg %p164
      $region30: #{ghost_bottleneck.1} parent=11 // pred_check_branch
        %368 = sbr.rel (%p366) target = $region32
      $region31: #{ghost_bottleneck.1} parent=11 // pred_region
        _
      $region32: #{ghost_bottleneck.1} parent=11 // pred_fallthru
        _
      // Predicated region
      $region33: #{ghost_bottleneck.1} parent=11 // pred_check
        %p369 = pneg %p185
      $region34: #{ghost_bottleneck.1} parent=11 // pred_check_branch
        %371 = sbr.rel (%p369) target = $region36
      $region35: #{ghost_bottleneck.1} parent=11 // pred_region
        _
      $region36: #{ghost_bottleneck.1} parent=11 // pred_fallthru
        _
      // Predicated region
      $region37: #{ghost_bottleneck.1} parent=11 // pred_check
        %p372 = pneg %p206
      $region38: #{ghost_bottleneck.1} parent=11 // pred_check_branch
        %374 = sbr.rel (%p372) target = $region40
      $region39: #{ghost_bottleneck.1} parent=11 // pred_region
        _
      $region40: #{ghost_bottleneck.1} parent=11 // pred_fallthru
        _
      // Predicated region
      $region41: #{ghost_bottleneck.1} parent=11 // pred_check
        %p375 = pneg %p227
      $region42: #{ghost_bottleneck.1} parent=11 // pred_check_branch
        %377 = sbr.rel (%p375) target = $region44
      $region43: #{ghost_bottleneck.1} parent=11 // pred_region
        _
      $region44: #{ghost_bottleneck.1} parent=11 // pred_fallthru
        _
      // Predicated region
      $region45: #{ghost_bottleneck.1} parent=11 // pred_check
        %p378 = pneg %p248
      $region46: #{ghost_bottleneck.1} parent=11 // pred_check_branch
        %380 = sbr.rel (%p378) target = $region48
      $region47: #{ghost_bottleneck.1} parent=11 // pred_region
        _
      $region48: #{ghost_bottleneck.1} parent=11 // pred_fallthru
        _
      // Predicated region
      $region49: #{ghost_bottleneck.1} parent=11 // pred_check
        %p381 = pneg %p269
      $region50: #{ghost_bottleneck.1} parent=11 // pred_check_branch
        %383 = sbr.rel (%p381) target = $region52
      $region51: #{ghost_bottleneck.1} parent=11 // pred_region
        _
      $region52: #{ghost_bottleneck.1} parent=11 // pred_fallthru
        _
      // Predicated region
      $region53: #{ghost_bottleneck.1} parent=11 // pred_check
        %p384 = pneg %p290
      $region54: #{ghost_bottleneck.1} parent=11 // pred_check_branch
        %386 = sbr.rel (%p384) target = $region56
      $region55: #{ghost_bottleneck.1} parent=11 // pred_region
        _
      $region56: #{ghost_bottleneck.1} parent=11 // pred_fallthru
        _
      // Predicated region
      $region57: #{ghost_bottleneck.1} parent=11 // pred_check
        %p387 = pneg %p311
      $region58: #{ghost_bottleneck.1} parent=11 // pred_check_branch
        %389 = sbr.rel (%p387) target = $region60
      $region59: #{ghost_bottleneck.1} parent=11 // pred_region
        _
      $region60: #{ghost_bottleneck.1} parent=11 // pred_fallthru
        _
    $region12: #{ghost_bottleneck.1} parent=5 // pred_fallthru
      _
    %p390 = scmp.lt.s32.totalorder %s19, 4
    // Predicated region
    $region61: #{ghost_bottleneck.1} parent=5 // pred_check
      %p391 = pneg %p390
    $region62: #{ghost_bottleneck.1} parent=5 // pred_check_branch
      %393 = sbr.rel (%p391) target = $region64
    $region63: #{ghost_bottleneck.1} parent=5 // pred_region
      // Predicated region
      $region65: #{ghost_bottleneck.1} parent=63 // pred_check
        %p394 = pneg %p53
      $region66: #{ghost_bottleneck.1} parent=63 // pred_check_branch
        %396 = sbr.rel (%p394) target = $region68
      $region67: #{ghost_bottleneck.1} parent=63 // pred_region
        %p397 = scmp.lt.s32.totalorder %s26, 1
        %s398 = scalar_select %p397, %s26, 1
        %p399 = scmp.lt.s32.totalorder %s27, 1
        %s400 = scalar_select %p399, %s27, 1
        %s401 = smul.addr %s400, 24
        %s402 = smul.addr %s398, 48
        %s403 = sadd.s32 %s401, %s402
        %s404 = smul.addr %s403, 8
        %s405 = scalar_lea.vmem %s0, %s404
      $region68: #{ghost_bottleneck.1} parent=63 // pred_fallthru
        _
    $region64: #{ghost_bottleneck.1} parent=5 // pred_fallthru
      _
    %p406 = scmp.le.s32.totalorder 1, %s19
    %p407 = scmp.lt.s32.totalorder %s19, 5
    %p408 = pnand %p406, %p407
    %p409 = pneg %p408
    // Predicated region
    $region69: #{ghost_bottleneck.1} parent=5 // pred_check
      _
    $region70: #{ghost_bottleneck.1} parent=5 // pred_check_branch
      %411 = sbr.rel (%p408) target = $region72
    $region71: #{ghost_bottleneck.1} parent=5 // pred_region
      %s412 = ssub.s32 %s19, 1
      %p413 = scmp.lt.s32.totalorder %s28, 1
      %s414 = scalar_select %p413, %s28, 1
      %p415 = scmp.lt.s32.totalorder %s29, 1
      %s416 = scalar_select %p415, %s29, 1
      %s417 = smul.addr %s416, 24
      %s418 = smul.addr %s414, 48
      %s419 = sadd.s32 %s417, %s418
      %s420 = smul.addr %s419, 8
      %s421 = scalar_lea.vmem %s0, %s420
      %p422 = pneg %p59
      %p423 = pneg %p56
      %p424 = pneg %p80
      %p425 = pneg %p77
      %p426 = pneg %p101
      %p427 = pneg %p98
      %p428 = pneg %p122
      %p429 = pneg %p119
      %p430 = pneg %p143
      %p431 = pneg %p140
      %p432 = pneg %p164
      %p433 = pneg %p161
      %p434 = pneg %p185
      %p435 = pneg %p182
      %p436 = pneg %p206
      %p437 = pneg %p203
      %p438 = pneg %p227
      %p439 = pneg %p224
      %p440 = pneg %p248
      %p441 = pneg %p245
      %p442 = pneg %p269
      %p443 = pneg %p266
      %p444 = pneg %p290
      %p445 = pneg %p287
      %p446 = pneg %p311
      %p447 = pneg %p308
      %p448 = pneg %p339
      %p449 = pneg %p336
      %s450 = smul.u32 8, %s29
      %p451 = scmp.lt.s32.totalorder %s28, 1
      %s452 = scalar_select %p451, %s28, 1
      %p453 = scmp.lt.s32.totalorder %s450, 15
      %s454 = scalar_select %p453, %s450, 15
      %s455 = smul.addr %s454, 2
      %s456 = smul.addr %s452, 32
      %s457 = sadd.s32 %s455, %s456
      %s458 = smul.addr %s457, 8
      %s459 = scalar_lea.vmem %s13, %s458
      %p460 = scmp.lt.s32.totalorder %s28, 1
      %s461 = scalar_select %p460, %s28, 1
      %p462 = scmp.lt.s32.totalorder %s29, 1
      %s463 = scalar_select %p462, %s29, 1
      %s464 = smul.addr %s463, 24
      %s465 = smul.addr %s461, 48
      %s466 = sadd.s32 %s464, %s465
      %s467 = smul.addr %s466, 8
      %s468 = scalar_lea.vmem %s0, %s467
      %s469 = smul.u32 8, %s29
      %p470 = scmp.lt.s32.totalorder %s28, 1
      %s471 = scalar_select %p470, %s28, 1
      %p472 = scmp.lt.s32.totalorder %s469, 15
      %s473 = scalar_select %p472, %s469, 15
      %s474 = smul.addr %s473, 2
      %s475 = smul.addr %s471, 32
      %s476 = sadd.s32 %s474, %s475
      %s477 = smul.addr %s476, 8
      %s478 = scalar_lea.vmem %s13, %s477
      %s479 = smul.u32 8, %s29
      %v480 = vld [vmem:[%s468] sm:$0xff]
      %v481 = vld [vmem:[%s468 + $0x8] sm:$0xff]
      %v482 = vld [vmem:[%s468 + $0x10] sm:$0xff]
      %v483 = vld [vmem:[%s468 + $0x18] sm:$0xff]
      %v484 = vld [vmem:[%s468 + $0x20] sm:$0xff]
      %v485 = vld [vmem:[%s468 + $0x28] sm:$0xff]
      %v486 = vld [vmem:[%s468 + $0x30] sm:$0xff]
      %v487 = vld [vmem:[%s468 + $0x38] sm:$0xff]
      %v488 = vld [vmem:[%s468 + $0x40] sm:$0xff]
      %v489 = vld [vmem:[%s468 + $0x48] sm:$0xff]
      %v490 = vld [vmem:[%s468 + $0x50] sm:$0xff]
      %v491 = vld [vmem:[%s468 + $0x58] sm:$0xff]
      %v492 = vld [vmem:[%s468 + $0x60] sm:$0xff]
      %v493 = vld [vmem:[%s468 + $0x68] sm:$0xff]
      %v494 = vld [vmem:[%s468 + $0x70] sm:$0xff]
      %v495 = vld [vmem:[%s468 + $0x78] sm:$0xff]
      %v496 = vld [vmem:[%s468 + $0x80] sm:$0xff]
      %v497 = vld [vmem:[%s468 + $0x88] sm:$0xff]
      %v498 = vld [vmem:[%s468 + $0x90] sm:$0xff]
      %v499 = vld [vmem:[%s468 + $0x98] sm:$0xff]
      %v500 = vld [vmem:[%s468 + $0xa0] sm:$0xff]
      %v501 = vld [vmem:[%s468 + $0xa8] sm:$0xff]
      %v502 = vld [vmem:[%s468 + $0xb0] sm:$0xff]
      %v503 = vld [vmem:[%s468 + $0xb8] sm:$0xff]
      %v504 = vld [vmem:[%s1] sm:$0xff]
      %vm505 = vcmask 64512
      %v507 = vsel %vm505, %v480, 0
      %v510 = vsel %vm505, %v481, 0
      %v513 = vsel %vm505, %v482, 0
      %v516 = vsel %vm505, %v483, 0
      %v519 = vsel %vm505, %v484, 0
      %v522 = vsel %vm505, %v485, 0
      %v525 = vsel %vm505, %v486, 0
      %v528 = vsel %vm505, %v487, 0
      %v531 = vsel %vm505, %v488, 0
      %v534 = vsel %vm505, %v489, 0
      %v537 = vsel %vm505, %v490, 0
      %v540 = vsel %vm505, %v491, 0
      %v543 = vsel %vm505, %v492, 0
      %v546 = vsel %vm505, %v493, 0
      %v549 = vsel %vm505, %v494, 0
      %v552 = vsel %vm505, %v495, 0
      %v555 = vsel %vm505, %v496, 0
      %v558 = vsel %vm505, %v497, 0
      %v561 = vsel %vm505, %v498, 0
      %v564 = vsel %vm505, %v499, 0
      %v567 = vsel %vm505, %v500, 0
      %v570 = vsel %vm505, %v501, 0
      %v573 = vsel %vm505, %v502, 0
      %v576 = vsel %vm505, %v503, 0
      %578 = vmatprep.subr.mxu0 0.0
      %579 = vmatpush1.msra.mxu0 0.0
      %580 = vmatprep.subr.mxu0 0.0
      %581 = vmatpush1.msra.mxu0 0.0
      %582 = vmatprep.subr.mxu0 0.0
      %583 = vmatpush1.msra.mxu0 0.0
      %584 = vmatprep.subr.mxu0 0.0
      %585 = vmatpush1.msra.mxu0 0.0
      %586 = vmatprep.subr.mxu0 0.0
      %587 = vmatpush1.msra.mxu0 0.0
      %588 = vmatprep.subr.mxu0 0.0
      %589 = vmatpush1.msra.mxu0 0.0
      %590 = vmatprep.subr.mxu0 0.0
      %591 = vmatpush1.msra.mxu0 0.0
      %592 = vmatprep.subr.mxu0 0.0
      %593 = vmatpush1.msra.mxu0 0.0
      %594 = vmatprep.subr.mxu0 0.0
      %595 = vmatpush1.msra.mxu0 0.0
      %596 = vmatprep.subr.mxu0 0.0
      %597 = vmatpush1.msra.mxu0 0.0
      %598 = vmatprep.subr.mxu0 0.0
      %599 = vmatpush1.msra.mxu0 0.0
      %600 = vmatprep.subr.mxu0 0.0
      %601 = vmatpush1.msra.mxu0 0.0
      %602 = vmatprep.subr.mxu0 0.0
      %603 = vmatpush1.msra.mxu0 0.0
      %604 = vmatprep.subr.mxu0 0.0
      %605 = vmatpush1.msra.mxu0 0.0
      %606 = vmatprep.subr.mxu0 0.0
      %607 = vmatpush1.msra.mxu0 0.0
      %608 = vmatprep.subr.mxu0 0.0
      %609 = vmatpush1.msra.mxu0 %v504
      %610 = vmatprep.subr.mxu0 0.0
      %611 = vmatpush2.msra.mxu0 0.0
      %612 = vmatprep.subr.mxu0 0.0
      %613 = vmatpush2.msra.mxu0 0.0
      %614 = vmatprep.subr.mxu0 0.0
      %615 = vmatpush2.msra.mxu0 0.0
      %616 = vmatprep.subr.mxu0 0.0
      %617 = vmatpush2.msra.mxu0 0.0
      %618 = vmatprep.subr.mxu0 0.0
      %619 = vmatpush2.msra.mxu0 0.0
      %620 = vmatprep.subr.mxu0 0.0
      %621 = vmatpush2.msra.mxu0 0.0
      %622 = vmatprep.subr.mxu0 0.0
      %623 = vmatpush2.msra.mxu0 0.0
      %624 = vmatprep.subr.mxu0 0.0
      %625 = vmatpush2.msra.mxu0 0.0
      %626 = vmatprep.subr.mxu0 0.0
      %627 = vmatpush2.msra.mxu0 0.0
      %628 = vmatprep.subr.mxu0 0.0
      %629 = vmatpush2.msra.mxu0 0.0
      %630 = vmatprep.subr.mxu0 0.0
      %631 = vmatpush2.msra.mxu0 0.0
      %632 = vmatprep.subr.mxu0 0.0
      %633 = vmatpush2.msra.mxu0 0.0
      %634 = vmatprep.subr.mxu0 0.0
      %635 = vmatpush2.msra.mxu0 0.0
      %636 = vmatprep.subr.mxu0 0.0
      %637 = vmatpush2.msra.mxu0 0.0
      %638 = vmatprep.subr.mxu0 0.0
      %639 = vmatpush2.msra.mxu0 0.0
      %640 = vmatprep.subr.mxu0 0.0
      %641 = vmatpush2.msra.mxu0 0.0
      %642 = vmatprep.mubr.f32.mxu0 0.0
      %643 = vmatmul.mubr.f32.gmra.mxu0 %v507
      %v644 = vpop.f32.mrf.mxu0
      %v645 = vadd.f32 0.0, %v644
      %v646 = vpop.f32.mrf.mxu0
      %647 = vmatprep.mubr.f32.mxu0 0.0
      %648 = vmatmul.mubr.f32.gmra.mxu0 %v510
      %v649 = vpop.f32.mrf.mxu0
      %v650 = vadd.f32 0.0, %v649
      %v651 = vpop.f32.mrf.mxu0
      %652 = vmatprep.mubr.f32.mxu0 0.0
      %653 = vmatmul.mubr.f32.gmra.mxu0 %v513
      %v654 = vpop.f32.mrf.mxu0
      %v655 = vadd.f32 0.0, %v654
      %v656 = vpop.f32.mrf.mxu0
      %657 = vmatprep.mubr.f32.mxu0 0.0
      %658 = vmatmul.mubr.f32.gmra.mxu0 %v516
      %v659 = vpop.f32.mrf.mxu0
      %v660 = vadd.f32 0.0, %v659
      %v661 = vpop.f32.mrf.mxu0
      %662 = vmatprep.mubr.f32.mxu0 0.0
      %663 = vmatmul.mubr.f32.gmra.mxu0 %v519
      %v664 = vpop.f32.mrf.mxu0
      %v665 = vadd.f32 0.0, %v664
      %v666 = vpop.f32.mrf.mxu0
      %667 = vmatprep.mubr.f32.mxu0 0.0
      %668 = vmatmul.mubr.f32.gmra.mxu0 %v522
      %v669 = vpop.f32.mrf.mxu0
      %v670 = vadd.f32 0.0, %v669
      %v671 = vpop.f32.mrf.mxu0
      %672 = vmatprep.mubr.f32.mxu0 0.0
      %673 = vmatmul.mubr.f32.gmra.mxu0 %v525
      %v674 = vpop.f32.mrf.mxu0
      %v675 = vadd.f32 0.0, %v674
      %v676 = vpop.f32.mrf.mxu0
      %677 = vmatprep.mubr.f32.mxu0 0.0
      %678 = vmatmul.mubr.f32.gmra.mxu0 %v528
      %v679 = vpop.f32.mrf.mxu0
      %v680 = vadd.f32 0.0, %v679
      %v681 = vpop.f32.mrf.mxu0
      %682 = vmatprep.mubr.f32.mxu0 0.0
      %683 = vmatmul.mubr.f32.gmra.mxu0 %v531
      %v684 = vpop.f32.mrf.mxu0
      %v685 = vadd.f32 0.0, %v684
      %v686 = vpop.f32.mrf.mxu0
      %687 = vmatprep.mubr.f32.mxu0 0.0
      %688 = vmatmul.mubr.f32.gmra.mxu0 %v534
      %v689 = vpop.f32.mrf.mxu0
      %v690 = vadd.f32 0.0, %v689
      %v691 = vpop.f32.mrf.mxu0
      %692 = vmatprep.mubr.f32.mxu0 0.0
      %693 = vmatmul.mubr.f32.gmra.mxu0 %v537
      %v694 = vpop.f32.mrf.mxu0
      %v695 = vadd.f32 0.0, %v694
      %v696 = vpop.f32.mrf.mxu0
      %697 = vmatprep.mubr.f32.mxu0 0.0
      %698 = vmatmul.mubr.f32.gmra.mxu0 %v540
      %v699 = vpop.f32.mrf.mxu0
      %v700 = vadd.f32 0.0, %v699
      %v701 = vpop.f32.mrf.mxu0
      %702 = vmatprep.mubr.f32.mxu0 0.0
      %703 = vmatmul.mubr.f32.gmra.mxu0 %v543
      %v704 = vpop.f32.mrf.mxu0
      %v705 = vadd.f32 0.0, %v704
      %v706 = vpop.f32.mrf.mxu0
      %707 = vmatprep.mubr.f32.mxu0 0.0
      %708 = vmatmul.mubr.f32.gmra.mxu0 %v546
      %v709 = vpop.f32.mrf.mxu0
      %v710 = vadd.f32 0.0, %v709
      %v711 = vpop.f32.mrf.mxu0
      %712 = vmatprep.mubr.f32.mxu0 0.0
      %713 = vmatmul.mubr.f32.gmra.mxu0 %v549
      %v714 = vpop.f32.mrf.mxu0
      %v715 = vadd.f32 0.0, %v714
      %v716 = vpop.f32.mrf.mxu0
      %717 = vmatprep.mubr.f32.mxu0 0.0
      %718 = vmatmul.mubr.f32.gmra.mxu0 %v552
      %v719 = vpop.f32.mrf.mxu0
      %v720 = vadd.f32 0.0, %v719
      %v721 = vpop.f32.mrf.mxu0
      %722 = vmatprep.mubr.f32.mxu0 0.0
      %723 = vmatmul.mubr.f32.gmra.mxu0 %v555
      %v724 = vpop.f32.mrf.mxu0
      %v725 = vadd.f32 0.0, %v724
      %v726 = vpop.f32.mrf.mxu0
      %727 = vmatprep.mubr.f32.mxu0 0.0
      %728 = vmatmul.mubr.f32.gmra.mxu0 %v558
      %v729 = vpop.f32.mrf.mxu0
      %v730 = vadd.f32 0.0, %v729
      %v731 = vpop.f32.mrf.mxu0
      %732 = vmatprep.mubr.f32.mxu0 0.0
      %733 = vmatmul.mubr.f32.gmra.mxu0 %v561
      %v734 = vpop.f32.mrf.mxu0
      %v735 = vadd.f32 0.0, %v734
      %v736 = vpop.f32.mrf.mxu0
      %737 = vmatprep.mubr.f32.mxu0 0.0
      %738 = vmatmul.mubr.f32.gmra.mxu0 %v564
      %v739 = vpop.f32.mrf.mxu0
      %v740 = vadd.f32 0.0, %v739
      %v741 = vpop.f32.mrf.mxu0
      %742 = vmatprep.mubr.f32.mxu0 0.0
      %743 = vmatmul.mubr.f32.gmra.mxu0 %v567
      %v744 = vpop.f32.mrf.mxu0
      %v745 = vadd.f32 0.0, %v744
      %v746 = vpop.f32.mrf.mxu0
      %747 = vmatprep.mubr.f32.mxu0 0.0
      %748 = vmatmul.mubr.f32.gmra.mxu0 %v570
      %v749 = vpop.f32.mrf.mxu0
      %v750 = vadd.f32 0.0, %v749
      %v751 = vpop.f32.mrf.mxu0
      %752 = vmatprep.mubr.f32.mxu0 0.0
      %753 = vmatmul.mubr.f32.gmra.mxu0 %v573
      %v754 = vpop.f32.mrf.mxu0
      %v755 = vadd.f32 0.0, %v754
      %v756 = vpop.f32.mrf.mxu0
      %757 = vmatprep.mubr.f32.mxu0 0.0
      %758 = vmatmul.mubr.f32.gmra.mxu0 %v576
      %v759 = vpop.f32.mrf.mxu0
      %v760 = vadd.f32 0.0, %v759
      %v761 = vpop.f32.mrf.mxu0
      %762 = vdwg.mxu0
      %v763 = vld [vmem:[%s2] sm:$0x1]
      %v765 = vlaneseq
      %v766 = vshrl.u32 %v765, 7
      %v767 = vsub.s32 0, %v766
      %v768 = vrot.slane %v763, %v767
      %v770 = vmul.f32 %v645, %v768
      %v771 = vmul.f32 %v650, %v768
      %v772 = vmul.f32 %v655, %v768
      %v773 = vmul.f32 %v660, %v768
      %v774 = vmul.f32 %v665, %v768
      %v775 = vmul.f32 %v670, %v768
      %v776 = vmul.f32 %v675, %v768
      %v777 = vmul.f32 %v680, %v768
      %v778 = vmul.f32 %v685, %v768
      %v779 = vmul.f32 %v690, %v768
      %v780 = vmul.f32 %v695, %v768
      %v781 = vmul.f32 %v700, %v768
      %v782 = vmul.f32 %v705, %v768
      %v783 = vmul.f32 %v710, %v768
      %v784 = vmul.f32 %v715, %v768
      %v785 = vmul.f32 %v720, %v768
      %v786 = vmul.f32 %v725, %v768
      %v787 = vmul.f32 %v730, %v768
      %v788 = vmul.f32 %v735, %v768
      %v789 = vmul.f32 %v740, %v768
      %v790 = vmul.f32 %v745, %v768
      %v791 = vmul.f32 %v750, %v768
      %v792 = vmul.f32 %v755, %v768
      %v793 = vmul.f32 %v760, %v768
      %v794 = vld [vmem:[%s3] sm:$0x1]
      %v796 = vlaneseq
      %v797 = vshrl.u32 %v796, 7
      %v798 = vsub.s32 0, %v797
      %v799 = vrot.slane %v794, %v798
      %v801 = vadd.f32 %v770, %v799
      %v802 = vadd.f32 %v771, %v799
      %v803 = vadd.f32 %v772, %v799
      %v804 = vadd.f32 %v773, %v799
      %v805 = vadd.f32 %v774, %v799
      %v806 = vadd.f32 %v775, %v799
      %v807 = vadd.f32 %v776, %v799
      %v808 = vadd.f32 %v777, %v799
      %v809 = vadd.f32 %v778, %v799
      %v810 = vadd.f32 %v779, %v799
      %v811 = vadd.f32 %v780, %v799
      %v812 = vadd.f32 %v781, %v799
      %v813 = vadd.f32 %v782, %v799
      %v814 = vadd.f32 %v783, %v799
      %v815 = vadd.f32 %v784, %v799
      %v816 = vadd.f32 %v785, %v799
      %v817 = vadd.f32 %v786, %v799
      %v818 = vadd.f32 %v787, %v799
      %v819 = vadd.f32 %v788, %v799
      %v820 = vadd.f32 %v789, %v799
      %v821 = vadd.f32 %v790, %v799
      %v822 = vadd.f32 %v791, %v799
      %v823 = vadd.f32 %v792, %v799
      %v824 = vadd.f32 %v793, %v799
      %v825 = vmax.f32 %v801, 0.0
      %v826 = vmax.f32 %v802, 0.0
      %v827 = vmax.f32 %v803, 0.0
      %v828 = vmax.f32 %v804, 0.0
      %v829 = vmax.f32 %v805, 0.0
      %v830 = vmax.f32 %v806, 0.0
      %v831 = vmax.f32 %v807, 0.0
      %v832 = vmax.f32 %v808, 0.0
      %v833 = vmax.f32 %v809, 0.0
      %v834 = vmax.f32 %v810, 0.0
      %v835 = vmax.f32 %v811, 0.0
      %v836 = vmax.f32 %v812, 0.0
      %v837 = vmax.f32 %v813, 0.0
      %v838 = vmax.f32 %v814, 0.0
      %v839 = vmax.f32 %v815, 0.0
      %v840 = vmax.f32 %v816, 0.0
      %v841 = vmax.f32 %v817, 0.0
      %v842 = vmax.f32 %v818, 0.0
      %v843 = vmax.f32 %v819, 0.0
      %v844 = vmax.f32 %v820, 0.0
      %v845 = vmax.f32 %v821, 0.0
      %v846 = vmax.f32 %v822, 0.0
      %v847 = vmax.f32 %v823, 0.0
      %v848 = vmax.f32 %v824, 0.0
      %vm849 = vcmask 57344
      %850 = vst.msk [vmem:[#allocation2] sm:$0x1] %vm849, 0.0
      %851 = vst.msk [vmem:[#allocation2 + $0x18] sm:$0x1] %vm849, 0.0
      %852 = vst.msk [vmem:[#allocation2 + $0x30] sm:$0x1] %vm849, 0.0
      %853 = vst.msk [vmem:[#allocation2 + $0x48] sm:$0x1] %vm849, 0.0
      %854 = vst.msk [vmem:[#allocation2 + $0x60] sm:$0x1] %vm849, 0.0
      %855 = vst.msk [vmem:[#allocation2 + $0x78] sm:$0x1] %vm849, 0.0
      %856 = vst.msk [vmem:[#allocation2 + $0x90] sm:$0x1] %vm849, 0.0
      %857 = vst.msk [vmem:[#allocation2 + $0xa8] sm:$0x1] %vm849, 0.0
      %858 = vst.msk [vmem:[#allocation2 + $0xc0] sm:$0x1] %vm849, 0.0
      %859 = vst.msk [vmem:[#allocation2 + $0xd8] sm:$0x1] %vm849, 0.0
      %860 = vst.msk [vmem:[#allocation2 + $0xf0] sm:$0x1] %vm849, 0.0
      %861 = vst.msk [vmem:[#allocation2 + $0x108] sm:$0x1] %vm849, 0.0
      %862 = vst.msk [vmem:[#allocation2 + $0x11] sm:$0x1] %vm849, 0.0
      %863 = vst.msk [vmem:[#allocation2 + $0x29] sm:$0x1] %vm849, 0.0
      %864 = vst.msk [vmem:[#allocation2 + $0x41] sm:$0x1] %vm849, 0.0
      %865 = vst.msk [vmem:[#allocation2 + $0x59] sm:$0x1] %vm849, 0.0
      %866 = vst.msk [vmem:[#allocation2 + $0x71] sm:$0x1] %vm849, 0.0
      %867 = vst.msk [vmem:[#allocation2 + $0x89] sm:$0x1] %vm849, 0.0
      %868 = vst.msk [vmem:[#allocation2 + $0xa1] sm:$0x1] %vm849, 0.0
      %869 = vst.msk [vmem:[#allocation2 + $0xb9] sm:$0x1] %vm849, 0.0
      %870 = vst.msk [vmem:[#allocation2 + $0xd1] sm:$0x1] %vm849, 0.0
      %871 = vst.msk [vmem:[#allocation2 + $0xe9] sm:$0x1] %vm849, 0.0
      %872 = vst.msk [vmem:[#allocation2 + $0x101] sm:$0x1] %vm849, 0.0
      %873 = vst.msk [vmem:[#allocation2 + $0x119] sm:$0x1] %vm849, 0.0
      %874 = vst.msk [vmem:[#allocation2 + $0x1] sm:$0xff] %vm505, %v825
      %875 = vst.msk [vmem:[#allocation2 + $0x9] sm:$0xff] %vm505, %v826
      %876 = vst.msk [vmem:[#allocation2 + $0x19] sm:$0xff] %vm505, %v827
      %877 = vst.msk [vmem:[#allocation2 + $0x21] sm:$0xff] %vm505, %v828
      %878 = vst.msk [vmem:[#allocation2 + $0x31] sm:$0xff] %vm505, %v829
      %879 = vst.msk [vmem:[#allocation2 + $0x39] sm:$0xff] %vm505, %v830
      %880 = vst.msk [vmem:[#allocation2 + $0x49] sm:$0xff] %vm505, %v831
      %881 = vst.msk [vmem:[#allocation2 + $0x51] sm:$0xff] %vm505, %v832
      %882 = vst.msk [vmem:[#allocation2 + $0x61] sm:$0xff] %vm505, %v833
      %883 = vst.msk [vmem:[#allocation2 + $0x69] sm:$0xff] %vm505, %v834
      %884 = vst.msk [vmem:[#allocation2 + $0x79] sm:$0xff] %vm505, %v835
      %885 = vst.msk [vmem:[#allocation2 + $0x81] sm:$0xff] %vm505, %v836
      %886 = vst.msk [vmem:[#allocation2 + $0x91] sm:$0xff] %vm505, %v837
      %887 = vst.msk [vmem:[#allocation2 + $0x99] sm:$0xff] %vm505, %v838
      %888 = vst.msk [vmem:[#allocation2 + $0xa9] sm:$0xff] %vm505, %v839
      %889 = vst.msk [vmem:[#allocation2 + $0xb1] sm:$0xff] %vm505, %v840
      %890 = vst.msk [vmem:[#allocation2 + $0xc1] sm:$0xff] %vm505, %v841
      %891 = vst.msk [vmem:[#allocation2 + $0xc9] sm:$0xff] %vm505, %v842
      %892 = vst.msk [vmem:[#allocation2 + $0xd9] sm:$0xff] %vm505, %v843
      %893 = vst.msk [vmem:[#allocation2 + $0xe1] sm:$0xff] %vm505, %v844
      %894 = vst.msk [vmem:[#allocation2 + $0xf1] sm:$0xff] %vm505, %v845
      %895 = vst.msk [vmem:[#allocation2 + $0xf9] sm:$0xff] %vm505, %v846
      %896 = vst.msk [vmem:[#allocation2 + $0x109] sm:$0xff] %vm505, %v847
      %897 = vst.msk [vmem:[#allocation2 + $0x111] sm:$0xff] %vm505, %v848
      %p898 = scmp.eq.s32.totalorder %s29, 0
      // Predicated region
      $region73: #{ghost_bottleneck.1} parent=71 // pred_check
        %p899 = pneg %p898
      $region74: #{ghost_bottleneck.1} parent=71 // pred_check_branch
        %901 = sbr.rel (%p899) target = $region76
      $region75: #{ghost_bottleneck.1} parent=71 // pred_region
        %s902 = scalar_lea.vmem [#allocation2], 24
        %903 = vst.msk [vmem:[%s902] sm:$0xff] %vm505, 0.0
        %904 = vst.msk [vmem:[%s902 + $0x8] sm:$0xff] %vm505, 0.0
        %vm905 = vcmask 58368
        %906 = vst.msk [vmem:[%s902 + $0x10] sm:$0x3] %vm905, 0.0
      $region76: #{ghost_bottleneck.1} parent=71 // pred_fallthru
        _
      %p907 = scmp.eq.s32.totalorder %s29, 1
      // Predicated region
      $region77: #{ghost_bottleneck.1} parent=71 // pred_check
        %p908 = pneg %p907
      $region78: #{ghost_bottleneck.1} parent=71 // pred_check_branch
        %910 = sbr.rel (%p908) target = $region80
      $region79: #{ghost_bottleneck.1} parent=71 // pred_region
        %s911 = scalar_lea.vmem [#allocation2], 240
        %912 = vst.msk [vmem:[%s911] sm:$0xff] %vm505, 0.0
        %913 = vst.msk [vmem:[%s911 + $0x8] sm:$0xff] %vm505, 0.0
        %vm914 = vcmask 58368
        %915 = vst.msk [vmem:[%s911 + $0x10] sm:$0x3] %vm914, 0.0
      $region80: #{ghost_bottleneck.1} parent=71 // pred_fallthru
        _
      %v916 = vld [vmem:[%s4] sm:$0xff]
      %v917 = vld [vmem:[%s4 + $0x8] sm:$0x1]
      %v918 = vld [vmem:[#allocation2] sm:$0xff]
      %v919 = vld [vmem:[#allocation2 + $0x8] sm:$0xff]
      %v920 = vld [vmem:[#allocation2 + $0x18] sm:$0xff]
      %v921 = vld [vmem:[#allocation2 + $0x20] sm:$0xff]
      %v922 = vld [vmem:[#allocation2 + $0x30] sm:$0xff]
      %v923 = vld [vmem:[#allocation2 + $0x38] sm:$0xff]
      %v924 = vld [vmem:[#allocation2 + $0x48] sm:$0xff]
      %v925 = vld [vmem:[#allocation2 + $0x50] sm:$0xff]
      %v926 = vld [vmem:[#allocation2 + $0x60] sm:$0xff]
      %v927 = vld [vmem:[#allocation2 + $0x68] sm:$0xff]
      %v928 = vld [vmem:[#allocation2 + $0x78] sm:$0xff]
      %v929 = vld [vmem:[#allocation2 + $0x80] sm:$0xff]
      %v930 = vld [vmem:[#allocation2 + $0x90] sm:$0xff]
      %v931 = vld [vmem:[#allocation2 + $0x98] sm:$0xff]
      %v932 = vld [vmem:[#allocation2 + $0xa8] sm:$0xff]
      %v933 = vld [vmem:[#allocation2 + $0xb0] sm:$0xff]
      %v934 = vld [vmem:[#allocation2 + $0xc0] sm:$0xff]
      %v935 = vld [vmem:[#allocation2 + $0xc8] sm:$0xff]
      %v936 = vld [vmem:[#allocation2 + $0xd8] sm:$0xff]
      %v937 = vld [vmem:[#allocation2 + $0xe0] sm:$0xff]
      %v938 = vlaneseq
      %v939 = vshrl.u32 %v938, 7
      %v940 = vsub.s32 0, %v939
      %v941 = vrot.slane %v916, %v940
      %v942 = vmul.f32 %v918, %v941
      %v943 = vmul.f32 %v919, %v941
      %v944 = vmul.f32 %v920, %v941
      %v945 = vmul.f32 %v921, %v941
      %v946 = vmul.f32 %v922, %v941
      %v947 = vmul.f32 %v923, %v941
      %v948 = vmul.f32 %v924, %v941
      %v949 = vmul.f32 %v925, %v941
      %v950 = vmul.f32 %v926, %v941
      %v951 = vmul.f32 %v927, %v941
      %v952 = vmul.f32 %v928, %v941
      %v953 = vmul.f32 %v929, %v941
      %v954 = vmul.f32 %v930, %v941
      %v955 = vmul.f32 %v931, %v941
      %v956 = vmul.f32 %v932, %v941
      %v957 = vmul.f32 %v933, %v941
      %v958 = vmul.f32 %v934, %v941
      %v959 = vmul.f32 %v935, %v941
      %v960 = vmul.f32 %v936, %v941
      %v961 = vmul.f32 %v937, %v941
      %v962 = vld [vmem:[#allocation2 + $0x1] sm:$0xff]
      %v963 = vld [vmem:[#allocation2 + $0x9] sm:$0xff]
      %v964 = vld [vmem:[#allocation2 + $0x19] sm:$0xff]
      %v965 = vld [vmem:[#allocation2 + $0x21] sm:$0xff]
      %v966 = vld [vmem:[#allocation2 + $0x31] sm:$0xff]
      %v967 = vld [vmem:[#allocation2 + $0x39] sm:$0xff]
      %v968 = vld [vmem:[#allocation2 + $0x49] sm:$0xff]
      %v969 = vld [vmem:[#allocation2 + $0x51] sm:$0xff]
      %v970 = vld [vmem:[#allocation2 + $0x61] sm:$0xff]
      %v971 = vld [vmem:[#allocation2 + $0x69] sm:$0xff]
      %v972 = vld [vmem:[#allocation2 + $0x79] sm:$0xff]
      %v973 = vld [vmem:[#allocation2 + $0x81] sm:$0xff]
      %v974 = vld [vmem:[#allocation2 + $0x91] sm:$0xff]
      %v975 = vld [vmem:[#allocation2 + $0x99] sm:$0xff]
      %v976 = vld [vmem:[#allocation2 + $0xa9] sm:$0xff]
      %v977 = vld [vmem:[#allocation2 + $0xb1] sm:$0xff]
      %v978 = vld [vmem:[#allocation2 + $0xc1] sm:$0xff]
      %v979 = vld [vmem:[#allocation2 + $0xc9] sm:$0xff]
      %v980 = vld [vmem:[#allocation2 + $0xd9] sm:$0xff]
      %v981 = vld [vmem:[#allocation2 + $0xe1] sm:$0xff]
      %v982 = vlaneseq
      %v983 = vshrl.u32 %v982, 7
      %v984 = vsub.s32 1, %v983
      %v985 = vrot.slane %v916, %v984
      %v986 = vmul.f32 %v962, %v985
      %v987 = vmul.f32 %v963, %v985
      %v988 = vmul.f32 %v964, %v985
      %v989 = vmul.f32 %v965, %v985
      %v990 = vmul.f32 %v966, %v985
      %v991 = vmul.f32 %v967, %v985
      %v992 = vmul.f32 %v968, %v985
      %v993 = vmul.f32 %v969, %v985
      %v994 = vmul.f32 %v970, %v985
      %v995 = vmul.f32 %v971, %v985
      %v996 = vmul.f32 %v972, %v985
      %v997 = vmul.f32 %v973, %v985
      %v998 = vmul.f32 %v974, %v985
      %v999 = vmul.f32 %v975, %v985
      %v1000 = vmul.f32 %v976, %v985
      %v1001 = vmul.f32 %v977, %v985
      %v1002 = vmul.f32 %v978, %v985
      %v1003 = vmul.f32 %v979, %v985
      %v1004 = vmul.f32 %v980, %v985
      %v1005 = vmul.f32 %v981, %v985
      %v1006 = vadd.f32 %v942, %v986
      %v1007 = vadd.f32 %v943, %v987
      %v1008 = vadd.f32 %v944, %v988
      %v1009 = vadd.f32 %v945, %v989
      %v1010 = vadd.f32 %v946, %v990
      %v1011 = vadd.f32 %v947, %v991
      %v1012 = vadd.f32 %v948, %v992
      %v1013 = vadd.f32 %v949, %v993
      %v1014 = vadd.f32 %v950, %v994
      %v1015 = vadd.f32 %v951, %v995
      %v1016 = vadd.f32 %v952, %v996
      %v1017 = vadd.f32 %v953, %v997
      %v1018 = vadd.f32 %v954, %v998
      %v1019 = vadd.f32 %v955, %v999
      %v1020 = vadd.f32 %v956, %v1000
      %v1021 = vadd.f32 %v957, %v1001
      %v1022 = vadd.f32 %v958, %v1002
      %v1023 = vadd.f32 %v959, %v1003
      %v1024 = vadd.f32 %v960, %v1004
      %v1025 = vadd.f32 %v961, %v1005
      %v1026 = vld [vmem:[#allocation2 + $0x2] sm:$0xff]
      %v1027 = vld [vmem:[#allocation2 + $0xa] sm:$0xff]
      %v1028 = vld [vmem:[#allocation2 + $0x1a] sm:$0xff]
      %v1029 = vld [vmem:[#allocation2 + $0x22] sm:$0xff]
      %v1030 = vld [vmem:[#allocation2 + $0x32] sm:$0xff]
      %v1031 = vld [vmem:[#allocation2 + $0x3a] sm:$0xff]
      %v1032 = vld [vmem:[#allocation2 + $0x4a] sm:$0xff]
      %v1033 = vld [vmem:[#allocation2 + $0x52] sm:$0xff]
      %v1034 = vld [vmem:[#allocation2 + $0x62] sm:$0xff]
      %v1035 = vld [vmem:[#allocation2 + $0x6a] sm:$0xff]
      %v1036 = vld [vmem:[#allocation2 + $0x7a] sm:$0xff]
      %v1037 = vld [vmem:[#allocation2 + $0x82] sm:$0xff]
      %v1038 = vld [vmem:[#allocation2 + $0x92] sm:$0xff]
      %v1039 = vld [vmem:[#allocation2 + $0x9a] sm:$0xff]
      %v1040 = vld [vmem:[#allocation2 + $0xaa] sm:$0xff]
      %v1041 = vld [vmem:[#allocation2 + $0xb2] sm:$0xff]
      %v1042 = vld [vmem:[#allocation2 + $0xc2] sm:$0xff]
      %v1043 = vld [vmem:[#allocation2 + $0xca] sm:$0xff]
      %v1044 = vld [vmem:[#allocation2 + $0xda] sm:$0xff]
      %v1045 = vld [vmem:[#allocation2 + $0xe2] sm:$0xff]
      %v1046 = vlaneseq
      %v1047 = vshrl.u32 %v1046, 7
      %v1048 = vsub.s32 2, %v1047
      %v1049 = vrot.slane %v916, %v1048
      %v1050 = vmul.f32 %v1026, %v1049
      %v1051 = vmul.f32 %v1027, %v1049
      %v1052 = vmul.f32 %v1028, %v1049
      %v1053 = vmul.f32 %v1029, %v1049
      %v1054 = vmul.f32 %v1030, %v1049
      %v1055 = vmul.f32 %v1031, %v1049
      %v1056 = vmul.f32 %v1032, %v1049
      %v1057 = vmul.f32 %v1033, %v1049
      %v1058 = vmul.f32 %v1034, %v1049
      %v1059 = vmul.f32 %v1035, %v1049
      %v1060 = vmul.f32 %v1036, %v1049
      %v1061 = vmul.f32 %v1037, %v1049
      %v1062 = vmul.f32 %v1038, %v1049
      %v1063 = vmul.f32 %v1039, %v1049
      %v1064 = vmul.f32 %v1040, %v1049
      %v1065 = vmul.f32 %v1041, %v1049
      %v1066 = vmul.f32 %v1042, %v1049
      %v1067 = vmul.f32 %v1043, %v1049
      %v1068 = vmul.f32 %v1044, %v1049
      %v1069 = vmul.f32 %v1045, %v1049
      %v1070 = vadd.f32 %v1006, %v1050
      %v1071 = vadd.f32 %v1007, %v1051
      %v1072 = vadd.f32 %v1008, %v1052
      %v1073 = vadd.f32 %v1009, %v1053
      %v1074 = vadd.f32 %v1010, %v1054
      %v1075 = vadd.f32 %v1011, %v1055
      %v1076 = vadd.f32 %v1012, %v1056
      %v1077 = vadd.f32 %v1013, %v1057
      %v1078 = vadd.f32 %v1014, %v1058
      %v1079 = vadd.f32 %v1015, %v1059
      %v1080 = vadd.f32 %v1016, %v1060
      %v1081 = vadd.f32 %v1017, %v1061
      %v1082 = vadd.f32 %v1018, %v1062
      %v1083 = vadd.f32 %v1019, %v1063
      %v1084 = vadd.f32 %v1020, %v1064
      %v1085 = vadd.f32 %v1021, %v1065
      %v1086 = vadd.f32 %v1022, %v1066
      %v1087 = vadd.f32 %v1023, %v1067
      %v1088 = vadd.f32 %v1024, %v1068
      %v1089 = vadd.f32 %v1025, %v1069
      %s1090 = scalar_lea.vmem [#allocation2], 24
      %v1091 = vld [vmem:[%s1090] sm:$0xff]
      %v1092 = vld [vmem:[%s1090 + $0x8] sm:$0xff]
      %v1093 = vld [vmem:[%s1090 + $0x18] sm:$0xff]
      %v1094 = vld [vmem:[%s1090 + $0x20] sm:$0xff]
      %v1095 = vld [vmem:[%s1090 + $0x30] sm:$0xff]
      %v1096 = vld [vmem:[%s1090 + $0x38] sm:$0xff]
      %v1097 = vld [vmem:[%s1090 + $0x48] sm:$0xff]
      %v1098 = vld [vmem:[%s1090 + $0x50] sm:$0xff]
      %v1099 = vld [vmem:[%s1090 + $0x60] sm:$0xff]
      %v1100 = vld [vmem:[%s1090 + $0x68] sm:$0xff]
      %v1101 = vld [vmem:[%s1090 + $0x78] sm:$0xff]
      %v1102 = vld [vmem:[%s1090 + $0x80] sm:$0xff]
      %v1103 = vld [vmem:[%s1090 + $0x90] sm:$0xff]
      %v1104 = vld [vmem:[%s1090 + $0x98] sm:$0xff]
      %v1105 = vld [vmem:[%s1090 + $0xa8] sm:$0xff]
      %v1106 = vld [vmem:[%s1090 + $0xb0] sm:$0xff]
      %v1107 = vld [vmem:[%s1090 + $0xc0] sm:$0xff]
      %v1108 = vld [vmem:[%s1090 + $0xc8] sm:$0xff]
      %v1109 = vld [vmem:[%s1090 + $0xd8] sm:$0xff]
      %v1110 = vld [vmem:[%s1090 + $0xe0] sm:$0xff]
      %v1111 = vlaneseq
      %v1112 = vshrl.u32 %v1111, 7
      %v1113 = vsub.s32 3, %v1112
      %v1114 = vrot.slane %v916, %v1113
      %v1115 = vmul.f32 %v1091, %v1114
      %v1116 = vmul.f32 %v1092, %v1114
      %v1117 = vmul.f32 %v1093, %v1114
      %v1118 = vmul.f32 %v1094, %v1114
      %v1119 = vmul.f32 %v1095, %v1114
      %v1120 = vmul.f32 %v1096, %v1114
      %v1121 = vmul.f32 %v1097, %v1114
      %v1122 = vmul.f32 %v1098, %v1114
      %v1123 = vmul.f32 %v1099, %v1114
      %v1124 = vmul.f32 %v1100, %v1114
      %v1125 = vmul.f32 %v1101, %v1114
      %v1126 = vmul.f32 %v1102, %v1114
      %v1127 = vmul.f32 %v1103, %v1114
      %v1128 = vmul.f32 %v1104, %v1114
      %v1129 = vmul.f32 %v1105, %v1114
      %v1130 = vmul.f32 %v1106, %v1114
      %v1131 = vmul.f32 %v1107, %v1114
      %v1132 = vmul.f32 %v1108, %v1114
      %v1133 = vmul.f32 %v1109, %v1114
      %v1134 = vmul.f32 %v1110, %v1114
      %v1135 = vadd.f32 %v1070, %v1115
      %v1136 = vadd.f32 %v1071, %v1116
      %v1137 = vadd.f32 %v1072, %v1117
      %v1138 = vadd.f32 %v1073, %v1118
      %v1139 = vadd.f32 %v1074, %v1119
      %v1140 = vadd.f32 %v1075, %v1120
      %v1141 = vadd.f32 %v1076, %v1121
      %v1142 = vadd.f32 %v1077, %v1122
      %v1143 = vadd.f32 %v1078, %v1123
      %v1144 = vadd.f32 %v1079, %v1124
      %v1145 = vadd.f32 %v1080, %v1125
      %v1146 = vadd.f32 %v1081, %v1126
      %v1147 = vadd.f32 %v1082, %v1127
      %v1148 = vadd.f32 %v1083, %v1128
      %v1149 = vadd.f32 %v1084, %v1129
      %v1150 = vadd.f32 %v1085, %v1130
      %v1151 = vadd.f32 %v1086, %v1131
      %v1152 = vadd.f32 %v1087, %v1132
      %v1153 = vadd.f32 %v1088, %v1133
      %v1154 = vadd.f32 %v1089, %v1134
      %v1155 = vld [vmem:[%s1090 + $0x1] sm:$0xff]
      %v1156 = vld [vmem:[%s1090 + $0x9] sm:$0xff]
      %v1157 = vld [vmem:[%s1090 + $0x19] sm:$0xff]
      %v1158 = vld [vmem:[%s1090 + $0x21] sm:$0xff]
      %v1159 = vld [vmem:[%s1090 + $0x31] sm:$0xff]
      %v1160 = vld [vmem:[%s1090 + $0x39] sm:$0xff]
      %v1161 = vld [vmem:[%s1090 + $0x49] sm:$0xff]
      %v1162 = vld [vmem:[%s1090 + $0x51] sm:$0xff]
      %v1163 = vld [vmem:[%s1090 + $0x61] sm:$0xff]
      %v1164 = vld [vmem:[%s1090 + $0x69] sm:$0xff]
      %v1165 = vld [vmem:[%s1090 + $0x79] sm:$0xff]
      %v1166 = vld [vmem:[%s1090 + $0x81] sm:$0xff]
      %v1167 = vld [vmem:[%s1090 + $0x91] sm:$0xff]
      %v1168 = vld [vmem:[%s1090 + $0x99] sm:$0xff]
      %v1169 = vld [vmem:[%s1090 + $0xa9] sm:$0xff]
      %v1170 = vld [vmem:[%s1090 + $0xb1] sm:$0xff]
      %v1171 = vld [vmem:[%s1090 + $0xc1] sm:$0xff]
      %v1172 = vld [vmem:[%s1090 + $0xc9] sm:$0xff]
      %v1173 = vld [vmem:[%s1090 + $0xd9] sm:$0xff]
      %v1174 = vld [vmem:[%s1090 + $0xe1] sm:$0xff]
      %v1175 = vlaneseq
      %v1176 = vshrl.u32 %v1175, 7
      %v1177 = vsub.s32 4, %v1176
      %v1178 = vrot.slane %v916, %v1177
      %v1179 = vmul.f32 %v1155, %v1178
      %v1180 = vmul.f32 %v1156, %v1178
      %v1181 = vmul.f32 %v1157, %v1178
      %v1182 = vmul.f32 %v1158, %v1178
      %v1183 = vmul.f32 %v1159, %v1178
      %v1184 = vmul.f32 %v1160, %v1178
      %v1185 = vmul.f32 %v1161, %v1178
      %v1186 = vmul.f32 %v1162, %v1178
      %v1187 = vmul.f32 %v1163, %v1178
      %v1188 = vmul.f32 %v1164, %v1178
      %v1189 = vmul.f32 %v1165, %v1178
      %v1190 = vmul.f32 %v1166, %v1178
      %v1191 = vmul.f32 %v1167, %v1178
      %v1192 = vmul.f32 %v1168, %v1178
      %v1193 = vmul.f32 %v1169, %v1178
      %v1194 = vmul.f32 %v1170, %v1178
      %v1195 = vmul.f32 %v1171, %v1178
      %v1196 = vmul.f32 %v1172, %v1178
      %v1197 = vmul.f32 %v1173, %v1178
      %v1198 = vmul.f32 %v1174, %v1178
      %v1199 = vadd.f32 %v1135, %v1179
      %v1200 = vadd.f32 %v1136, %v1180
      %v1201 = vadd.f32 %v1137, %v1181
      %v1202 = vadd.f32 %v1138, %v1182
      %v1203 = vadd.f32 %v1139, %v1183
      %v1204 = vadd.f32 %v1140, %v1184
      %v1205 = vadd.f32 %v1141, %v1185
      %v1206 = vadd.f32 %v1142, %v1186
      %v1207 = vadd.f32 %v1143, %v1187
      %v1208 = vadd.f32 %v1144, %v1188
      %v1209 = vadd.f32 %v1145, %v1189
      %v1210 = vadd.f32 %v1146, %v1190
      %v1211 = vadd.f32 %v1147, %v1191
      %v1212 = vadd.f32 %v1148, %v1192
      %v1213 = vadd.f32 %v1149, %v1193
      %v1214 = vadd.f32 %v1150, %v1194
      %v1215 = vadd.f32 %v1151, %v1195
      %v1216 = vadd.f32 %v1152, %v1196
      %v1217 = vadd.f32 %v1153, %v1197
      %v1218 = vadd.f32 %v1154, %v1198
      %v1219 = vld [vmem:[%s1090 + $0x2] sm:$0xff]
      %v1220 = vld [vmem:[%s1090 + $0xa] sm:$0xff]
      %v1221 = vld [vmem:[%s1090 + $0x1a] sm:$0xff]
      %v1222 = vld [vmem:[%s1090 + $0x22] sm:$0xff]
      %v1223 = vld [vmem:[%s1090 + $0x32] sm:$0xff]
      %v1224 = vld [vmem:[%s1090 + $0x3a] sm:$0xff]
      %v1225 = vld [vmem:[%s1090 + $0x4a] sm:$0xff]
      %v1226 = vld [vmem:[%s1090 + $0x52] sm:$0xff]
      %v1227 = vld [vmem:[%s1090 + $0x62] sm:$0xff]
      %v1228 = vld [vmem:[%s1090 + $0x6a] sm:$0xff]
      %v1229 = vld [vmem:[%s1090 + $0x7a] sm:$0xff]
      %v1230 = vld [vmem:[%s1090 + $0x82] sm:$0xff]
      %v1231 = vld [vmem:[%s1090 + $0x92] sm:$0xff]
      %v1232 = vld [vmem:[%s1090 + $0x9a] sm:$0xff]
      %v1233 = vld [vmem:[%s1090 + $0xaa] sm:$0xff]
      %v1234 = vld [vmem:[%s1090 + $0xb2] sm:$0xff]
      %v1235 = vld [vmem:[%s1090 + $0xc2] sm:$0xff]
      %v1236 = vld [vmem:[%s1090 + $0xca] sm:$0xff]
      %v1237 = vld [vmem:[%s1090 + $0xda] sm:$0xff]
      %v1238 = vld [vmem:[%s1090 + $0xe2] sm:$0xff]
      %v1239 = vlaneseq
      %v1240 = vshrl.u32 %v1239, 7
      %v1241 = vsub.s32 5, %v1240
      %v1242 = vrot.slane %v916, %v1241
      %v1243 = vmul.f32 %v1219, %v1242
      %v1244 = vmul.f32 %v1220, %v1242
      %v1245 = vmul.f32 %v1221, %v1242
      %v1246 = vmul.f32 %v1222, %v1242
      %v1247 = vmul.f32 %v1223, %v1242
      %v1248 = vmul.f32 %v1224, %v1242
      %v1249 = vmul.f32 %v1225, %v1242
      %v1250 = vmul.f32 %v1226, %v1242
      %v1251 = vmul.f32 %v1227, %v1242
      %v1252 = vmul.f32 %v1228, %v1242
      %v1253 = vmul.f32 %v1229, %v1242
      %v1254 = vmul.f32 %v1230, %v1242
      %v1255 = vmul.f32 %v1231, %v1242
      %v1256 = vmul.f32 %v1232, %v1242
      %v1257 = vmul.f32 %v1233, %v1242
      %v1258 = vmul.f32 %v1234, %v1242
      %v1259 = vmul.f32 %v1235, %v1242
      %v1260 = vmul.f32 %v1236, %v1242
      %v1261 = vmul.f32 %v1237, %v1242
      %v1262 = vmul.f32 %v1238, %v1242
      %v1263 = vadd.f32 %v1199, %v1243
      %v1264 = vadd.f32 %v1200, %v1244
      %v1265 = vadd.f32 %v1201, %v1245
      %v1266 = vadd.f32 %v1202, %v1246
      %v1267 = vadd.f32 %v1203, %v1247
      %v1268 = vadd.f32 %v1204, %v1248
      %v1269 = vadd.f32 %v1205, %v1249
      %v1270 = vadd.f32 %v1206, %v1250
      %v1271 = vadd.f32 %v1207, %v1251
      %v1272 = vadd.f32 %v1208, %v1252
      %v1273 = vadd.f32 %v1209, %v1253
      %v1274 = vadd.f32 %v1210, %v1254
      %v1275 = vadd.f32 %v1211, %v1255
      %v1276 = vadd.f32 %v1212, %v1256
      %v1277 = vadd.f32 %v1213, %v1257
      %v1278 = vadd.f32 %v1214, %v1258
      %v1279 = vadd.f32 %v1215, %v1259
      %v1280 = vadd.f32 %v1216, %v1260
      %v1281 = vadd.f32 %v1217, %v1261
      %v1282 = vadd.f32 %v1218, %v1262
      %s1283 = scalar_lea.vmem [#allocation2], 48
      %v1284 = vld [vmem:[%s1283] sm:$0xff]
      %v1285 = vld [vmem:[%s1283 + $0x8] sm:$0xff]
      %v1286 = vld [vmem:[%s1283 + $0x18] sm:$0xff]
      %v1287 = vld [vmem:[%s1283 + $0x20] sm:$0xff]
      %v1288 = vld [vmem:[%s1283 + $0x30] sm:$0xff]
      %v1289 = vld [vmem:[%s1283 + $0x38] sm:$0xff]
      %v1290 = vld [vmem:[%s1283 + $0x48] sm:$0xff]
      %v1291 = vld [vmem:[%s1283 + $0x50] sm:$0xff]
      %v1292 = vld [vmem:[%s1283 + $0x60] sm:$0xff]
      %v1293 = vld [vmem:[%s1283 + $0x68] sm:$0xff]
      %v1294 = vld [vmem:[%s1283 + $0x78] sm:$0xff]
      %v1295 = vld [vmem:[%s1283 + $0x80] sm:$0xff]
      %v1296 = vld [vmem:[%s1283 + $0x90] sm:$0xff]
      %v1297 = vld [vmem:[%s1283 + $0x98] sm:$0xff]
      %v1298 = vld [vmem:[%s1283 + $0xa8] sm:$0xff]
      %v1299 = vld [vmem:[%s1283 + $0xb0] sm:$0xff]
      %v1300 = vld [vmem:[%s1283 + $0xc0] sm:$0xff]
      %v1301 = vld [vmem:[%s1283 + $0xc8] sm:$0xff]
      %v1302 = vld [vmem:[%s1283 + $0xd8] sm:$0xff]
      %v1303 = vld [vmem:[%s1283 + $0xe0] sm:$0xff]
      %v1304 = vlaneseq
      %v1305 = vshrl.u32 %v1304, 7
      %v1306 = vsub.s32 6, %v1305
      %v1307 = vrot.slane %v916, %v1306
      %v1308 = vmul.f32 %v1284, %v1307
      %v1309 = vmul.f32 %v1285, %v1307
      %v1310 = vmul.f32 %v1286, %v1307
      %v1311 = vmul.f32 %v1287, %v1307
      %v1312 = vmul.f32 %v1288, %v1307
      %v1313 = vmul.f32 %v1289, %v1307
      %v1314 = vmul.f32 %v1290, %v1307
      %v1315 = vmul.f32 %v1291, %v1307
      %v1316 = vmul.f32 %v1292, %v1307
      %v1317 = vmul.f32 %v1293, %v1307
      %v1318 = vmul.f32 %v1294, %v1307
      %v1319 = vmul.f32 %v1295, %v1307
      %v1320 = vmul.f32 %v1296, %v1307
      %v1321 = vmul.f32 %v1297, %v1307
      %v1322 = vmul.f32 %v1298, %v1307
      %v1323 = vmul.f32 %v1299, %v1307
      %v1324 = vmul.f32 %v1300, %v1307
      %v1325 = vmul.f32 %v1301, %v1307
      %v1326 = vmul.f32 %v1302, %v1307
      %v1327 = vmul.f32 %v1303, %v1307
      %v1328 = vadd.f32 %v1263, %v1308
      %v1329 = vadd.f32 %v1264, %v1309
      %v1330 = vadd.f32 %v1265, %v1310
      %v1331 = vadd.f32 %v1266, %v1311
      %v1332 = vadd.f32 %v1267, %v1312
      %v1333 = vadd.f32 %v1268, %v1313
      %v1334 = vadd.f32 %v1269, %v1314
      %v1335 = vadd.f32 %v1270, %v1315
      %v1336 = vadd.f32 %v1271, %v1316
      %v1337 = vadd.f32 %v1272, %v1317
      %v1338 = vadd.f32 %v1273, %v1318
      %v1339 = vadd.f32 %v1274, %v1319
      %v1340 = vadd.f32 %v1275, %v1320
      %v1341 = vadd.f32 %v1276, %v1321
      %v1342 = vadd.f32 %v1277, %v1322
      %v1343 = vadd.f32 %v1278, %v1323
      %v1344 = vadd.f32 %v1279, %v1324
      %v1345 = vadd.f32 %v1280, %v1325
      %v1346 = vadd.f32 %v1281, %v1326
      %v1347 = vadd.f32 %v1282, %v1327
      %v1348 = vld [vmem:[%s1283 + $0x1] sm:$0xff]
      %v1349 = vld [vmem:[%s1283 + $0x9] sm:$0xff]
      %v1350 = vld [vmem:[%s1283 + $0x19] sm:$0xff]
      %v1351 = vld [vmem:[%s1283 + $0x21] sm:$0xff]
      %v1352 = vld [vmem:[%s1283 + $0x31] sm:$0xff]
      %v1353 = vld [vmem:[%s1283 + $0x39] sm:$0xff]
      %v1354 = vld [vmem:[%s1283 + $0x49] sm:$0xff]
      %v1355 = vld [vmem:[%s1283 + $0x51] sm:$0xff]
      %v1356 = vld [vmem:[%s1283 + $0x61] sm:$0xff]
      %v1357 = vld [vmem:[%s1283 + $0x69] sm:$0xff]
      %v1358 = vld [vmem:[%s1283 + $0x79] sm:$0xff]
      %v1359 = vld [vmem:[%s1283 + $0x81] sm:$0xff]
      %v1360 = vld [vmem:[%s1283 + $0x91] sm:$0xff]
      %v1361 = vld [vmem:[%s1283 + $0x99] sm:$0xff]
      %v1362 = vld [vmem:[%s1283 + $0xa9] sm:$0xff]
      %v1363 = vld [vmem:[%s1283 + $0xb1] sm:$0xff]
      %v1364 = vld [vmem:[%s1283 + $0xc1] sm:$0xff]
      %v1365 = vld [vmem:[%s1283 + $0xc9] sm:$0xff]
      %v1366 = vld [vmem:[%s1283 + $0xd9] sm:$0xff]
      %v1367 = vld [vmem:[%s1283 + $0xe1] sm:$0xff]
      %v1368 = vlaneseq
      %v1369 = vshrl.u32 %v1368, 7
      %v1370 = vsub.s32 7, %v1369
      %v1371 = vrot.slane %v916, %v1370
      %v1372 = vmul.f32 %v1348, %v1371
      %v1373 = vmul.f32 %v1349, %v1371
      %v1374 = vmul.f32 %v1350, %v1371
      %v1375 = vmul.f32 %v1351, %v1371
      %v1376 = vmul.f32 %v1352, %v1371
      %v1377 = vmul.f32 %v1353, %v1371
      %v1378 = vmul.f32 %v1354, %v1371
      %v1379 = vmul.f32 %v1355, %v1371
      %v1380 = vmul.f32 %v1356, %v1371
      %v1381 = vmul.f32 %v1357, %v1371
      %v1382 = vmul.f32 %v1358, %v1371
      %v1383 = vmul.f32 %v1359, %v1371
      %v1384 = vmul.f32 %v1360, %v1371
      %v1385 = vmul.f32 %v1361, %v1371
      %v1386 = vmul.f32 %v1362, %v1371
      %v1387 = vmul.f32 %v1363, %v1371
      %v1388 = vmul.f32 %v1364, %v1371
      %v1389 = vmul.f32 %v1365, %v1371
      %v1390 = vmul.f32 %v1366, %v1371
      %v1391 = vmul.f32 %v1367, %v1371
      %v1392 = vadd.f32 %v1328, %v1372
      %v1393 = vadd.f32 %v1329, %v1373
      %v1394 = vadd.f32 %v1330, %v1374
      %v1395 = vadd.f32 %v1331, %v1375
      %v1396 = vadd.f32 %v1332, %v1376
      %v1397 = vadd.f32 %v1333, %v1377
      %v1398 = vadd.f32 %v1334, %v1378
      %v1399 = vadd.f32 %v1335, %v1379
      %v1400 = vadd.f32 %v1336, %v1380
      %v1401 = vadd.f32 %v1337, %v1381
      %v1402 = vadd.f32 %v1338, %v1382
      %v1403 = vadd.f32 %v1339, %v1383
      %v1404 = vadd.f32 %v1340, %v1384
      %v1405 = vadd.f32 %v1341, %v1385
      %v1406 = vadd.f32 %v1342, %v1386
      %v1407 = vadd.f32 %v1343, %v1387
      %v1408 = vadd.f32 %v1344, %v1388
      %v1409 = vadd.f32 %v1345, %v1389
      %v1410 = vadd.f32 %v1346, %v1390
      %v1411 = vadd.f32 %v1347, %v1391
      %v1412 = vld [vmem:[%s1283 + $0x2] sm:$0xff]
      %v1413 = vld [vmem:[%s1283 + $0xa] sm:$0xff]
      %v1414 = vld [vmem:[%s1283 + $0x1a] sm:$0xff]
      %v1415 = vld [vmem:[%s1283 + $0x22] sm:$0xff]
      %v1416 = vld [vmem:[%s1283 + $0x32] sm:$0xff]
      %v1417 = vld [vmem:[%s1283 + $0x3a] sm:$0xff]
      %v1418 = vld [vmem:[%s1283 + $0x4a] sm:$0xff]
      %v1419 = vld [vmem:[%s1283 + $0x52] sm:$0xff]
      %v1420 = vld [vmem:[%s1283 + $0x62] sm:$0xff]
      %v1421 = vld [vmem:[%s1283 + $0x6a] sm:$0xff]
      %v1422 = vld [vmem:[%s1283 + $0x7a] sm:$0xff]
      %v1423 = vld [vmem:[%s1283 + $0x82] sm:$0xff]
      %v1424 = vld [vmem:[%s1283 + $0x92] sm:$0xff]
      %v1425 = vld [vmem:[%s1283 + $0x9a] sm:$0xff]
      %v1426 = vld [vmem:[%s1283 + $0xaa] sm:$0xff]
      %v1427 = vld [vmem:[%s1283 + $0xb2] sm:$0xff]
      %v1428 = vld [vmem:[%s1283 + $0xc2] sm:$0xff]
      %v1429 = vld [vmem:[%s1283 + $0xca] sm:$0xff]
      %v1430 = vld [vmem:[%s1283 + $0xda] sm:$0xff]
      %v1431 = vld [vmem:[%s1283 + $0xe2] sm:$0xff]
      %v1432 = vlaneseq
      %v1433 = vshrl.u32 %v1432, 7
      %v1434 = vsub.s32 0, %v1433
      %v1435 = vrot.slane %v917, %v1434
      %v1436 = vmul.f32 %v1412, %v1435
      %v1437 = vmul.f32 %v1413, %v1435
      %v1438 = vmul.f32 %v1414, %v1435
      %v1439 = vmul.f32 %v1415, %v1435
      %v1440 = vmul.f32 %v1416, %v1435
      %v1441 = vmul.f32 %v1417, %v1435
      %v1442 = vmul.f32 %v1418, %v1435
      %v1443 = vmul.f32 %v1419, %v1435
      %v1444 = vmul.f32 %v1420, %v1435
      %v1445 = vmul.f32 %v1421, %v1435
      %v1446 = vmul.f32 %v1422, %v1435
      %v1447 = vmul.f32 %v1423, %v1435
      %v1448 = vmul.f32 %v1424, %v1435
      %v1449 = vmul.f32 %v1425, %v1435
      %v1450 = vmul.f32 %v1426, %v1435
      %v1451 = vmul.f32 %v1427, %v1435
      %v1452 = vmul.f32 %v1428, %v1435
      %v1453 = vmul.f32 %v1429, %v1435
      %v1454 = vmul.f32 %v1430, %v1435
      %v1455 = vmul.f32 %v1431, %v1435
      %v1456 = vadd.f32 %v1392, %v1436
      %v1457 = vadd.f32 %v1393, %v1437
      %v1458 = vadd.f32 %v1394, %v1438
      %v1459 = vadd.f32 %v1395, %v1439
      %v1460 = vadd.f32 %v1396, %v1440
      %v1461 = vadd.f32 %v1397, %v1441
      %v1462 = vadd.f32 %v1398, %v1442
      %v1463 = vadd.f32 %v1399, %v1443
      %v1464 = vadd.f32 %v1400, %v1444
      %v1465 = vadd.f32 %v1401, %v1445
      %v1466 = vadd.f32 %v1402, %v1446
      %v1467 = vadd.f32 %v1403, %v1447
      %v1468 = vadd.f32 %v1404, %v1448
      %v1469 = vadd.f32 %v1405, %v1449
      %v1470 = vadd.f32 %v1406, %v1450
      %v1471 = vadd.f32 %v1407, %v1451
      %v1472 = vadd.f32 %v1408, %v1452
      %v1473 = vadd.f32 %v1409, %v1453
      %v1474 = vadd.f32 %v1410, %v1454
      %v1475 = vadd.f32 %v1411, %v1455
      %v1476 = vld [vmem:[%s5] sm:$0x1]
      %v1478 = vlaneseq
      %v1479 = vshrl.u32 %v1478, 7
      %v1480 = vsub.s32 0, %v1479
      %v1481 = vrot.slane %v1476, %v1480
      %v1483 = vmul.f32 %v1456, %v1481
      %v1484 = vmul.f32 %v1457, %v1481
      %v1485 = vmul.f32 %v1458, %v1481
      %v1486 = vmul.f32 %v1459, %v1481
      %v1487 = vmul.f32 %v1460, %v1481
      %v1488 = vmul.f32 %v1461, %v1481
      %v1489 = vmul.f32 %v1462, %v1481
      %v1490 = vmul.f32 %v1463, %v1481
      %v1491 = vmul.f32 %v1464, %v1481
      %v1492 = vmul.f32 %v1465, %v1481
      %v1493 = vmul.f32 %v1466, %v1481
      %v1494 = vmul.f32 %v1467, %v1481
      %v1495 = vmul.f32 %v1468, %v1481
      %v1496 = vmul.f32 %v1469, %v1481
      %v1497 = vmul.f32 %v1470, %v1481
      %v1498 = vmul.f32 %v1471, %v1481
      %v1499 = vmul.f32 %v1472, %v1481
      %v1500 = vmul.f32 %v1473, %v1481
      %v1501 = vmul.f32 %v1474, %v1481
      %v1502 = vmul.f32 %v1475, %v1481
      %v1503 = vld [vmem:[%s6] sm:$0x1]
      %v1505 = vlaneseq
      %v1506 = vshrl.u32 %v1505, 7
      %v1507 = vsub.s32 0, %v1506
      %v1508 = vrot.slane %v1503, %v1507
      %v1510 = vadd.f32 %v1483, %v1508
      %v1511 = vadd.f32 %v1484, %v1508
      %v1512 = vadd.f32 %v1485, %v1508
      %v1513 = vadd.f32 %v1486, %v1508
      %v1514 = vadd.f32 %v1487, %v1508
      %v1515 = vadd.f32 %v1488, %v1508
      %v1516 = vadd.f32 %v1489, %v1508
      %v1517 = vadd.f32 %v1490, %v1508
      %v1518 = vadd.f32 %v1491, %v1508
      %v1519 = vadd.f32 %v1492, %v1508
      %v1520 = vadd.f32 %v1493, %v1508
      %v1521 = vadd.f32 %v1494, %v1508
      %v1522 = vadd.f32 %v1495, %v1508
      %v1523 = vadd.f32 %v1496, %v1508
      %v1524 = vadd.f32 %v1497, %v1508
      %v1525 = vadd.f32 %v1498, %v1508
      %v1526 = vadd.f32 %v1499, %v1508
      %v1527 = vadd.f32 %v1500, %v1508
      %v1528 = vadd.f32 %v1501, %v1508
      %v1529 = vadd.f32 %v1502, %v1508
      %v1530 = vmax.f32 %v1510, 0.0
      %v1531 = vmax.f32 %v1511, 0.0
      %v1532 = vmax.f32 %v1512, 0.0
      %v1533 = vmax.f32 %v1513, 0.0
      %v1534 = vmax.f32 %v1514, 0.0
      %v1535 = vmax.f32 %v1515, 0.0
      %v1536 = vmax.f32 %v1516, 0.0
      %v1537 = vmax.f32 %v1517, 0.0
      %v1538 = vmax.f32 %v1518, 0.0
      %v1539 = vmax.f32 %v1519, 0.0
      %v1540 = vmax.f32 %v1520, 0.0
      %v1541 = vmax.f32 %v1521, 0.0
      %v1542 = vmax.f32 %v1522, 0.0
      %v1543 = vmax.f32 %v1523, 0.0
      %v1544 = vmax.f32 %v1524, 0.0
      %v1545 = vmax.f32 %v1525, 0.0
      %v1546 = vmax.f32 %v1526, 0.0
      %v1547 = vmax.f32 %v1527, 0.0
      %v1548 = vmax.f32 %v1528, 0.0
      %v1549 = vmax.f32 %v1529, 0.0
      %v1550 = vld [vmem:[%s7] sm:$0xff]
      %v1551 = vld [vmem:[%s7 + $0x8] sm:$0xff]
      %v1553 = vsel %vm505, %v1530, 0
      %v1556 = vsel %vm505, %v1531, 0
      %v1559 = vsel %vm505, %v1532, 0
      %v1562 = vsel %vm505, %v1533, 0
      %v1565 = vsel %vm505, %v1534, 0
      %v1568 = vsel %vm505, %v1535, 0
      %v1571 = vsel %vm505, %v1536, 0
      %v1574 = vsel %vm505, %v1537, 0
      %v1577 = vsel %vm505, %v1538, 0
      %v1580 = vsel %vm505, %v1539, 0
      %v1583 = vsel %vm505, %v1540, 0
      %v1586 = vsel %vm505, %v1541, 0
      %v1589 = vsel %vm505, %v1542, 0
      %v1592 = vsel %vm505, %v1543, 0
      %v1595 = vsel %vm505, %v1544, 0
      %v1598 = vsel %vm505, %v1545, 0
      %v1601 = vsel %vm505, %v1546, 0
      %v1604 = vsel %vm505, %v1547, 0
      %v1607 = vsel %vm505, %v1548, 0
      %v1610 = vsel %vm505, %v1549, 0
      %1612 = vmatprep.subr.mxu0 0.0
      %1613 = vmatpush1.msra.mxu0 0.0
      %1614 = vmatprep.subr.mxu0 0.0
      %1615 = vmatpush1.msra.mxu0 0.0
      %1616 = vmatprep.subr.mxu0 0.0
      %1617 = vmatpush1.msra.mxu0 0.0
      %1618 = vmatprep.subr.mxu0 0.0
      %1619 = vmatpush1.msra.mxu0 0.0
      %1620 = vmatprep.subr.mxu0 0.0
      %1621 = vmatpush1.msra.mxu0 0.0
      %1622 = vmatprep.subr.mxu0 0.0
      %1623 = vmatpush1.msra.mxu0 0.0
      %1624 = vmatprep.subr.mxu0 0.0
      %1625 = vmatpush1.msra.mxu0 0.0
      %1626 = vmatprep.subr.mxu0 0.0
      %1627 = vmatpush1.msra.mxu0 0.0
      %1628 = vmatprep.subr.mxu0 0.0
      %1629 = vmatpush1.msra.mxu0 0.0
      %1630 = vmatprep.subr.mxu0 0.0
      %1631 = vmatpush1.msra.mxu0 0.0
      %1632 = vmatprep.subr.mxu0 0.0
      %1633 = vmatpush1.msra.mxu0 0.0
      %1634 = vmatprep.subr.mxu0 0.0
      %1635 = vmatpush1.msra.mxu0 0.0
      %1636 = vmatprep.subr.mxu0 0.0
      %1637 = vmatpush1.msra.mxu0 0.0
      %1638 = vmatprep.subr.mxu0 0.0
      %1639 = vmatpush1.msra.mxu0 0.0
      %1640 = vmatprep.subr.mxu0 0.0
      %1641 = vmatpush1.msra.mxu0 0.0
      %1642 = vmatprep.subr.mxu0 0.0
      %1643 = vmatpush1.msra.mxu0 %v1551
      %1644 = vmatprep.subr.mxu0 0.0
      %1645 = vmatpush2.msra.mxu0 0.0
      %1646 = vmatprep.subr.mxu0 0.0
      %1647 = vmatpush2.msra.mxu0 0.0
      %1648 = vmatprep.subr.mxu0 0.0
      %1649 = vmatpush2.msra.mxu0 0.0
      %1650 = vmatprep.subr.mxu0 0.0
      %1651 = vmatpush2.msra.mxu0 0.0
      %1652 = vmatprep.subr.mxu0 0.0
      %1653 = vmatpush2.msra.mxu0 0.0
      %1654 = vmatprep.subr.mxu0 0.0
      %1655 = vmatpush2.msra.mxu0 0.0
      %1656 = vmatprep.subr.mxu0 0.0
      %1657 = vmatpush2.msra.mxu0 0.0
      %1658 = vmatprep.subr.mxu0 0.0
      %1659 = vmatpush2.msra.mxu0 0.0
      %1660 = vmatprep.subr.mxu0 0.0
      %1661 = vmatpush2.msra.mxu0 0.0
      %1662 = vmatprep.subr.mxu0 0.0
      %1663 = vmatpush2.msra.mxu0 0.0
      %1664 = vmatprep.subr.mxu0 0.0
      %1665 = vmatpush2.msra.mxu0 0.0
      %1666 = vmatprep.subr.mxu0 0.0
      %1667 = vmatpush2.msra.mxu0 0.0
      %1668 = vmatprep.subr.mxu0 0.0
      %1669 = vmatpush2.msra.mxu0 0.0
      %1670 = vmatprep.subr.mxu0 0.0
      %1671 = vmatpush2.msra.mxu0 0.0
      %1672 = vmatprep.subr.mxu0 0.0
      %1673 = vmatpush2.msra.mxu0 0.0
      %1674 = vmatprep.subr.mxu0 0.0
      %1675 = vmatpush2.msra.mxu0 0.0
      %1676 = vmatprep.mubr.f32.mxu0 0.0
      %1677 = vmatmul.mubr.f32.gmra.mxu0 %v1553
      %v1678 = vpop.f32.mrf.mxu0
      %v1679 = vadd.f32 0.0, %v1678
      %v1680 = vpop.f32.mrf.mxu0
      %1681 = vmatprep.mubr.f32.mxu0 0.0
      %1682 = vmatmul.mubr.f32.gmra.mxu0 %v1556
      %v1683 = vpop.f32.mrf.mxu0
      %v1684 = vadd.f32 0.0, %v1683
      %v1685 = vpop.f32.mrf.mxu0
      %1686 = vmatprep.mubr.f32.mxu0 0.0
      %1687 = vmatmul.mubr.f32.gmra.mxu0 %v1559
      %v1688 = vpop.f32.mrf.mxu0
      %v1689 = vadd.f32 0.0, %v1688
      %v1690 = vpop.f32.mrf.mxu0
      %1691 = vmatprep.mubr.f32.mxu0 0.0
      %1692 = vmatmul.mubr.f32.gmra.mxu0 %v1562
      %v1693 = vpop.f32.mrf.mxu0
      %v1694 = vadd.f32 0.0, %v1693
      %v1695 = vpop.f32.mrf.mxu0
      %1696 = vmatprep.mubr.f32.mxu0 0.0
      %1697 = vmatmul.mubr.f32.gmra.mxu0 %v1565
      %v1698 = vpop.f32.mrf.mxu0
      %v1699 = vadd.f32 0.0, %v1698
      %v1700 = vpop.f32.mrf.mxu0
      %1701 = vmatprep.mubr.f32.mxu0 0.0
      %1702 = vmatmul.mubr.f32.gmra.mxu0 %v1568
      %v1703 = vpop.f32.mrf.mxu0
      %v1704 = vadd.f32 0.0, %v1703
      %v1705 = vpop.f32.mrf.mxu0
      %1706 = vmatprep.mubr.f32.mxu0 0.0
      %1707 = vmatmul.mubr.f32.gmra.mxu0 %v1571
      %v1708 = vpop.f32.mrf.mxu0
      %v1709 = vadd.f32 0.0, %v1708
      %v1710 = vpop.f32.mrf.mxu0
      %1711 = vmatprep.mubr.f32.mxu0 0.0
      %1712 = vmatmul.mubr.f32.gmra.mxu0 %v1574
      %v1713 = vpop.f32.mrf.mxu0
      %v1714 = vadd.f32 0.0, %v1713
      %v1715 = vpop.f32.mrf.mxu0
      %1716 = vmatprep.mubr.f32.mxu0 0.0
      %1717 = vmatmul.mubr.f32.gmra.mxu0 %v1577
      %v1718 = vpop.f32.mrf.mxu0
      %v1719 = vadd.f32 0.0, %v1718
      %v1720 = vpop.f32.mrf.mxu0
      %1721 = vmatprep.mubr.f32.mxu0 0.0
      %1722 = vmatmul.mubr.f32.gmra.mxu0 %v1580
      %v1723 = vpop.f32.mrf.mxu0
      %v1724 = vadd.f32 0.0, %v1723
      %v1725 = vpop.f32.mrf.mxu0
      %1726 = vmatprep.mubr.f32.mxu0 0.0
      %1727 = vmatmul.mubr.f32.gmra.mxu0 %v1583
      %v1728 = vpop.f32.mrf.mxu0
      %v1729 = vadd.f32 0.0, %v1728
      %v1730 = vpop.f32.mrf.mxu0
      %1731 = vmatprep.mubr.f32.mxu0 0.0
      %1732 = vmatmul.mubr.f32.gmra.mxu0 %v1586
      %v1733 = vpop.f32.mrf.mxu0
      %v1734 = vadd.f32 0.0, %v1733
      %v1735 = vpop.f32.mrf.mxu0
      %1736 = vmatprep.mubr.f32.mxu0 0.0
      %1737 = vmatmul.mubr.f32.gmra.mxu0 %v1589
      %v1738 = vpop.f32.mrf.mxu0
      %v1739 = vadd.f32 0.0, %v1738
      %v1740 = vpop.f32.mrf.mxu0
      %1741 = vmatprep.mubr.f32.mxu0 0.0
      %1742 = vmatmul.mubr.f32.gmra.mxu0 %v1592
      %v1743 = vpop.f32.mrf.mxu0
      %v1744 = vadd.f32 0.0, %v1743
      %v1745 = vpop.f32.mrf.mxu0
      %1746 = vmatprep.mubr.f32.mxu0 0.0
      %1747 = vmatmul.mubr.f32.gmra.mxu0 %v1595
      %v1748 = vpop.f32.mrf.mxu0
      %v1749 = vadd.f32 0.0, %v1748
      %v1750 = vpop.f32.mrf.mxu0
      %1751 = vmatprep.mubr.f32.mxu0 0.0
      %1752 = vmatmul.mubr.f32.gmra.mxu0 %v1598
      %v1753 = vpop.f32.mrf.mxu0
      %v1754 = vadd.f32 0.0, %v1753
      %v1755 = vpop.f32.mrf.mxu0
      %1756 = vmatprep.mubr.f32.mxu0 0.0
      %1757 = vmatmul.mubr.f32.gmra.mxu0 %v1601
      %v1758 = vpop.f32.mrf.mxu0
      %v1759 = vadd.f32 0.0, %v1758
      %v1760 = vpop.f32.mrf.mxu0
      %1761 = vmatprep.mubr.f32.mxu0 0.0
      %1762 = vmatmul.mubr.f32.gmra.mxu0 %v1604
      %v1763 = vpop.f32.mrf.mxu0
      %v1764 = vadd.f32 0.0, %v1763
      %v1765 = vpop.f32.mrf.mxu0
      %1766 = vmatprep.mubr.f32.mxu0 0.0
      %1767 = vmatmul.mubr.f32.gmra.mxu0 %v1607
      %v1768 = vpop.f32.mrf.mxu0
      %v1769 = vadd.f32 0.0, %v1768
      %v1770 = vpop.f32.mrf.mxu0
      %1771 = vmatprep.mubr.f32.mxu0 0.0
      %1772 = vmatmul.mubr.f32.gmra.mxu0 %v1610
      %v1773 = vpop.f32.mrf.mxu0
      %v1774 = vadd.f32 0.0, %v1773
      %v1775 = vpop.f32.mrf.mxu0
      %1776 = vdwg.mxu0
      %v1778 = vsel %vm505, %v827, 0
      %v1781 = vsel %vm505, %v828, 0
      %v1784 = vsel %vm505, %v829, 0
      %v1787 = vsel %vm505, %v830, 0
      %v1790 = vsel %vm505, %v831, 0
      %v1793 = vsel %vm505, %v832, 0
      %v1796 = vsel %vm505, %v833, 0
      %v1799 = vsel %vm505, %v834, 0
      %v1802 = vsel %vm505, %v835, 0
      %v1805 = vsel %vm505, %v836, 0
      %v1808 = vsel %vm505, %v837, 0
      %v1811 = vsel %vm505, %v838, 0
      %v1814 = vsel %vm505, %v839, 0
      %v1817 = vsel %vm505, %v840, 0
      %v1820 = vsel %vm505, %v841, 0
      %v1823 = vsel %vm505, %v842, 0
      %v1826 = vsel %vm505, %v843, 0
      %v1829 = vsel %vm505, %v844, 0
      %v1832 = vsel %vm505, %v845, 0
      %v1835 = vsel %vm505, %v846, 0
      %1837 = vmatprep.subr.mxu0 0.0
      %1838 = vmatpush1.msra.mxu0 0.0
      %1839 = vmatprep.subr.mxu0 0.0
      %1840 = vmatpush1.msra.mxu0 0.0
      %1841 = vmatprep.subr.mxu0 0.0
      %1842 = vmatpush1.msra.mxu0 0.0
      %1843 = vmatprep.subr.mxu0 0.0
      %1844 = vmatpush1.msra.mxu0 0.0
      %1845 = vmatprep.subr.mxu0 0.0
      %1846 = vmatpush1.msra.mxu0 0.0
      %1847 = vmatprep.subr.mxu0 0.0
      %1848 = vmatpush1.msra.mxu0 0.0
      %1849 = vmatprep.subr.mxu0 0.0
      %1850 = vmatpush1.msra.mxu0 0.0
      %1851 = vmatprep.subr.mxu0 0.0
      %1852 = vmatpush1.msra.mxu0 0.0
      %1853 = vmatprep.subr.mxu0 0.0
      %1854 = vmatpush1.msra.mxu0 0.0
      %1855 = vmatprep.subr.mxu0 0.0
      %1856 = vmatpush1.msra.mxu0 0.0
      %1857 = vmatprep.subr.mxu0 0.0
      %1858 = vmatpush1.msra.mxu0 0.0
      %1859 = vmatprep.subr.mxu0 0.0
      %1860 = vmatpush1.msra.mxu0 0.0
      %1861 = vmatprep.subr.mxu0 0.0
      %1862 = vmatpush1.msra.mxu0 0.0
      %1863 = vmatprep.subr.mxu0 0.0
      %1864 = vmatpush1.msra.mxu0 0.0
      %1865 = vmatprep.subr.mxu0 0.0
      %1866 = vmatpush1.msra.mxu0 0.0
      %1867 = vmatprep.subr.mxu0 0.0
      %1868 = vmatpush1.msra.mxu0 %v1550
      %1869 = vmatprep.subr.mxu0 0.0
      %1870 = vmatpush2.msra.mxu0 0.0
      %1871 = vmatprep.subr.mxu0 0.0
      %1872 = vmatpush2.msra.mxu0 0.0
      %1873 = vmatprep.subr.mxu0 0.0
      %1874 = vmatpush2.msra.mxu0 0.0
      %1875 = vmatprep.subr.mxu0 0.0
      %1876 = vmatpush2.msra.mxu0 0.0
      %1877 = vmatprep.subr.mxu0 0.0
      %1878 = vmatpush2.msra.mxu0 0.0
      %1879 = vmatprep.subr.mxu0 0.0
      %1880 = vmatpush2.msra.mxu0 0.0
      %1881 = vmatprep.subr.mxu0 0.0
      %1882 = vmatpush2.msra.mxu0 0.0
      %1883 = vmatprep.subr.mxu0 0.0
      %1884 = vmatpush2.msra.mxu0 0.0
      %1885 = vmatprep.subr.mxu0 0.0
      %1886 = vmatpush2.msra.mxu0 0.0
      %1887 = vmatprep.subr.mxu0 0.0
      %1888 = vmatpush2.msra.mxu0 0.0
      %1889 = vmatprep.subr.mxu0 0.0
      %1890 = vmatpush2.msra.mxu0 0.0
      %1891 = vmatprep.subr.mxu0 0.0
      %1892 = vmatpush2.msra.mxu0 0.0
      %1893 = vmatprep.subr.mxu0 0.0
      %1894 = vmatpush2.msra.mxu0 0.0
      %1895 = vmatprep.subr.mxu0 0.0
      %1896 = vmatpush2.msra.mxu0 0.0
      %1897 = vmatprep.subr.mxu0 0.0
      %1898 = vmatpush2.msra.mxu0 0.0
      %1899 = vmatprep.subr.mxu0 0.0
      %1900 = vmatpush2.msra.mxu0 0.0
      %1901 = vmatprep.mubr.f32.mxu0 0.0
      %1902 = vmatmul.mubr.f32.gmra.mxu0 %v1778
      %v1903 = vpop.f32.mrf.mxu0
      %v1904 = vadd.f32 %v1679, %v1903
      %v1905 = vpop.f32.mrf.mxu0
      %1906 = vmatprep.mubr.f32.mxu0 0.0
      %1907 = vmatmul.mubr.f32.gmra.mxu0 %v1781
      %v1908 = vpop.f32.mrf.mxu0
      %v1909 = vadd.f32 %v1684, %v1908
      %v1910 = vpop.f32.mrf.mxu0
      %1911 = vmatprep.mubr.f32.mxu0 0.0
      %1912 = vmatmul.mubr.f32.gmra.mxu0 %v1784
      %v1913 = vpop.f32.mrf.mxu0
      %v1914 = vadd.f32 %v1689, %v1913
      %v1915 = vpop.f32.mrf.mxu0
      %1916 = vmatprep.mubr.f32.mxu0 0.0
      %1917 = vmatmul.mubr.f32.gmra.mxu0 %v1787
      %v1918 = vpop.f32.mrf.mxu0
      %v1919 = vadd.f32 %v1694, %v1918
      %v1920 = vpop.f32.mrf.mxu0
      %1921 = vmatprep.mubr.f32.mxu0 0.0
      %1922 = vmatmul.mubr.f32.gmra.mxu0 %v1790
      %v1923 = vpop.f32.mrf.mxu0
      %v1924 = vadd.f32 %v1699, %v1923
      %v1925 = vpop.f32.mrf.mxu0
      %1926 = vmatprep.mubr.f32.mxu0 0.0
      %1927 = vmatmul.mubr.f32.gmra.mxu0 %v1793
      %v1928 = vpop.f32.mrf.mxu0
      %v1929 = vadd.f32 %v1704, %v1928
      %v1930 = vpop.f32.mrf.mxu0
      %1931 = vmatprep.mubr.f32.mxu0 0.0
      %1932 = vmatmul.mubr.f32.gmra.mxu0 %v1796
      %v1933 = vpop.f32.mrf.mxu0
      %v1934 = vadd.f32 %v1709, %v1933
      %v1935 = vpop.f32.mrf.mxu0
      %1936 = vmatprep.mubr.f32.mxu0 0.0
      %1937 = vmatmul.mubr.f32.gmra.mxu0 %v1799
      %v1938 = vpop.f32.mrf.mxu0
      %v1939 = vadd.f32 %v1714, %v1938
      %v1940 = vpop.f32.mrf.mxu0
      %1941 = vmatprep.mubr.f32.mxu0 0.0
      %1942 = vmatmul.mubr.f32.gmra.mxu0 %v1802
      %v1943 = vpop.f32.mrf.mxu0
      %v1944 = vadd.f32 %v1719, %v1943
      %v1945 = vpop.f32.mrf.mxu0
      %1946 = vmatprep.mubr.f32.mxu0 0.0
      %1947 = vmatmul.mubr.f32.gmra.mxu0 %v1805
      %v1948 = vpop.f32.mrf.mxu0
      %v1949 = vadd.f32 %v1724, %v1948
      %v1950 = vpop.f32.mrf.mxu0
      %1951 = vmatprep.mubr.f32.mxu0 0.0
      %1952 = vmatmul.mubr.f32.gmra.mxu0 %v1808
      %v1953 = vpop.f32.mrf.mxu0
      %v1954 = vadd.f32 %v1729, %v1953
      %v1955 = vpop.f32.mrf.mxu0
      %1956 = vmatprep.mubr.f32.mxu0 0.0
      %1957 = vmatmul.mubr.f32.gmra.mxu0 %v1811
      %v1958 = vpop.f32.mrf.mxu0
      %v1959 = vadd.f32 %v1734, %v1958
      %v1960 = vpop.f32.mrf.mxu0
      %1961 = vmatprep.mubr.f32.mxu0 0.0
      %1962 = vmatmul.mubr.f32.gmra.mxu0 %v1814
      %v1963 = vpop.f32.mrf.mxu0
      %v1964 = vadd.f32 %v1739, %v1963
      %v1965 = vpop.f32.mrf.mxu0
      %1966 = vmatprep.mubr.f32.mxu0 0.0
      %1967 = vmatmul.mubr.f32.gmra.mxu0 %v1817
      %v1968 = vpop.f32.mrf.mxu0
      %v1969 = vadd.f32 %v1744, %v1968
      %v1970 = vpop.f32.mrf.mxu0
      %1971 = vmatprep.mubr.f32.mxu0 0.0
      %1972 = vmatmul.mubr.f32.gmra.mxu0 %v1820
      %v1973 = vpop.f32.mrf.mxu0
      %v1974 = vadd.f32 %v1749, %v1973
      %v1975 = vpop.f32.mrf.mxu0
      %1976 = vmatprep.mubr.f32.mxu0 0.0
      %1977 = vmatmul.mubr.f32.gmra.mxu0 %v1823
      %v1978 = vpop.f32.mrf.mxu0
      %v1979 = vadd.f32 %v1754, %v1978
      %v1980 = vpop.f32.mrf.mxu0
      %1981 = vmatprep.mubr.f32.mxu0 0.0
      %1982 = vmatmul.mubr.f32.gmra.mxu0 %v1826
      %v1983 = vpop.f32.mrf.mxu0
      %v1984 = vadd.f32 %v1759, %v1983
      %v1985 = vpop.f32.mrf.mxu0
      %1986 = vmatprep.mubr.f32.mxu0 0.0
      %1987 = vmatmul.mubr.f32.gmra.mxu0 %v1829
      %v1988 = vpop.f32.mrf.mxu0
      %v1989 = vadd.f32 %v1764, %v1988
      %v1990 = vpop.f32.mrf.mxu0
      %1991 = vmatprep.mubr.f32.mxu0 0.0
      %1992 = vmatmul.mubr.f32.gmra.mxu0 %v1832
      %v1993 = vpop.f32.mrf.mxu0
      %v1994 = vadd.f32 %v1769, %v1993
      %v1995 = vpop.f32.mrf.mxu0
      %1996 = vmatprep.mubr.f32.mxu0 0.0
      %1997 = vmatmul.mubr.f32.gmra.mxu0 %v1835
      %v1998 = vpop.f32.mrf.mxu0
      %v1999 = vadd.f32 %v1774, %v1998
      %v2000 = vpop.f32.mrf.mxu0
      %2001 = vdwg.mxu0
      %v2002 = vld [vmem:[%s8] sm:$0x1]
      %v2004 = vlaneseq
      %v2005 = vshrl.u32 %v2004, 7
      %v2006 = vsub.s32 0, %v2005
      %v2007 = vrot.slane %v2002, %v2006
      %v2009 = vmul.f32 %v1904, %v2007
      %v2010 = vmul.f32 %v1909, %v2007
      %v2011 = vmul.f32 %v1914, %v2007
      %v2012 = vmul.f32 %v1919, %v2007
      %v2013 = vmul.f32 %v1924, %v2007
      %v2014 = vmul.f32 %v1929, %v2007
      %v2015 = vmul.f32 %v1934, %v2007
      %v2016 = vmul.f32 %v1939, %v2007
      %v2017 = vmul.f32 %v1944, %v2007
      %v2018 = vmul.f32 %v1949, %v2007
      %v2019 = vmul.f32 %v1954, %v2007
      %v2020 = vmul.f32 %v1959, %v2007
      %v2021 = vmul.f32 %v1964, %v2007
      %v2022 = vmul.f32 %v1969, %v2007
      %v2023 = vmul.f32 %v1974, %v2007
      %v2024 = vmul.f32 %v1979, %v2007
      %v2025 = vmul.f32 %v1984, %v2007
      %v2026 = vmul.f32 %v1989, %v2007
      %v2027 = vmul.f32 %v1994, %v2007
      %v2028 = vmul.f32 %v1999, %v2007
      %v2029 = vld [vmem:[%s9] sm:$0x1]
      %v2031 = vlaneseq
      %v2032 = vshrl.u32 %v2031, 7
      %v2033 = vsub.s32 0, %v2032
      %v2034 = vrot.slane %v2029, %v2033
      %v2036 = vadd.f32 %v2009, %v2034
      %v2037 = vadd.f32 %v2010, %v2034
      %v2038 = vadd.f32 %v2011, %v2034
      %v2039 = vadd.f32 %v2012, %v2034
      %v2040 = vadd.f32 %v2013, %v2034
      %v2041 = vadd.f32 %v2014, %v2034
      %v2042 = vadd.f32 %v2015, %v2034
      %v2043 = vadd.f32 %v2016, %v2034
      %v2044 = vadd.f32 %v2017, %v2034
      %v2045 = vadd.f32 %v2018, %v2034
      %v2046 = vadd.f32 %v2019, %v2034
      %v2047 = vadd.f32 %v2020, %v2034
      %v2048 = vadd.f32 %v2021, %v2034
      %v2049 = vadd.f32 %v2022, %v2034
      %v2050 = vadd.f32 %v2023, %v2034
      %v2051 = vadd.f32 %v2024, %v2034
      %v2052 = vadd.f32 %v2025, %v2034
      %v2053 = vadd.f32 %v2026, %v2034
      %v2054 = vadd.f32 %v2027, %v2034
      %v2055 = vadd.f32 %v2028, %v2034
      %vm2056 = vcmask 24576
      %2057 = vst.msk [vmem:[#allocation3] sm:$0x1] %vm2056, 0.0
      %2058 = vst.msk [vmem:[#allocation3 + $0x18] sm:$0x1] %vm2056, 0.0
      %2059 = vst.msk [vmem:[#allocation3 + $0x30] sm:$0x1] %vm2056, 0.0
      %2060 = vst.msk [vmem:[#allocation3 + $0x48] sm:$0x1] %vm2056, 0.0
      %2061 = vst.msk [vmem:[#allocation3 + $0x60] sm:$0x1] %vm2056, 0.0
      %2062 = vst.msk [vmem:[#allocation3 + $0x78] sm:$0x1] %vm2056, 0.0
      %2063 = vst.msk [vmem:[#allocation3 + $0x90] sm:$0x1] %vm2056, 0.0
      %2064 = vst.msk [vmem:[#allocation3 + $0xa8] sm:$0x1] %vm2056, 0.0
      %2065 = vst.msk [vmem:[#allocation3 + $0xc0] sm:$0x1] %vm2056, 0.0
      %2066 = vst.msk [vmem:[#allocation3 + $0xd8] sm:$0x1] %vm2056, 0.0
      %2067 = vst.msk [vmem:[#allocation3 + $0x11] sm:$0x1] %vm2056, 0.0
      %2068 = vst.msk [vmem:[#allocation3 + $0x29] sm:$0x1] %vm2056, 0.0
      %2069 = vst.msk [vmem:[#allocation3 + $0x41] sm:$0x1] %vm2056, 0.0
      %2070 = vst.msk [vmem:[#allocation3 + $0x59] sm:$0x1] %vm2056, 0.0
      %2071 = vst.msk [vmem:[#allocation3 + $0x71] sm:$0x1] %vm2056, 0.0
      %2072 = vst.msk [vmem:[#allocation3 + $0x89] sm:$0x1] %vm2056, 0.0
      %2073 = vst.msk [vmem:[#allocation3 + $0xa1] sm:$0x1] %vm2056, 0.0
      %2074 = vst.msk [vmem:[#allocation3 + $0xb9] sm:$0x1] %vm2056, 0.0
      %2075 = vst.msk [vmem:[#allocation3 + $0xd1] sm:$0x1] %vm2056, 0.0
      %2076 = vst.msk [vmem:[#allocation3 + $0xe9] sm:$0x1] %vm2056, 0.0
      %vm2077 = vcmask 31744
      %2078 = vst.msk [vmem:[#allocation3 + $0x1] sm:$0xff] %vm2077, %v2036
      %2079 = vst.msk [vmem:[#allocation3 + $0x9] sm:$0xff] %vm2077, %v2037
      %2080 = vst.msk [vmem:[#allocation3 + $0x19] sm:$0xff] %vm2077, %v2038
      %2081 = vst.msk [vmem:[#allocation3 + $0x21] sm:$0xff] %vm2077, %v2039
      %2082 = vst.msk [vmem:[#allocation3 + $0x31] sm:$0xff] %vm2077, %v2040
      %2083 = vst.msk [vmem:[#allocation3 + $0x39] sm:$0xff] %vm2077, %v2041
      %2084 = vst.msk [vmem:[#allocation3 + $0x49] sm:$0xff] %vm2077, %v2042
      %2085 = vst.msk [vmem:[#allocation3 + $0x51] sm:$0xff] %vm2077, %v2043
      %2086 = vst.msk [vmem:[#allocation3 + $0x61] sm:$0xff] %vm2077, %v2044
      %2087 = vst.msk [vmem:[#allocation3 + $0x69] sm:$0xff] %vm2077, %v2045
      %2088 = vst.msk [vmem:[#allocation3 + $0x79] sm:$0xff] %vm2077, %v2046
      %2089 = vst.msk [vmem:[#allocation3 + $0x81] sm:$0xff] %vm2077, %v2047
      %2090 = vst.msk [vmem:[#allocation3 + $0x91] sm:$0xff] %vm2077, %v2048
      %2091 = vst.msk [vmem:[#allocation3 + $0x99] sm:$0xff] %vm2077, %v2049
      %2092 = vst.msk [vmem:[#allocation3 + $0xa9] sm:$0xff] %vm2077, %v2050
      %2093 = vst.msk [vmem:[#allocation3 + $0xb1] sm:$0xff] %vm2077, %v2051
      %2094 = vst.msk [vmem:[#allocation3 + $0xc1] sm:$0xff] %vm2077, %v2052
      %2095 = vst.msk [vmem:[#allocation3 + $0xc9] sm:$0xff] %vm2077, %v2053
      %2096 = vst.msk [vmem:[#allocation3 + $0xd9] sm:$0xff] %vm2077, %v2054
      %2097 = vst.msk [vmem:[#allocation3 + $0xe1] sm:$0xff] %vm2077, %v2055
      // Predicated region
      $region81: #{ghost_bottleneck.1} parent=71 // pred_check
        %p2098 = pneg %p898
      $region82: #{ghost_bottleneck.1} parent=71 // pred_check_branch
        %2100 = sbr.rel (%p2098) target = $region84
      $region83: #{ghost_bottleneck.1} parent=71 // pred_region
        %2101 = vst.msk [vmem:[#allocation3] sm:$0xff] %vm2077, 0.0
        %2102 = vst.msk [vmem:[#allocation3 + $0x8] sm:$0xff] %vm2077, 0.0
        %vm2103 = vcmask 25600
        %2104 = vst.msk [vmem:[#allocation3 + $0x10] sm:$0x3] %vm2103, 0.0
      $region84: #{ghost_bottleneck.1} parent=71 // pred_fallthru
        _
      // Predicated region
      $region85: #{ghost_bottleneck.1} parent=71 // pred_check
        %p2105 = pneg %p907
      $region86: #{ghost_bottleneck.1} parent=71 // pred_check_branch
        %2107 = sbr.rel (%p2105) target = $region88
      $region87: #{ghost_bottleneck.1} parent=71 // pred_region
        %s2108 = scalar_lea.vmem [#allocation3], 216
        %2109 = vst.msk [vmem:[%s2108] sm:$0xff] %vm2077, 0.0
        %2110 = vst.msk [vmem:[%s2108 + $0x8] sm:$0xff] %vm2077, 0.0
        %vm2111 = vcmask 25600
        %2112 = vst.msk [vmem:[%s2108 + $0x10] sm:$0x3] %vm2111, 0.0
      $region88: #{ghost_bottleneck.1} parent=71 // pred_fallthru
        _
      %v2113 = vld [vmem:[%s10] sm:$0xff]
      %v2114 = vld [vmem:[%s10 + $0x8] sm:$0x1]
      %v2115 = vld [vmem:[#allocation3] sm:$0xff]
      %v2116 = vld [vmem:[#allocation3 + $0x8] sm:$0xff]
      %v2117 = vld [vmem:[#allocation3 + $0x18] sm:$0xff]
      %v2118 = vld [vmem:[#allocation3 + $0x20] sm:$0xff]
      %v2119 = vld [vmem:[#allocation3 + $0x30] sm:$0xff]
      %v2120 = vld [vmem:[#allocation3 + $0x38] sm:$0xff]
      %v2121 = vld [vmem:[#allocation3 + $0x48] sm:$0xff]
      %v2122 = vld [vmem:[#allocation3 + $0x50] sm:$0xff]
      %v2123 = vld [vmem:[#allocation3 + $0x60] sm:$0xff]
      %v2124 = vld [vmem:[#allocation3 + $0x68] sm:$0xff]
      %v2125 = vld [vmem:[#allocation3 + $0x78] sm:$0xff]
      %v2126 = vld [vmem:[#allocation3 + $0x80] sm:$0xff]
      %v2127 = vld [vmem:[#allocation3 + $0x90] sm:$0xff]
      %v2128 = vld [vmem:[#allocation3 + $0x98] sm:$0xff]
      %v2129 = vld [vmem:[#allocation3 + $0xa8] sm:$0xff]
      %v2130 = vld [vmem:[#allocation3 + $0xb0] sm:$0xff]
      %v2131 = vlaneseq
      %v2132 = vshrl.u32 %v2131, 7
      %v2133 = vsub.s32 0, %v2132
      %v2134 = vrot.slane %v2113, %v2133
      %v2135 = vmul.f32 %v2115, %v2134
      %v2136 = vmul.f32 %v2116, %v2134
      %v2137 = vmul.f32 %v2117, %v2134
      %v2138 = vmul.f32 %v2118, %v2134
      %v2139 = vmul.f32 %v2119, %v2134
      %v2140 = vmul.f32 %v2120, %v2134
      %v2141 = vmul.f32 %v2121, %v2134
      %v2142 = vmul.f32 %v2122, %v2134
      %v2143 = vmul.f32 %v2123, %v2134
      %v2144 = vmul.f32 %v2124, %v2134
      %v2145 = vmul.f32 %v2125, %v2134
      %v2146 = vmul.f32 %v2126, %v2134
      %v2147 = vmul.f32 %v2127, %v2134
      %v2148 = vmul.f32 %v2128, %v2134
      %v2149 = vmul.f32 %v2129, %v2134
      %v2150 = vmul.f32 %v2130, %v2134
      %v2151 = vld [vmem:[#allocation3 + $0x1] sm:$0xff]
      %v2152 = vld [vmem:[#allocation3 + $0x9] sm:$0xff]
      %v2153 = vld [vmem:[#allocation3 + $0x19] sm:$0xff]
      %v2154 = vld [vmem:[#allocation3 + $0x21] sm:$0xff]
      %v2155 = vld [vmem:[#allocation3 + $0x31] sm:$0xff]
      %v2156 = vld [vmem:[#allocation3 + $0x39] sm:$0xff]
      %v2157 = vld [vmem:[#allocation3 + $0x49] sm:$0xff]
      %v2158 = vld [vmem:[#allocation3 + $0x51] sm:$0xff]
      %v2159 = vld [vmem:[#allocation3 + $0x61] sm:$0xff]
      %v2160 = vld [vmem:[#allocation3 + $0x69] sm:$0xff]
      %v2161 = vld [vmem:[#allocation3 + $0x79] sm:$0xff]
      %v2162 = vld [vmem:[#allocation3 + $0x81] sm:$0xff]
      %v2163 = vld [vmem:[#allocation3 + $0x91] sm:$0xff]
      %v2164 = vld [vmem:[#allocation3 + $0x99] sm:$0xff]
      %v2165 = vld [vmem:[#allocation3 + $0xa9] sm:$0xff]
      %v2166 = vld [vmem:[#allocation3 + $0xb1] sm:$0xff]
      %v2167 = vlaneseq
      %v2168 = vshrl.u32 %v2167, 7
      %v2169 = vsub.s32 1, %v2168
      %v2170 = vrot.slane %v2113, %v2169
      %v2171 = vmul.f32 %v2151, %v2170
      %v2172 = vmul.f32 %v2152, %v2170
      %v2173 = vmul.f32 %v2153, %v2170
      %v2174 = vmul.f32 %v2154, %v2170
      %v2175 = vmul.f32 %v2155, %v2170
      %v2176 = vmul.f32 %v2156, %v2170
      %v2177 = vmul.f32 %v2157, %v2170
      %v2178 = vmul.f32 %v2158, %v2170
      %v2179 = vmul.f32 %v2159, %v2170
      %v2180 = vmul.f32 %v2160, %v2170
      %v2181 = vmul.f32 %v2161, %v2170
      %v2182 = vmul.f32 %v2162, %v2170
      %v2183 = vmul.f32 %v2163, %v2170
      %v2184 = vmul.f32 %v2164, %v2170
      %v2185 = vmul.f32 %v2165, %v2170
      %v2186 = vmul.f32 %v2166, %v2170
      %v2187 = vadd.f32 %v2135, %v2171
      %v2188 = vadd.f32 %v2136, %v2172
      %v2189 = vadd.f32 %v2137, %v2173
      %v2190 = vadd.f32 %v2138, %v2174
      %v2191 = vadd.f32 %v2139, %v2175
      %v2192 = vadd.f32 %v2140, %v2176
      %v2193 = vadd.f32 %v2141, %v2177
      %v2194 = vadd.f32 %v2142, %v2178
      %v2195 = vadd.f32 %v2143, %v2179
      %v2196 = vadd.f32 %v2144, %v2180
      %v2197 = vadd.f32 %v2145, %v2181
      %v2198 = vadd.f32 %v2146, %v2182
      %v2199 = vadd.f32 %v2147, %v2183
      %v2200 = vadd.f32 %v2148, %v2184
      %v2201 = vadd.f32 %v2149, %v2185
      %v2202 = vadd.f32 %v2150, %v2186
      %v2203 = vld [vmem:[#allocation3 + $0x2] sm:$0xff]
      %v2204 = vld [vmem:[#allocation3 + $0xa] sm:$0xff]
      %v2205 = vld [vmem:[#allocation3 + $0x1a] sm:$0xff]
      %v2206 = vld [vmem:[#allocation3 + $0x22] sm:$0xff]
      %v2207 = vld [vmem:[#allocation3 + $0x32] sm:$0xff]
      %v2208 = vld [vmem:[#allocation3 + $0x3a] sm:$0xff]
      %v2209 = vld [vmem:[#allocation3 + $0x4a] sm:$0xff]
      %v2210 = vld [vmem:[#allocation3 + $0x52] sm:$0xff]
      %v2211 = vld [vmem:[#allocation3 + $0x62] sm:$0xff]
      %v2212 = vld [vmem:[#allocation3 + $0x6a] sm:$0xff]
      %v2213 = vld [vmem:[#allocation3 + $0x7a] sm:$0xff]
      %v2214 = vld [vmem:[#allocation3 + $0x82] sm:$0xff]
      %v2215 = vld [vmem:[#allocation3 + $0x92] sm:$0xff]
      %v2216 = vld [vmem:[#allocation3 + $0x9a] sm:$0xff]
      %v2217 = vld [vmem:[#allocation3 + $0xaa] sm:$0xff]
      %v2218 = vld [vmem:[#allocation3 + $0xb2] sm:$0xff]
      %v2219 = vlaneseq
      %v2220 = vshrl.u32 %v2219, 7
      %v2221 = vsub.s32 2, %v2220
      %v2222 = vrot.slane %v2113, %v2221
      %v2223 = vmul.f32 %v2203, %v2222
      %v2224 = vmul.f32 %v2204, %v2222
      %v2225 = vmul.f32 %v2205, %v2222
      %v2226 = vmul.f32 %v2206, %v2222
      %v2227 = vmul.f32 %v2207, %v2222
      %v2228 = vmul.f32 %v2208, %v2222
      %v2229 = vmul.f32 %v2209, %v2222
      %v2230 = vmul.f32 %v2210, %v2222
      %v2231 = vmul.f32 %v2211, %v2222
      %v2232 = vmul.f32 %v2212, %v2222
      %v2233 = vmul.f32 %v2213, %v2222
      %v2234 = vmul.f32 %v2214, %v2222
      %v2235 = vmul.f32 %v2215, %v2222
      %v2236 = vmul.f32 %v2216, %v2222
      %v2237 = vmul.f32 %v2217, %v2222
      %v2238 = vmul.f32 %v2218, %v2222
      %v2239 = vadd.f32 %v2187, %v2223
      %v2240 = vadd.f32 %v2188, %v2224
      %v2241 = vadd.f32 %v2189, %v2225
      %v2242 = vadd.f32 %v2190, %v2226
      %v2243 = vadd.f32 %v2191, %v2227
      %v2244 = vadd.f32 %v2192, %v2228
      %v2245 = vadd.f32 %v2193, %v2229
      %v2246 = vadd.f32 %v2194, %v2230
      %v2247 = vadd.f32 %v2195, %v2231
      %v2248 = vadd.f32 %v2196, %v2232
      %v2249 = vadd.f32 %v2197, %v2233
      %v2250 = vadd.f32 %v2198, %v2234
      %v2251 = vadd.f32 %v2199, %v2235
      %v2252 = vadd.f32 %v2200, %v2236
      %v2253 = vadd.f32 %v2201, %v2237
      %v2254 = vadd.f32 %v2202, %v2238
      %s2255 = scalar_lea.vmem [#allocation3], 24
      %v2256 = vld [vmem:[%s2255] sm:$0xff]
      %v2257 = vld [vmem:[%s2255 + $0x8] sm:$0xff]
      %v2258 = vld [vmem:[%s2255 + $0x18] sm:$0xff]
      %v2259 = vld [vmem:[%s2255 + $0x20] sm:$0xff]
      %v2260 = vld [vmem:[%s2255 + $0x30] sm:$0xff]
      %v2261 = vld [vmem:[%s2255 + $0x38] sm:$0xff]
      %v2262 = vld [vmem:[%s2255 + $0x48] sm:$0xff]
      %v2263 = vld [vmem:[%s2255 + $0x50] sm:$0xff]
      %v2264 = vld [vmem:[%s2255 + $0x60] sm:$0xff]
      %v2265 = vld [vmem:[%s2255 + $0x68] sm:$0xff]
      %v2266 = vld [vmem:[%s2255 + $0x78] sm:$0xff]
      %v2267 = vld [vmem:[%s2255 + $0x80] sm:$0xff]
      %v2268 = vld [vmem:[%s2255 + $0x90] sm:$0xff]
      %v2269 = vld [vmem:[%s2255 + $0x98] sm:$0xff]
      %v2270 = vld [vmem:[%s2255 + $0xa8] sm:$0xff]
      %v2271 = vld [vmem:[%s2255 + $0xb0] sm:$0xff]
      %v2272 = vlaneseq
      %v2273 = vshrl.u32 %v2272, 7
      %v2274 = vsub.s32 3, %v2273
      %v2275 = vrot.slane %v2113, %v2274
      %v2276 = vmul.f32 %v2256, %v2275
      %v2277 = vmul.f32 %v2257, %v2275
      %v2278 = vmul.f32 %v2258, %v2275
      %v2279 = vmul.f32 %v2259, %v2275
      %v2280 = vmul.f32 %v2260, %v2275
      %v2281 = vmul.f32 %v2261, %v2275
      %v2282 = vmul.f32 %v2262, %v2275
      %v2283 = vmul.f32 %v2263, %v2275
      %v2284 = vmul.f32 %v2264, %v2275
      %v2285 = vmul.f32 %v2265, %v2275
      %v2286 = vmul.f32 %v2266, %v2275
      %v2287 = vmul.f32 %v2267, %v2275
      %v2288 = vmul.f32 %v2268, %v2275
      %v2289 = vmul.f32 %v2269, %v2275
      %v2290 = vmul.f32 %v2270, %v2275
      %v2291 = vmul.f32 %v2271, %v2275
      %v2292 = vadd.f32 %v2239, %v2276
      %v2293 = vadd.f32 %v2240, %v2277
      %v2294 = vadd.f32 %v2241, %v2278
      %v2295 = vadd.f32 %v2242, %v2279
      %v2296 = vadd.f32 %v2243, %v2280
      %v2297 = vadd.f32 %v2244, %v2281
      %v2298 = vadd.f32 %v2245, %v2282
      %v2299 = vadd.f32 %v2246, %v2283
      %v2300 = vadd.f32 %v2247, %v2284
      %v2301 = vadd.f32 %v2248, %v2285
      %v2302 = vadd.f32 %v2249, %v2286
      %v2303 = vadd.f32 %v2250, %v2287
      %v2304 = vadd.f32 %v2251, %v2288
      %v2305 = vadd.f32 %v2252, %v2289
      %v2306 = vadd.f32 %v2253, %v2290
      %v2307 = vadd.f32 %v2254, %v2291
      %v2308 = vld [vmem:[%s2255 + $0x1] sm:$0xff]
      %v2309 = vld [vmem:[%s2255 + $0x9] sm:$0xff]
      %v2310 = vld [vmem:[%s2255 + $0x19] sm:$0xff]
      %v2311 = vld [vmem:[%s2255 + $0x21] sm:$0xff]
      %v2312 = vld [vmem:[%s2255 + $0x31] sm:$0xff]
      %v2313 = vld [vmem:[%s2255 + $0x39] sm:$0xff]
      %v2314 = vld [vmem:[%s2255 + $0x49] sm:$0xff]
      %v2315 = vld [vmem:[%s2255 + $0x51] sm:$0xff]
      %v2316 = vld [vmem:[%s2255 + $0x61] sm:$0xff]
      %v2317 = vld [vmem:[%s2255 + $0x69] sm:$0xff]
      %v2318 = vld [vmem:[%s2255 + $0x79] sm:$0xff]
      %v2319 = vld [vmem:[%s2255 + $0x81] sm:$0xff]
      %v2320 = vld [vmem:[%s2255 + $0x91] sm:$0xff]
      %v2321 = vld [vmem:[%s2255 + $0x99] sm:$0xff]
      %v2322 = vld [vmem:[%s2255 + $0xa9] sm:$0xff]
      %v2323 = vld [vmem:[%s2255 + $0xb1] sm:$0xff]
      %v2324 = vlaneseq
      %v2325 = vshrl.u32 %v2324, 7
      %v2326 = vsub.s32 4, %v2325
      %v2327 = vrot.slane %v2113, %v2326
      %v2328 = vmul.f32 %v2308, %v2327
      %v2329 = vmul.f32 %v2309, %v2327
      %v2330 = vmul.f32 %v2310, %v2327
      %v2331 = vmul.f32 %v2311, %v2327
      %v2332 = vmul.f32 %v2312, %v2327
      %v2333 = vmul.f32 %v2313, %v2327
      %v2334 = vmul.f32 %v2314, %v2327
      %v2335 = vmul.f32 %v2315, %v2327
      %v2336 = vmul.f32 %v2316, %v2327
      %v2337 = vmul.f32 %v2317, %v2327
      %v2338 = vmul.f32 %v2318, %v2327
      %v2339 = vmul.f32 %v2319, %v2327
      %v2340 = vmul.f32 %v2320, %v2327
      %v2341 = vmul.f32 %v2321, %v2327
      %v2342 = vmul.f32 %v2322, %v2327
      %v2343 = vmul.f32 %v2323, %v2327
      %v2344 = vadd.f32 %v2292, %v2328
      %v2345 = vadd.f32 %v2293, %v2329
      %v2346 = vadd.f32 %v2294, %v2330
      %v2347 = vadd.f32 %v2295, %v2331
      %v2348 = vadd.f32 %v2296, %v2332
      %v2349 = vadd.f32 %v2297, %v2333
      %v2350 = vadd.f32 %v2298, %v2334
      %v2351 = vadd.f32 %v2299, %v2335
      %v2352 = vadd.f32 %v2300, %v2336
      %v2353 = vadd.f32 %v2301, %v2337
      %v2354 = vadd.f32 %v2302, %v2338
      %v2355 = vadd.f32 %v2303, %v2339
      %v2356 = vadd.f32 %v2304, %v2340
      %v2357 = vadd.f32 %v2305, %v2341
      %v2358 = vadd.f32 %v2306, %v2342
      %v2359 = vadd.f32 %v2307, %v2343
      %v2360 = vld [vmem:[%s2255 + $0x2] sm:$0xff]
      %v2361 = vld [vmem:[%s2255 + $0xa] sm:$0xff]
      %v2362 = vld [vmem:[%s2255 + $0x1a] sm:$0xff]
      %v2363 = vld [vmem:[%s2255 + $0x22] sm:$0xff]
      %v2364 = vld [vmem:[%s2255 + $0x32] sm:$0xff]
      %v2365 = vld [vmem:[%s2255 + $0x3a] sm:$0xff]
      %v2366 = vld [vmem:[%s2255 + $0x4a] sm:$0xff]
      %v2367 = vld [vmem:[%s2255 + $0x52] sm:$0xff]
      %v2368 = vld [vmem:[%s2255 + $0x62] sm:$0xff]
      %v2369 = vld [vmem:[%s2255 + $0x6a] sm:$0xff]
      %v2370 = vld [vmem:[%s2255 + $0x7a] sm:$0xff]
      %v2371 = vld [vmem:[%s2255 + $0x82] sm:$0xff]
      %v2372 = vld [vmem:[%s2255 + $0x92] sm:$0xff]
      %v2373 = vld [vmem:[%s2255 + $0x9a] sm:$0xff]
      %v2374 = vld [vmem:[%s2255 + $0xaa] sm:$0xff]
      %v2375 = vld [vmem:[%s2255 + $0xb2] sm:$0xff]
      %v2376 = vlaneseq
      %v2377 = vshrl.u32 %v2376, 7
      %v2378 = vsub.s32 5, %v2377
      %v2379 = vrot.slane %v2113, %v2378
      %v2380 = vmul.f32 %v2360, %v2379
      %v2381 = vmul.f32 %v2361, %v2379
      %v2382 = vmul.f32 %v2362, %v2379
      %v2383 = vmul.f32 %v2363, %v2379
      %v2384 = vmul.f32 %v2364, %v2379
      %v2385 = vmul.f32 %v2365, %v2379
      %v2386 = vmul.f32 %v2366, %v2379
      %v2387 = vmul.f32 %v2367, %v2379
      %v2388 = vmul.f32 %v2368, %v2379
      %v2389 = vmul.f32 %v2369, %v2379
      %v2390 = vmul.f32 %v2370, %v2379
      %v2391 = vmul.f32 %v2371, %v2379
      %v2392 = vmul.f32 %v2372, %v2379
      %v2393 = vmul.f32 %v2373, %v2379
      %v2394 = vmul.f32 %v2374, %v2379
      %v2395 = vmul.f32 %v2375, %v2379
      %v2396 = vadd.f32 %v2344, %v2380
      %v2397 = vadd.f32 %v2345, %v2381
      %v2398 = vadd.f32 %v2346, %v2382
      %v2399 = vadd.f32 %v2347, %v2383
      %v2400 = vadd.f32 %v2348, %v2384
      %v2401 = vadd.f32 %v2349, %v2385
      %v2402 = vadd.f32 %v2350, %v2386
      %v2403 = vadd.f32 %v2351, %v2387
      %v2404 = vadd.f32 %v2352, %v2388
      %v2405 = vadd.f32 %v2353, %v2389
      %v2406 = vadd.f32 %v2354, %v2390
      %v2407 = vadd.f32 %v2355, %v2391
      %v2408 = vadd.f32 %v2356, %v2392
      %v2409 = vadd.f32 %v2357, %v2393
      %v2410 = vadd.f32 %v2358, %v2394
      %v2411 = vadd.f32 %v2359, %v2395
      %s2412 = scalar_lea.vmem [#allocation3], 48
      %v2413 = vld [vmem:[%s2412] sm:$0xff]
      %v2414 = vld [vmem:[%s2412 + $0x8] sm:$0xff]
      %v2415 = vld [vmem:[%s2412 + $0x18] sm:$0xff]
      %v2416 = vld [vmem:[%s2412 + $0x20] sm:$0xff]
      %v2417 = vld [vmem:[%s2412 + $0x30] sm:$0xff]
      %v2418 = vld [vmem:[%s2412 + $0x38] sm:$0xff]
      %v2419 = vld [vmem:[%s2412 + $0x48] sm:$0xff]
      %v2420 = vld [vmem:[%s2412 + $0x50] sm:$0xff]
      %v2421 = vld [vmem:[%s2412 + $0x60] sm:$0xff]
      %v2422 = vld [vmem:[%s2412 + $0x68] sm:$0xff]
      %v2423 = vld [vmem:[%s2412 + $0x78] sm:$0xff]
      %v2424 = vld [vmem:[%s2412 + $0x80] sm:$0xff]
      %v2425 = vld [vmem:[%s2412 + $0x90] sm:$0xff]
      %v2426 = vld [vmem:[%s2412 + $0x98] sm:$0xff]
      %v2427 = vld [vmem:[%s2412 + $0xa8] sm:$0xff]
      %v2428 = vld [vmem:[%s2412 + $0xb0] sm:$0xff]
      %v2429 = vlaneseq
      %v2430 = vshrl.u32 %v2429, 7
      %v2431 = vsub.s32 6, %v2430
      %v2432 = vrot.slane %v2113, %v2431
      %v2433 = vmul.f32 %v2413, %v2432
      %v2434 = vmul.f32 %v2414, %v2432
      %v2435 = vmul.f32 %v2415, %v2432
      %v2436 = vmul.f32 %v2416, %v2432
      %v2437 = vmul.f32 %v2417, %v2432
      %v2438 = vmul.f32 %v2418, %v2432
      %v2439 = vmul.f32 %v2419, %v2432
      %v2440 = vmul.f32 %v2420, %v2432
      %v2441 = vmul.f32 %v2421, %v2432
      %v2442 = vmul.f32 %v2422, %v2432
      %v2443 = vmul.f32 %v2423, %v2432
      %v2444 = vmul.f32 %v2424, %v2432
      %v2445 = vmul.f32 %v2425, %v2432
      %v2446 = vmul.f32 %v2426, %v2432
      %v2447 = vmul.f32 %v2427, %v2432
      %v2448 = vmul.f32 %v2428, %v2432
      %v2449 = vadd.f32 %v2396, %v2433
      %v2450 = vadd.f32 %v2397, %v2434
      %v2451 = vadd.f32 %v2398, %v2435
      %v2452 = vadd.f32 %v2399, %v2436
      %v2453 = vadd.f32 %v2400, %v2437
      %v2454 = vadd.f32 %v2401, %v2438
      %v2455 = vadd.f32 %v2402, %v2439
      %v2456 = vadd.f32 %v2403, %v2440
      %v2457 = vadd.f32 %v2404, %v2441
      %v2458 = vadd.f32 %v2405, %v2442
      %v2459 = vadd.f32 %v2406, %v2443
      %v2460 = vadd.f32 %v2407, %v2444
      %v2461 = vadd.f32 %v2408, %v2445
      %v2462 = vadd.f32 %v2409, %v2446
      %v2463 = vadd.f32 %v2410, %v2447
      %v2464 = vadd.f32 %v2411, %v2448
      %v2465 = vld [vmem:[%s2412 + $0x1] sm:$0xff]
      %v2466 = vld [vmem:[%s2412 + $0x9] sm:$0xff]
      %v2467 = vld [vmem:[%s2412 + $0x19] sm:$0xff]
      %v2468 = vld [vmem:[%s2412 + $0x21] sm:$0xff]
      %v2469 = vld [vmem:[%s2412 + $0x31] sm:$0xff]
      %v2470 = vld [vmem:[%s2412 + $0x39] sm:$0xff]
      %v2471 = vld [vmem:[%s2412 + $0x49] sm:$0xff]
      %v2472 = vld [vmem:[%s2412 + $0x51] sm:$0xff]
      %v2473 = vld [vmem:[%s2412 + $0x61] sm:$0xff]
      %v2474 = vld [vmem:[%s2412 + $0x69] sm:$0xff]
      %v2475 = vld [vmem:[%s2412 + $0x79] sm:$0xff]
      %v2476 = vld [vmem:[%s2412 + $0x81] sm:$0xff]
      %v2477 = vld [vmem:[%s2412 + $0x91] sm:$0xff]
      %v2478 = vld [vmem:[%s2412 + $0x99] sm:$0xff]
      %v2479 = vld [vmem:[%s2412 + $0xa9] sm:$0xff]
      %v2480 = vld [vmem:[%s2412 + $0xb1] sm:$0xff]
      %v2481 = vlaneseq
      %v2482 = vshrl.u32 %v2481, 7
      %v2483 = vsub.s32 7, %v2482
      %v2484 = vrot.slane %v2113, %v2483
      %v2485 = vmul.f32 %v2465, %v2484
      %v2486 = vmul.f32 %v2466, %v2484
      %v2487 = vmul.f32 %v2467, %v2484
      %v2488 = vmul.f32 %v2468, %v2484
      %v2489 = vmul.f32 %v2469, %v2484
      %v2490 = vmul.f32 %v2470, %v2484
      %v2491 = vmul.f32 %v2471, %v2484
      %v2492 = vmul.f32 %v2472, %v2484
      %v2493 = vmul.f32 %v2473, %v2484
      %v2494 = vmul.f32 %v2474, %v2484
      %v2495 = vmul.f32 %v2475, %v2484
      %v2496 = vmul.f32 %v2476, %v2484
      %v2497 = vmul.f32 %v2477, %v2484
      %v2498 = vmul.f32 %v2478, %v2484
      %v2499 = vmul.f32 %v2479, %v2484
      %v2500 = vmul.f32 %v2480, %v2484
      %v2501 = vadd.f32 %v2449, %v2485
      %v2502 = vadd.f32 %v2450, %v2486
      %v2503 = vadd.f32 %v2451, %v2487
      %v2504 = vadd.f32 %v2452, %v2488
      %v2505 = vadd.f32 %v2453, %v2489
      %v2506 = vadd.f32 %v2454, %v2490
      %v2507 = vadd.f32 %v2455, %v2491
      %v2508 = vadd.f32 %v2456, %v2492
      %v2509 = vadd.f32 %v2457, %v2493
      %v2510 = vadd.f32 %v2458, %v2494
      %v2511 = vadd.f32 %v2459, %v2495
      %v2512 = vadd.f32 %v2460, %v2496
      %v2513 = vadd.f32 %v2461, %v2497
      %v2514 = vadd.f32 %v2462, %v2498
      %v2515 = vadd.f32 %v2463, %v2499
      %v2516 = vadd.f32 %v2464, %v2500
      %v2517 = vld [vmem:[%s2412 + $0x2] sm:$0xff]
      %v2518 = vld [vmem:[%s2412 + $0xa] sm:$0xff]
      %v2519 = vld [vmem:[%s2412 + $0x1a] sm:$0xff]
      %v2520 = vld [vmem:[%s2412 + $0x22] sm:$0xff]
      %v2521 = vld [vmem:[%s2412 + $0x32] sm:$0xff]
      %v2522 = vld [vmem:[%s2412 + $0x3a] sm:$0xff]
      %v2523 = vld [vmem:[%s2412 + $0x4a] sm:$0xff]
      %v2524 = vld [vmem:[%s2412 + $0x52] sm:$0xff]
      %v2525 = vld [vmem:[%s2412 + $0x62] sm:$0xff]
      %v2526 = vld [vmem:[%s2412 + $0x6a] sm:$0xff]
      %v2527 = vld [vmem:[%s2412 + $0x7a] sm:$0xff]
      %v2528 = vld [vmem:[%s2412 + $0x82] sm:$0xff]
      %v2529 = vld [vmem:[%s2412 + $0x92] sm:$0xff]
      %v2530 = vld [vmem:[%s2412 + $0x9a] sm:$0xff]
      %v2531 = vld [vmem:[%s2412 + $0xaa] sm:$0xff]
      %v2532 = vld [vmem:[%s2412 + $0xb2] sm:$0xff]
      %v2533 = vlaneseq
      %v2534 = vshrl.u32 %v2533, 7
      %v2535 = vsub.s32 0, %v2534
      %v2536 = vrot.slane %v2114, %v2535
      %v2537 = vmul.f32 %v2517, %v2536
      %v2538 = vmul.f32 %v2518, %v2536
      %v2539 = vmul.f32 %v2519, %v2536
      %v2540 = vmul.f32 %v2520, %v2536
      %v2541 = vmul.f32 %v2521, %v2536
      %v2542 = vmul.f32 %v2522, %v2536
      %v2543 = vmul.f32 %v2523, %v2536
      %v2544 = vmul.f32 %v2524, %v2536
      %v2545 = vmul.f32 %v2525, %v2536
      %v2546 = vmul.f32 %v2526, %v2536
      %v2547 = vmul.f32 %v2527, %v2536
      %v2548 = vmul.f32 %v2528, %v2536
      %v2549 = vmul.f32 %v2529, %v2536
      %v2550 = vmul.f32 %v2530, %v2536
      %v2551 = vmul.f32 %v2531, %v2536
      %v2552 = vmul.f32 %v2532, %v2536
      %v2553 = vadd.f32 %v2501, %v2537
      %v2554 = vadd.f32 %v2502, %v2538
      %v2555 = vadd.f32 %v2503, %v2539
      %v2556 = vadd.f32 %v2504, %v2540
      %v2557 = vadd.f32 %v2505, %v2541
      %v2558 = vadd.f32 %v2506, %v2542
      %v2559 = vadd.f32 %v2507, %v2543
      %v2560 = vadd.f32 %v2508, %v2544
      %v2561 = vadd.f32 %v2509, %v2545
      %v2562 = vadd.f32 %v2510, %v2546
      %v2563 = vadd.f32 %v2511, %v2547
      %v2564 = vadd.f32 %v2512, %v2548
      %v2565 = vadd.f32 %v2513, %v2549
      %v2566 = vadd.f32 %v2514, %v2550
      %v2567 = vadd.f32 %v2515, %v2551
      %v2568 = vadd.f32 %v2516, %v2552
      %v2569 = vld [vmem:[%s11] sm:$0x1]
      %v2571 = vlaneseq
      %v2572 = vshrl.u32 %v2571, 7
      %v2573 = vsub.s32 0, %v2572
      %v2574 = vrot.slane %v2569, %v2573
      %v2576 = vmul.f32 %v2553, %v2574
      %v2577 = vmul.f32 %v2554, %v2574
      %v2578 = vmul.f32 %v2555, %v2574
      %v2579 = vmul.f32 %v2556, %v2574
      %v2580 = vmul.f32 %v2557, %v2574
      %v2581 = vmul.f32 %v2558, %v2574
      %v2582 = vmul.f32 %v2559, %v2574
      %v2583 = vmul.f32 %v2560, %v2574
      %v2584 = vmul.f32 %v2561, %v2574
      %v2585 = vmul.f32 %v2562, %v2574
      %v2586 = vmul.f32 %v2563, %v2574
      %v2587 = vmul.f32 %v2564, %v2574
      %v2588 = vmul.f32 %v2565, %v2574
      %v2589 = vmul.f32 %v2566, %v2574
      %v2590 = vmul.f32 %v2567, %v2574
      %v2591 = vmul.f32 %v2568, %v2574
      %v2592 = vld [vmem:[%s12] sm:$0x1]
      %v2594 = vlaneseq
      %v2595 = vshrl.u32 %v2594, 7
      %v2596 = vsub.s32 0, %v2595
      %v2597 = vrot.slane %v2592, %v2596
      %v2599 = vadd.f32 %v2576, %v2597
      %v2600 = vadd.f32 %v2577, %v2597
      %v2601 = vadd.f32 %v2578, %v2597
      %v2602 = vadd.f32 %v2579, %v2597
      %v2603 = vadd.f32 %v2580, %v2597
      %v2604 = vadd.f32 %v2581, %v2597
      %v2605 = vadd.f32 %v2582, %v2597
      %v2606 = vadd.f32 %v2583, %v2597
      %v2607 = vadd.f32 %v2584, %v2597
      %v2608 = vadd.f32 %v2585, %v2597
      %v2609 = vadd.f32 %v2586, %v2597
      %v2610 = vadd.f32 %v2587, %v2597
      %v2611 = vadd.f32 %v2588, %v2597
      %v2612 = vadd.f32 %v2589, %v2597
      %v2613 = vadd.f32 %v2590, %v2597
      %v2614 = vadd.f32 %v2591, %v2597
      %v2615 = vadd.f32 %v2038, %v484
      %v2616 = vadd.f32 %v2039, %v485
      %v2617 = vadd.f32 %v2040, %v486
      %v2618 = vadd.f32 %v2041, %v487
      %v2619 = vadd.f32 %v2042, %v488
      %v2620 = vadd.f32 %v2043, %v489
      %v2621 = vadd.f32 %v2044, %v490
      %v2622 = vadd.f32 %v2045, %v491
      %v2623 = vadd.f32 %v2046, %v492
      %v2624 = vadd.f32 %v2047, %v493
      %v2625 = vadd.f32 %v2048, %v494
      %v2626 = vadd.f32 %v2049, %v495
      %v2627 = vadd.f32 %v2050, %v496
      %v2628 = vadd.f32 %v2051, %v497
      %v2629 = vadd.f32 %v2052, %v498
      %v2630 = vadd.f32 %v2053, %v499
      %2631 = vst.msk [vmem:[%s478] sm:$0xff] %vm2077, %v2615
      %2632 = vst.msk [vmem:[%s478 + $0x8] sm:$0xff] %vm2077, %v2616
      %2633 = vst.msk [vmem:[%s478 + $0x10] sm:$0xff] %vm2077, %v2617
      %2634 = vst.msk [vmem:[%s478 + $0x18] sm:$0xff] %vm2077, %v2618
      %2635 = vst.msk [vmem:[%s478 + $0x20] sm:$0xff] %vm2077, %v2619
      %2636 = vst.msk [vmem:[%s478 + $0x28] sm:$0xff] %vm2077, %v2620
      %2637 = vst.msk [vmem:[%s478 + $0x30] sm:$0xff] %vm2077, %v2621
      %2638 = vst.msk [vmem:[%s478 + $0x38] sm:$0xff] %vm2077, %v2622
      %2639 = vst.msk [vmem:[%s478 + $0x40] sm:$0xff] %vm2077, %v2623
      %2640 = vst.msk [vmem:[%s478 + $0x48] sm:$0xff] %vm2077, %v2624
      %2641 = vst.msk [vmem:[%s478 + $0x50] sm:$0xff] %vm2077, %v2625
      %2642 = vst.msk [vmem:[%s478 + $0x58] sm:$0xff] %vm2077, %v2626
      %2643 = vst.msk [vmem:[%s478 + $0x60] sm:$0xff] %vm2077, %v2627
      %2644 = vst.msk [vmem:[%s478 + $0x68] sm:$0xff] %vm2077, %v2628
      %2645 = vst.msk [vmem:[%s478 + $0x70] sm:$0xff] %vm2077, %v2629
      %2646 = vst.msk [vmem:[%s478 + $0x78] sm:$0xff] %vm2077, %v2630
      %2647 = vrot.lane.b32.xlu0 %v484, 124
      %v2648 = vpop.permute.xlu0 %2647
      %2649 = vrot.lane.b32.xlu0 %v485, 124
      %v2650 = vpop.permute.xlu0 %2649
      %2651 = vrot.lane.b32.xlu0 %v486, 124
      %v2652 = vpop.permute.xlu0 %2651
      %2653 = vrot.lane.b32.xlu0 %v487, 124
      %v2654 = vpop.permute.xlu0 %2653
      %2655 = vrot.lane.b32.xlu0 %v488, 124
      %v2656 = vpop.permute.xlu0 %2655
      %2657 = vrot.lane.b32.xlu0 %v489, 124
      %v2658 = vpop.permute.xlu0 %2657
      %2659 = vrot.lane.b32.xlu0 %v490, 124
      %v2660 = vpop.permute.xlu0 %2659
      %2661 = vrot.lane.b32.xlu0 %v491, 124
      %v2662 = vpop.permute.xlu0 %2661
      %2663 = vrot.lane.b32.xlu0 %v492, 124
      %v2664 = vpop.permute.xlu0 %2663
      %2665 = vrot.lane.b32.xlu0 %v493, 124
      %v2666 = vpop.permute.xlu0 %2665
      %2667 = vrot.lane.b32.xlu0 %v494, 124
      %v2668 = vpop.permute.xlu0 %2667
      %2669 = vrot.lane.b32.xlu0 %v495, 124
      %v2670 = vpop.permute.xlu0 %2669
      %2671 = vrot.lane.b32.xlu0 %v496, 124
      %v2672 = vpop.permute.xlu0 %2671
      %2673 = vrot.lane.b32.xlu0 %v497, 124
      %v2674 = vpop.permute.xlu0 %2673
      %2675 = vrot.lane.b32.xlu0 %v498, 124
      %v2676 = vpop.permute.xlu0 %2675
      %2677 = vrot.lane.b32.xlu0 %v499, 124
      %v2678 = vpop.permute.xlu0 %2677
      %v2695 = vadd.f32 %v2599, %v2648
      %v2696 = vadd.f32 %v2600, %v2650
      %v2697 = vadd.f32 %v2601, %v2652
      %v2698 = vadd.f32 %v2602, %v2654
      %v2699 = vadd.f32 %v2603, %v2656
      %v2700 = vadd.f32 %v2604, %v2658
      %v2701 = vadd.f32 %v2605, %v2660
      %v2702 = vadd.f32 %v2606, %v2662
      %v2703 = vadd.f32 %v2607, %v2664
      %v2704 = vadd.f32 %v2608, %v2666
      %v2705 = vadd.f32 %v2609, %v2668
      %v2706 = vadd.f32 %v2610, %v2670
      %v2707 = vadd.f32 %v2611, %v2672
      %v2708 = vadd.f32 %v2612, %v2674
      %v2709 = vadd.f32 %v2613, %v2676
      %v2710 = vadd.f32 %v2614, %v2678
      %2727 = vrot.lane.b32.xlu0 %v2695, 4
      %v2728 = vpop.permute.xlu0 %2727
      %2729 = vrot.lane.b32.xlu0 %v2696, 4
      %v2730 = vpop.permute.xlu0 %2729
      %2731 = vrot.lane.b32.xlu0 %v2697, 4
      %v2732 = vpop.permute.xlu0 %2731
      %2733 = vrot.lane.b32.xlu0 %v2698, 4
      %v2734 = vpop.permute.xlu0 %2733
      %2735 = vrot.lane.b32.xlu0 %v2699, 4
      %v2736 = vpop.permute.xlu0 %2735
      %2737 = vrot.lane.b32.xlu0 %v2700, 4
      %v2738 = vpop.permute.xlu0 %2737
      %2739 = vrot.lane.b32.xlu0 %v2701, 4
      %v2740 = vpop.permute.xlu0 %2739
      %2741 = vrot.lane.b32.xlu0 %v2702, 4
      %v2742 = vpop.permute.xlu0 %2741
      %2743 = vrot.lane.b32.xlu0 %v2703, 4
      %v2744 = vpop.permute.xlu0 %2743
      %2745 = vrot.lane.b32.xlu0 %v2704, 4
      %v2746 = vpop.permute.xlu0 %2745
      %2747 = vrot.lane.b32.xlu0 %v2705, 4
      %v2748 = vpop.permute.xlu0 %2747
      %2749 = vrot.lane.b32.xlu0 %v2706, 4
      %v2750 = vpop.permute.xlu0 %2749
      %2751 = vrot.lane.b32.xlu0 %v2707, 4
      %v2752 = vpop.permute.xlu0 %2751
      %2753 = vrot.lane.b32.xlu0 %v2708, 4
      %v2754 = vpop.permute.xlu0 %2753
      %2755 = vrot.lane.b32.xlu0 %v2709, 4
      %v2756 = vpop.permute.xlu0 %2755
      %2757 = vrot.lane.b32.xlu0 %v2710, 4
      %v2758 = vpop.permute.xlu0 %2757
      %vm2775 = vcmask 64544
      %2776 = vst.msk [vmem:[%s478] sm:$0xff] %vm2775, %v2728
      %2777 = vst.msk [vmem:[%s478 + $0x8] sm:$0xff] %vm2775, %v2730
      %2778 = vst.msk [vmem:[%s478 + $0x10] sm:$0xff] %vm2775, %v2732
      %2779 = vst.msk [vmem:[%s478 + $0x18] sm:$0xff] %vm2775, %v2734
      %2780 = vst.msk [vmem:[%s478 + $0x20] sm:$0xff] %vm2775, %v2736
      %2781 = vst.msk [vmem:[%s478 + $0x28] sm:$0xff] %vm2775, %v2738
      %2782 = vst.msk [vmem:[%s478 + $0x30] sm:$0xff] %vm2775, %v2740
      %2783 = vst.msk [vmem:[%s478 + $0x38] sm:$0xff] %vm2775, %v2742
      %2784 = vst.msk [vmem:[%s478 + $0x40] sm:$0xff] %vm2775, %v2744
      %2785 = vst.msk [vmem:[%s478 + $0x48] sm:$0xff] %vm2775, %v2746
      %2786 = vst.msk [vmem:[%s478 + $0x50] sm:$0xff] %vm2775, %v2748
      %2787 = vst.msk [vmem:[%s478 + $0x58] sm:$0xff] %vm2775, %v2750
      %2788 = vst.msk [vmem:[%s478 + $0x60] sm:$0xff] %vm2775, %v2752
      %2789 = vst.msk [vmem:[%s478 + $0x68] sm:$0xff] %vm2775, %v2754
      %2790 = vst.msk [vmem:[%s478 + $0x70] sm:$0xff] %vm2775, %v2756
      %2791 = vst.msk [vmem:[%s478 + $0x78] sm:$0xff] %vm2775, %v2758
      %s2792 = smul.u32 8, %s29
      %p2793 = scmp.lt.s32.totalorder %s28, 1
      %s2794 = scalar_select %p2793, %s28, 1
      %p2795 = scmp.lt.s32.totalorder %s2792, 15
      %s2796 = scalar_select %p2795, %s2792, 15
      %s2797 = smul.addr %s2796, 2
      %s2798 = smul.addr %s2794, 32
      %s2799 = sadd.s32 %s2797, %s2798
      %s2800 = smul.addr %s2799, 8
      %s2801 = scalar_lea.vmem %s13, %s2800
      // Predicated region
      $region89: #{ghost_bottleneck.1} parent=71 // pred_check
        %p2802 = pneg %p336
      $region90: #{ghost_bottleneck.1} parent=71 // pred_check_branch
        %2804 = sbr.rel (%p2802) target = $region92
      $region91: #{ghost_bottleneck.1} parent=71 // pred_region
        %s2805 = smul.u32 8, %s29
      $region92: #{ghost_bottleneck.1} parent=71 // pred_fallthru
        _
    $region72: #{ghost_bottleneck.1} parent=5 // pred_fallthru
      _
    %p2806 = scmp.le.s32.totalorder 2, %s19
    // Predicated region
    $region93: #{ghost_bottleneck.1} parent=5 // pred_check
      %p2807 = pneg %p2806
    $region94: #{ghost_bottleneck.1} parent=5 // pred_check_branch
      %2809 = sbr.rel (%p2807) target = $region96
    $region95: #{ghost_bottleneck.1} parent=5 // pred_region
      %s2810 = ssub.s32 %s19, 2
      // Predicated region
      $region97: #{ghost_bottleneck.1} parent=95 // pred_check
        %p2811 = pneg %p342
      $region98: #{ghost_bottleneck.1} parent=95 // pred_check_branch
        %2813 = sbr.rel (%p2811) target = $region100
      $region99: #{ghost_bottleneck.1} parent=95 // pred_region
        %s2814 = smul.u32 8, %s31
        %p2815 = scmp.lt.s32.totalorder %s30, 1
        %s2816 = scalar_select %p2815, %s30, 1
        %p2817 = scmp.lt.s32.totalorder %s2814, 15
        %s2818 = scalar_select %p2817, %s2814, 15
        %s2819 = smul.addr %s2818, 2
        %s2820 = smul.addr %s2816, 32
        %s2821 = sadd.s32 %s2819, %s2820
        %s2822 = smul.addr %s2821, 8
        %s2823 = scalar_lea.vmem %s13, %s2822
      $region100: #{ghost_bottleneck.1} parent=95 // pred_fallthru
        _
    $region96: #{ghost_bottleneck.1} parent=5 // pred_fallthru
      _
  $region6: #{ghost_bottleneck.1} parent=0 // loop_footer
    %s23 = sadd.s32 1, %s19
  $region7: #{ghost_bottleneck.1} parent=0 // loop_footer_branch
    %18 = sbr.rel target = $region3
  $region8: #{ghost_bottleneck.1} parent=0 // loop_exit
    _

</llo_original>
